<compile_context>
chip_gen: v5e
topology: v5e:2x2
jax: 0.10.0
libtpu: 0.0.40
codegen_flags: <defaults>
</compile_context>

<pallas_src>
import numpy as np
import jax
import jax.numpy as jnp
from jax import lax
from jax.experimental import pallas as pl
from jax.experimental.pallas import tpu as pltpu

EPS = 1e-5


# ----------------------------------------------------------------------------
# Fused kernel: one grid step == full forward for one batch element.
# Layout: width on sublanes, channels on lanes throughout the conv chain.
# ----------------------------------------------------------------------------
def _ripnet_kernel(p1_ref, a1t_ref, w2t_ref, s3sel_ref, w3t_ref, s4sel_ref,
                   w4t_ref, cshift_ref, wfc1_ref, fcv_ref, wfc2_ref, o_ref):
    bf16 = jnp.bfloat16

    def mm(a, b):
        return jnp.dot(a, b, preferred_element_type=jnp.float32)

    def relu_bf16(v):
        return jnp.maximum(v, 0.0).astype(bf16)

    # conv1 (1x3, stride (1,2), pad (0,1)) + BN + ReLU.  Only the even output
    # columns (the ones conv2 reads) are computed; conv2's stride-2 width
    # subsample is pre-folded into the p1 patches.
    y1 = relu_bf16(mm(p1_ref[0], a1t_ref[...]) + cshift_ref[0, :])        # (104, 128)

    # conv2 (8x1, stride 2, pad 0) + BN + ReLU: contraction over (ci, h).
    y2 = relu_bf16(mm(y1, w2t_ref[...]) + cshift_ref[1, :32])             # (104, 32)

    # conv3 (3x3, stride 2, pad 1) on an H==1 input: only the middle kernel
    # row contributes; per tap: width select (0/1 matmul, exact) then channel mix.
    t3 = mm(mm(s3sel_ref[0], y2).astype(bf16), w3t_ref[0])
    t3 = t3 + mm(mm(s3sel_ref[1], y2).astype(bf16), w3t_ref[1])
    t3 = t3 + mm(mm(s3sel_ref[2], y2).astype(bf16), w3t_ref[2])
    y3 = relu_bf16(t3 + cshift_ref[2, :64])                               # (52, 64)

    # conv4 (3x3, stride 2, pad 1), same structure.
    t4 = mm(mm(s4sel_ref[0], y3).astype(bf16), w4t_ref[0])
    t4 = t4 + mm(mm(s4sel_ref[1], y3).astype(bf16), w4t_ref[1])
    t4 = t4 + mm(mm(s4sel_ref[2], y3).astype(bf16), w4t_ref[2])
    y4 = relu_bf16(t4 + cshift_ref[3, :])                                 # (26, 128)

    # Dropout(0.4): identity in eval mode.
    # Flatten (26,128) -> (1,3328) via 128-aligned lane concat of the 26 width
    # rows; wfc1's rows were permuted at prepare time to this (w, c) order.
    feat = jnp.concatenate([y4[w:w + 1, :] for w in range(26)], axis=1)   # (1, 3328)

    # fc1 + BatchNorm1d (eval; fc1 bias folded into the shift) + fc2.
    h = mm(feat, wfc1_ref[...])                                           # (1, 256)
    h = h * fcv_ref[0:1, :256] + fcv_ref[1:2, :256]
    out = mm(h.astype(bf16), wfc2_ref[...]) + fcv_ref[2:3, :]             # (1, 416)
    o_ref[0] = out


# ----------------------------------------------------------------------------
# Forward pass: vectorized patch extraction + one pallas_call over batch.
# ----------------------------------------------------------------------------
def ripnet_forward(x, kp):
    batch = x.shape[0]

    # conv1 patches with conv2's stride-2 width subsample folded in:
    # p1[b, wo2, tap*8 + h] = xpad[b, h, 4*wo2 + tap]   (xpad = width-pad by 1)
    xpad = jnp.pad(x[:, 0], ((0, 0), (0, 0), (1, 1)))                     # (B, 8, 418)
    taps = jnp.stack([xpad[:, :, j:j + 413:4] for j in range(3)], axis=3)  # (B, 8, 104, 3)
    p1 = taps.transpose(0, 2, 3, 1).reshape(batch, 104, 24).astype(jnp.bfloat16)

    args = (p1, kp["a1t"], kp["w2t"], kp["s3sel"], kp["w3t"], kp["s4sel"],
            kp["w4t"], kp["cshift"], kp["wfc1"], kp["fc_vecs"], kp["wfc2"])

    def const_spec(a):
        nd = a.ndim
        return pl.BlockSpec(a.shape, lambda b, nd=nd: (0,) * nd)

    in_specs = [pl.BlockSpec((1, 104, 24), lambda b: (b, 0, 0))]
    in_specs += [const_spec(a) for a in args[1:]]

    out = pl.pallas_call(
        _ripnet_kernel,
        out_shape=jax.ShapeDtypeStruct((batch, 1, 416), jnp.float32),
        grid_spec=pltpu.PrefetchScalarGridSpec(
            num_scalar_prefetch=0,
            grid=(batch,),
            in_specs=in_specs,
            out_specs=pl.BlockSpec((1, 1, 416), lambda b: (b, 0, 0)),
        ),
        compiler_params=pltpu.CompilerParams(
            dimension_semantics=("parallel",)),
    )(*args)
    return out[:, 0, :]


# ----------------------------------------------------------------------------
# Parameters: PyTorch-layout raw params + one-time kernel layout preparation.
# ----------------------------------------------------------------------------
def init_params(key):
    ks = list(jax.random.split(key, 40))

    def nrm(shape, s=0.05):
        return s * jax.random.normal(ks.pop(), shape, dtype=jnp.float32)

    def bf16_vals(a):   # keep values exactly representable in bf16
        return a.astype(jnp.bfloat16).astype(jnp.float32)

    def bn(c):
        return dict(
            gamma=1.0 + 0.1 * jax.random.normal(ks.pop(), (c,), jnp.float32),
            beta=0.1 * jax.random.normal(ks.pop(), (c,), jnp.float32),
            mean=0.1 * jax.random.normal(ks.pop(), (c,), jnp.float32),
            var=jax.random.uniform(ks.pop(), (c,), jnp.float32, 0.5, 1.5),
        )

    p = {}
    p["conv1"] = dict(w=nrm((16, 1, 1, 3)), b=nrm((16,)), **bn(16))
    p["conv2"] = dict(w=nrm((32, 16, 8, 1)), b=nrm((32,)), **bn(32))
    p["conv3"] = dict(w=nrm((64, 32, 3, 3)), b=nrm((64,)), **bn(64))
    p["conv4"] = dict(w=nrm((128, 64, 3, 3)), b=nrm((128,)), **bn(128))
    p["fc1"] = dict(w=bf16_vals(nrm((256, 3328))), b=nrm((256,)), **bn(256))
    p["fc2"] = dict(w=bf16_vals(nrm((416, 256))), b=nrm((416,)))
    return p


def _stride2_select_t(w_in, w_out, offset):
    """Transposed 0/1 select: S[wo, wi] = 1 iff wi == 2*wo + offset (valid)."""
    s = np.zeros((w_out, w_in), np.float32)
    wo = np.arange(w_out)
    wi = 2 * wo + offset
    valid = (wi >= 0) & (wi < w_in)
    s[wo[valid], wi[valid]] = 1.0
    return jnp.asarray(s)


def prepare_params(p):
    """Fold eval-mode BN into the conv/fc weights and pre-lay-out everything
    the fused kernel needs.  Runs ONCE, outside the jitted forward; does NOT
    depend on the batch size."""
    def fold(layer):
        scale = layer["gamma"] / jnp.sqrt(layer["var"] + EPS)
        shift = (layer["b"] - layer["mean"]) * scale + layer["beta"]
        return scale, shift

    bf16 = jnp.bfloat16
    kp = {}

    # conv1: (16,1,1,3) -> BN-folded (24,128): rows = tap*8+h', cols = co*8+h.
    sc, sh = fold(p["conv1"])
    w1 = p["conv1"]["w"].reshape(16, 3) * sc[:, None]
    eye8 = jnp.eye(8, dtype=jnp.float32)
    a1 = jnp.concatenate([jnp.kron(w1[:, j:j + 1], eye8) for j in range(3)],
                         axis=1)                                          # (128, 24)
    kp["a1t"] = a1.T.astype(bf16)                                         # (24, 128)
    s1 = jnp.repeat(sh, 8)                                                # (128,)

    # conv2: (32,16,8,1) -> (128, 32) over rows (ci*8 + h).
    sc, sh = fold(p["conv2"])
    w2 = p["conv2"]["w"][:, :, :, 0].reshape(32, 128) * sc[:, None]
    kp["w2t"] = w2.T.astype(bf16)                                         # (128, 32)
    s2 = sh                                                               # (32,)

    # conv3 / conv4: input H == 1 -> only the middle kernel row contributes.
    sc, sh = fold(p["conv3"])
    w3 = p["conv3"]["w"][:, :, 1, :] * sc[:, None, None]                  # (64, 32, 3)
    kp["w3t"] = jnp.stack([w3[:, :, j].T for j in range(3)]).astype(bf16)  # (3, 32, 64)
    kp["s3sel"] = jnp.stack(
        [_stride2_select_t(104, 52, j - 1) for j in range(3)]).astype(bf16)  # (3, 52, 104)
    s3 = sh                                                               # (64,)

    sc, sh = fold(p["conv4"])
    w4 = p["conv4"]["w"][:, :, 1, :] * sc[:, None, None]                  # (128, 64, 3)
    kp["w4t"] = jnp.stack([w4[:, :, j].T for j in range(3)]).astype(bf16)  # (3, 64, 128)
    kp["s4sel"] = jnp.stack(
        [_stride2_select_t(52, 26, j - 1) for j in range(3)]).astype(bf16)   # (3, 26, 52)
    s4 = sh                                                               # (128,)

    def pad128(v):
        return jnp.pad(v, (0, 128 - v.shape[0]))
    kp["cshift"] = jnp.stack([s1, pad128(s2), pad128(s3), s4]).astype(jnp.float32)  # (4,128)

    # fc1: rows permuted from PyTorch (c*26 + w) order to the kernel's
    # flatten order (w*128 + c); BN1d folded into a per-output scale/shift.
    fc1 = p["fc1"]
    sc1 = fc1["gamma"] / jnp.sqrt(fc1["var"] + EPS)
    sh1 = (fc1["b"] - fc1["mean"]) * sc1 + fc1["beta"]
    w1k = fc1["w"].reshape(256, 128, 26).transpose(2, 1, 0).reshape(3328, 256)
    kp["wfc1"] = w1k.astype(bf16)                                         # (3328, 256)
    kp["wfc2"] = p["fc2"]["w"].T.astype(bf16)                             # (256, 416)
    fcv = jnp.zeros((3, 416), jnp.float32)
    fcv = fcv.at[0, :256].set(sc1).at[1, :256].set(sh1).at[2, :].set(p["fc2"]["b"])
    kp["fc_vecs"] = fcv
    return kp


# ----------------------------------------------------------------------------
# Pure-JAX reference (eval semantics, PyTorch layouts) for correctness check.
# ----------------------------------------------------------------------------
def ref_forward(x, p):
    def bn2d(y, l):
        g, b, m, v = l["gamma"], l["beta"], l["mean"], l["var"]
        return (y - m[None, :, None, None]) / jnp.sqrt(v[None, :, None, None] + EPS) \
            * g[None, :, None, None] + b[None, :, None, None]

    def conv(y, l, stride, pad):
        out = lax.conv_general_dilated(
            y, l["w"], window_strides=stride,
            padding=[(pad[0], pad[0]), (pad[1], pad[1])],
            dimension_numbers=("NCHW", "OIHW", "NCHW"))
        return out + l["b"][None, :, None, None]

    y = jax.nn.relu(bn2d(conv(x, p["conv1"], (1, 2), (0, 1)), p["conv1"]))
    y = jax.nn.relu(bn2d(conv(y, p["conv2"], (2, 2), (0, 0)), p["conv2"]))
    y = jax.nn.relu(bn2d(conv(y, p["conv3"], (2, 2), (1, 1)), p["conv3"]))
    y = jax.nn.relu(bn2d(conv(y, p["conv4"], (2, 2), (1, 1)), p["conv4"]))
    yf = y.reshape(y.shape[0], -1)

    fc1 = p["fc1"]
    z = yf @ fc1["w"].T + fc1["b"]
    z = (z - fc1["mean"]) / jnp.sqrt(fc1["var"] + EPS) * fc1["gamma"] + fc1["beta"]
    fc2 = p["fc2"]
    z = z @ fc2["w"].T + fc2["b"]
    return z


# ----------------------------------------------------------------------------
if __name__ == "__main__":
    key = jax.random.PRNGKey(0)
    kx, kparam = jax.random.split(key)

    B = 2
    x = jax.random.normal(kx, (B, 1, 8, 416), dtype=jnp.float32)  # (batch, 1, 8, 416)
    params = init_params(kparam)
    kparams = prepare_params(params)          # one-time, batch-independent

    fwd = jax.jit(ripnet_forward)
    out = jax.block_until_ready(fwd(x, kparams))

    assert out.shape == (B, 416), out.shape

    ref = ref_forward(x, params)
    err = float(jnp.max(jnp.abs(out - ref)))
    assert jnp.allclose(out, ref, atol=5e-2, rtol=5e-2), err

    print("KERNEL_OK")
</pallas_src>

<mosaic_0001>
module attributes {stable_mosaic.version = 11 : i64} {
  func.func @_ripnet_kernel(%arg0: i32, %arg1: memref<1x104x24xbf16, #tpu.memory_space<vmem>>, %arg2: memref<24x128xbf16, #tpu.memory_space<vmem>>, %arg3: memref<128x32xbf16, #tpu.memory_space<vmem>>, %arg4: memref<3x52x104xbf16, #tpu.memory_space<vmem>>, %arg5: memref<3x32x64xbf16, #tpu.memory_space<vmem>>, %arg6: memref<3x26x52xbf16, #tpu.memory_space<vmem>>, %arg7: memref<3x64x128xbf16, #tpu.memory_space<vmem>>, %arg8: memref<4x128xf32, #tpu.memory_space<vmem>>, %arg9: memref<3328x256xbf16, #tpu.memory_space<vmem>>, %arg10: memref<3x416xf32, #tpu.memory_space<vmem>>, %arg11: memref<256x416xbf16, #tpu.memory_space<vmem>>, %arg12: memref<1x1x416xf32, #tpu.memory_space<vmem>>) attributes {dimension_semantics = [#tpu.dimension_semantics<parallel>], iteration_bounds = array<i64: 2>, scalar_prefetch = 0 : i64, scratch_operands = 0 : i64, tpu.core_type = #tpu.core_type<tc>, window_params = [{transform_indices = @transform_0, window_bounds = array<i64: 1, 104, 24>}, {pipeline_mode = #tpu.pipeline_mode<synchronous>, transform_indices = @transform_1, window_bounds = array<i64: 24, 128>}, {pipeline_mode = #tpu.pipeline_mode<synchronous>, transform_indices = @transform_2, window_bounds = array<i64: 128, 32>}, {pipeline_mode = #tpu.pipeline_mode<synchronous>, transform_indices = @transform_3, window_bounds = array<i64: 3, 52, 104>}, {pipeline_mode = #tpu.pipeline_mode<synchronous>, transform_indices = @transform_4, window_bounds = array<i64: 3, 32, 64>}, {pipeline_mode = #tpu.pipeline_mode<synchronous>, transform_indices = @transform_5, window_bounds = array<i64: 3, 26, 52>}, {pipeline_mode = #tpu.pipeline_mode<synchronous>, transform_indices = @transform_6, window_bounds = array<i64: 3, 64, 128>}, {pipeline_mode = #tpu.pipeline_mode<synchronous>, transform_indices = @transform_7, window_bounds = array<i64: 4, 128>}, {pipeline_mode = #tpu.pipeline_mode<synchronous>, transform_indices = @transform_8, window_bounds = array<i64: 3328, 256>}, {pipeline_mode = #tpu.pipeline_mode<synchronous>, transform_indices = @transform_9, window_bounds = array<i64: 3, 416>}, {pipeline_mode = #tpu.pipeline_mode<synchronous>, transform_indices = @transform_10, window_bounds = array<i64: 256, 416>}, {transform_indices = @transform_11, window_bounds = array<i64: 1, 1, 416>}]} {
    %c0 = arith.constant 0 : index
    %c0_0 = arith.constant 0 : index
    %c0_1 = arith.constant 0 : index
    %0 = vector.load %arg1[%c0, %c0_0, %c0_1] : memref<1x104x24xbf16, #tpu.memory_space<vmem>>, vector<1x104x24xbf16>
    %1 = vector.shape_cast %0 : vector<1x104x24xbf16> to vector<104x24xbf16>
    %c0_2 = arith.constant 0 : index
    %c0_3 = arith.constant 0 : index
    %2 = vector.load %arg2[%c0_2, %c0_3] : memref<24x128xbf16, #tpu.memory_space<vmem>>, vector<24x128xbf16>
    %cst = arith.constant dense<0.000000e+00> : vector<104x128xf32>
    %3 = tpu.matmul %1, %2, %cst {dimension_numbers = #tpu.dot_dimension_numbers<[1], [0], [0], [1], [0, 0, 1, 1], [], []>} : vector<104x24xbf16>, vector<24x128xbf16>, vector<104x128xf32> -> vector<104x128xf32>
    %c0_4 = arith.constant 0 : index
    %c0_5 = arith.constant 0 : index
    %4 = vector.load %arg8[%c0_4, %c0_5] : memref<4x128xf32, #tpu.memory_space<vmem>>, vector<1x128xf32>
    %5 = vector.shape_cast %4 : vector<1x128xf32> to vector<128xf32>
    %6 = vector.shape_cast %5 : vector<128xf32> to vector<1x128xf32>
    %7 = vector.broadcast %6 : vector<1x128xf32> to vector<104x128xf32>
    %8 = arith.addf %3, %7 : vector<104x128xf32>
    %cst_6 = arith.constant 0.000000e+00 : f32
    %9 = vector.broadcast %cst_6 : f32 to vector<104x128xf32>
    %10 = arith.maximumf %8, %9 : vector<104x128xf32>
    %11 = arith.truncf %10 : vector<104x128xf32> to vector<104x128xbf16>
    %c0_7 = arith.constant 0 : index
    %c0_8 = arith.constant 0 : index
    %12 = vector.load %arg3[%c0_7, %c0_8] : memref<128x32xbf16, #tpu.memory_space<vmem>>, vector<128x32xbf16>
    %cst_9 = arith.constant dense<0.000000e+00> : vector<104x32xf32>
    %13 = tpu.matmul %11, %12, %cst_9 {dimension_numbers = #tpu.dot_dimension_numbers<[1], [0], [0], [1], [0, 0, 1, 1], [], []>} : vector<104x128xbf16>, vector<128x32xbf16>, vector<104x32xf32> -> vector<104x32xf32>
    %c1 = arith.constant 1 : index
    %c0_10 = arith.constant 0 : index
    %14 = vector.load %arg8[%c1, %c0_10] : memref<4x128xf32, #tpu.memory_space<vmem>>, vector<1x32xf32>
    %15 = vector.shape_cast %14 : vector<1x32xf32> to vector<32xf32>
    %16 = vector.shape_cast %15 : vector<32xf32> to vector<1x32xf32>
    %17 = vector.broadcast %16 : vector<1x32xf32> to vector<104x32xf32>
    %18 = arith.addf %13, %17 : vector<104x32xf32>
    %cst_11 = arith.constant 0.000000e+00 : f32
    %19 = vector.broadcast %cst_11 : f32 to vector<104x32xf32>
    %20 = arith.maximumf %18, %19 : vector<104x32xf32>
    %21 = arith.truncf %20 : vector<104x32xf32> to vector<104x32xbf16>
    %c0_12 = arith.constant 0 : index
    %c0_13 = arith.constant 0 : index
    %c0_14 = arith.constant 0 : index
    %22 = vector.load %arg4[%c0_12, %c0_13, %c0_14] : memref<3x52x104xbf16, #tpu.memory_space<vmem>>, vector<1x52x104xbf16>
    %23 = vector.shape_cast %22 : vector<1x52x104xbf16> to vector<52x104xbf16>
    %cst_15 = arith.constant dense<0.000000e+00> : vector<52x32xf32>
    %24 = tpu.matmul %23, %21, %cst_15 {dimension_numbers = #tpu.dot_dimension_numbers<[1], [0], [0], [1], [0, 0, 1, 1], [], []>} : vector<52x104xbf16>, vector<104x32xbf16>, vector<52x32xf32> -> vector<52x32xf32>
    %25 = arith.truncf %24 : vector<52x32xf32> to vector<52x32xbf16>
    %c0_16 = arith.constant 0 : index
    %c0_17 = arith.constant 0 : index
    %c0_18 = arith.constant 0 : index
    %26 = vector.load %arg5[%c0_16, %c0_17, %c0_18] : memref<3x32x64xbf16, #tpu.memory_space<vmem>>, vector<1x32x64xbf16>
    %27 = vector.shape_cast %26 : vector<1x32x64xbf16> to vector<32x64xbf16>
    %cst_19 = arith.constant dense<0.000000e+00> : vector<52x64xf32>
    %28 = tpu.matmul %25, %27, %cst_19 {dimension_numbers = #tpu.dot_dimension_numbers<[1], [0], [0], [1], [0, 0, 1, 1], [], []>} : vector<52x32xbf16>, vector<32x64xbf16>, vector<52x64xf32> -> vector<52x64xf32>
    %c1_20 = arith.constant 1 : index
    %c0_21 = arith.constant 0 : index
    %c0_22 = arith.constant 0 : index
    %29 = vector.load %arg4[%c1_20, %c0_21, %c0_22] : memref<3x52x104xbf16, #tpu.memory_space<vmem>>, vector<1x52x104xbf16>
    %30 = vector.shape_cast %29 : vector<1x52x104xbf16> to vector<52x104xbf16>
    %cst_23 = arith.constant dense<0.000000e+00> : vector<52x32xf32>
    %31 = tpu.matmul %30, %21, %cst_23 {dimension_numbers = #tpu.dot_dimension_numbers<[1], [0], [0], [1], [0, 0, 1, 1], [], []>} : vector<52x104xbf16>, vector<104x32xbf16>, vector<52x32xf32> -> vector<52x32xf32>
    %32 = arith.truncf %31 : vector<52x32xf32> to vector<52x32xbf16>
    %c1_24 = arith.constant 1 : index
    %c0_25 = arith.constant 0 : index
    %c0_26 = arith.constant 0 : index
    %33 = vector.load %arg5[%c1_24, %c0_25, %c0_26] : memref<3x32x64xbf16, #tpu.memory_space<vmem>>, vector<1x32x64xbf16>
    %34 = vector.shape_cast %33 : vector<1x32x64xbf16> to vector<32x64xbf16>
    %cst_27 = arith.constant dense<0.000000e+00> : vector<52x64xf32>
    %35 = tpu.matmul %32, %34, %cst_27 {dimension_numbers = #tpu.dot_dimension_numbers<[1], [0], [0], [1], [0, 0, 1, 1], [], []>} : vector<52x32xbf16>, vector<32x64xbf16>, vector<52x64xf32> -> vector<52x64xf32>
    %36 = arith.addf %28, %35 : vector<52x64xf32>
    %c2 = arith.constant 2 : index
    %c0_28 = arith.constant 0 : index
    %c0_29 = arith.constant 0 : index
    %37 = vector.load %arg4[%c2, %c0_28, %c0_29] : memref<3x52x104xbf16, #tpu.memory_space<vmem>>, vector<1x52x104xbf16>
    %38 = vector.shape_cast %37 : vector<1x52x104xbf16> to vector<52x104xbf16>
    %cst_30 = arith.constant dense<0.000000e+00> : vector<52x32xf32>
    %39 = tpu.matmul %38, %21, %cst_30 {dimension_numbers = #tpu.dot_dimension_numbers<[1], [0], [0], [1], [0, 0, 1, 1], [], []>} : vector<52x104xbf16>, vector<104x32xbf16>, vector<52x32xf32> -> vector<52x32xf32>
    %40 = arith.truncf %39 : vector<52x32xf32> to vector<52x32xbf16>
    %c2_31 = arith.constant 2 : index
    %c0_32 = arith.constant 0 : index
    %c0_33 = arith.constant 0 : index
    %41 = vector.load %arg5[%c2_31, %c0_32, %c0_33] : memref<3x32x64xbf16, #tpu.memory_space<vmem>>, vector<1x32x64xbf16>
    %42 = vector.shape_cast %41 : vector<1x32x64xbf16> to vector<32x64xbf16>
    %cst_34 = arith.constant dense<0.000000e+00> : vector<52x64xf32>
    %43 = tpu.matmul %40, %42, %cst_34 {dimension_numbers = #tpu.dot_dimension_numbers<[1], [0], [0], [1], [0, 0, 1, 1], [], []>} : vector<52x32xbf16>, vector<32x64xbf16>, vector<52x64xf32> -> vector<52x64xf32>
    %44 = arith.addf %36, %43 : vector<52x64xf32>
    %c2_35 = arith.constant 2 : index
    %c0_36 = arith.constant 0 : index
    %45 = vector.load %arg8[%c2_35, %c0_36] : memref<4x128xf32, #tpu.memory_space<vmem>>, vector<1x64xf32>
    %46 = vector.shape_cast %45 : vector<1x64xf32> to vector<64xf32>
    %47 = vector.shape_cast %46 : vector<64xf32> to vector<1x64xf32>
    %48 = vector.broadcast %47 : vector<1x64xf32> to vector<52x64xf32>
    %49 = arith.addf %44, %48 : vector<52x64xf32>
    %cst_37 = arith.constant 0.000000e+00 : f32
    %50 = vector.broadcast %cst_37 : f32 to vector<52x64xf32>
    %51 = arith.maximumf %49, %50 : vector<52x64xf32>
    %52 = arith.truncf %51 : vector<52x64xf32> to vector<52x64xbf16>
    %c0_38 = arith.constant 0 : index
    %c0_39 = arith.constant 0 : index
    %c0_40 = arith.constant 0 : index
    %53 = vector.load %arg6[%c0_38, %c0_39, %c0_40] : memref<3x26x52xbf16, #tpu.memory_space<vmem>>, vector<1x26x52xbf16>
    %54 = vector.shape_cast %53 : vector<1x26x52xbf16> to vector<26x52xbf16>
    %cst_41 = arith.constant dense<0.000000e+00> : vector<26x64xf32>
    %55 = tpu.matmul %54, %52, %cst_41 {dimension_numbers = #tpu.dot_dimension_numbers<[1], [0], [0], [1], [0, 0, 1, 1], [], []>} : vector<26x52xbf16>, vector<52x64xbf16>, vector<26x64xf32> -> vector<26x64xf32>
    %56 = arith.truncf %55 : vector<26x64xf32> to vector<26x64xbf16>
    %c0_42 = arith.constant 0 : index
    %c0_43 = arith.constant 0 : index
    %c0_44 = arith.constant 0 : index
    %57 = vector.load %arg7[%c0_42, %c0_43, %c0_44] : memref<3x64x128xbf16, #tpu.memory_space<vmem>>, vector<1x64x128xbf16>
    %58 = vector.shape_cast %57 : vector<1x64x128xbf16> to vector<64x128xbf16>
    %cst_45 = arith.constant dense<0.000000e+00> : vector<26x128xf32>
    %59 = tpu.matmul %56, %58, %cst_45 {dimension_numbers = #tpu.dot_dimension_numbers<[1], [0], [0], [1], [0, 0, 1, 1], [], []>} : vector<26x64xbf16>, vector<64x128xbf16>, vector<26x128xf32> -> vector<26x128xf32>
    %c1_46 = arith.constant 1 : index
    %c0_47 = arith.constant 0 : index
    %c0_48 = arith.constant 0 : index
    %60 = vector.load %arg6[%c1_46, %c0_47, %c0_48] : memref<3x26x52xbf16, #tpu.memory_space<vmem>>, vector<1x26x52xbf16>
    %61 = vector.shape_cast %60 : vector<1x26x52xbf16> to vector<26x52xbf16>
    %cst_49 = arith.constant dense<0.000000e+00> : vector<26x64xf32>
    %62 = tpu.matmul %61, %52, %cst_49 {dimension_numbers = #tpu.dot_dimension_numbers<[1], [0], [0], [1], [0, 0, 1, 1], [], []>} : vector<26x52xbf16>, vector<52x64xbf16>, vector<26x64xf32> -> vector<26x64xf32>
    %63 = arith.truncf %62 : vector<26x64xf32> to vector<26x64xbf16>
    %c1_50 = arith.constant 1 : index
    %c0_51 = arith.constant 0 : index
    %c0_52 = arith.constant 0 : index
    %64 = vector.load %arg7[%c1_50, %c0_51, %c0_52] : memref<3x64x128xbf16, #tpu.memory_space<vmem>>, vector<1x64x128xbf16>
    %65 = vector.shape_cast %64 : vector<1x64x128xbf16> to vector<64x128xbf16>
    %cst_53 = arith.constant dense<0.000000e+00> : vector<26x128xf32>
    %66 = tpu.matmul %63, %65, %cst_53 {dimension_numbers = #tpu.dot_dimension_numbers<[1], [0], [0], [1], [0, 0, 1, 1], [], []>} : vector<26x64xbf16>, vector<64x128xbf16>, vector<26x128xf32> -> vector<26x128xf32>
    %67 = arith.addf %59, %66 : vector<26x128xf32>
    %c2_54 = arith.constant 2 : index
    %c0_55 = arith.constant 0 : index
    %c0_56 = arith.constant 0 : index
    %68 = vector.load %arg6[%c2_54, %c0_55, %c0_56] : memref<3x26x52xbf16, #tpu.memory_space<vmem>>, vector<1x26x52xbf16>
    %69 = vector.shape_cast %68 : vector<1x26x52xbf16> to vector<26x52xbf16>
    %cst_57 = arith.constant dense<0.000000e+00> : vector<26x64xf32>
    %70 = tpu.matmul %69, %52, %cst_57 {dimension_numbers = #tpu.dot_dimension_numbers<[1], [0], [0], [1], [0, 0, 1, 1], [], []>} : vector<26x52xbf16>, vector<52x64xbf16>, vector<26x64xf32> -> vector<26x64xf32>
    %71 = arith.truncf %70 : vector<26x64xf32> to vector<26x64xbf16>
    %c2_58 = arith.constant 2 : index
    %c0_59 = arith.constant 0 : index
    %c0_60 = arith.constant 0 : index
    %72 = vector.load %arg7[%c2_58, %c0_59, %c0_60] : memref<3x64x128xbf16, #tpu.memory_space<vmem>>, vector<1x64x128xbf16>
    %73 = vector.shape_cast %72 : vector<1x64x128xbf16> to vector<64x128xbf16>
    %cst_61 = arith.constant dense<0.000000e+00> : vector<26x128xf32>
    %74 = tpu.matmul %71, %73, %cst_61 {dimension_numbers = #tpu.dot_dimension_numbers<[1], [0], [0], [1], [0, 0, 1, 1], [], []>} : vector<26x64xbf16>, vector<64x128xbf16>, vector<26x128xf32> -> vector<26x128xf32>
    %75 = arith.addf %67, %74 : vector<26x128xf32>
    %c3 = arith.constant 3 : index
    %c0_62 = arith.constant 0 : index
    %76 = vector.load %arg8[%c3, %c0_62] : memref<4x128xf32, #tpu.memory_space<vmem>>, vector<1x128xf32>
    %77 = vector.shape_cast %76 : vector<1x128xf32> to vector<128xf32>
    %78 = vector.shape_cast %77 : vector<128xf32> to vector<1x128xf32>
    %79 = vector.broadcast %78 : vector<1x128xf32> to vector<26x128xf32>
    %80 = arith.addf %75, %79 : vector<26x128xf32>
    %cst_63 = arith.constant 0.000000e+00 : f32
    %81 = vector.broadcast %cst_63 : f32 to vector<26x128xf32>
    %82 = arith.maximumf %80, %81 : vector<26x128xf32>
    %83 = arith.truncf %82 : vector<26x128xf32> to vector<26x128xbf16>
    %84 = vector.extract_strided_slice %83 {offsets = [0, 0], sizes = [1, 128], strides = [1, 1]} : vector<26x128xbf16> to vector<1x128xbf16>
    %85 = vector.extract_strided_slice %83 {offsets = [1, 0], sizes = [1, 128], strides = [1, 1]} : vector<26x128xbf16> to vector<1x128xbf16>
    %86 = vector.extract_strided_slice %83 {offsets = [2, 0], sizes = [1, 128], strides = [1, 1]} : vector<26x128xbf16> to vector<1x128xbf16>
    %87 = vector.extract_strided_slice %83 {offsets = [3, 0], sizes = [1, 128], strides = [1, 1]} : vector<26x128xbf16> to vector<1x128xbf16>
    %88 = vector.extract_strided_slice %83 {offsets = [4, 0], sizes = [1, 128], strides = [1, 1]} : vector<26x128xbf16> to vector<1x128xbf16>
    %89 = vector.extract_strided_slice %83 {offsets = [5, 0], sizes = [1, 128], strides = [1, 1]} : vector<26x128xbf16> to vector<1x128xbf16>
    %90 = vector.extract_strided_slice %83 {offsets = [6, 0], sizes = [1, 128], strides = [1, 1]} : vector<26x128xbf16> to vector<1x128xbf16>
    %91 = vector.extract_strided_slice %83 {offsets = [7, 0], sizes = [1, 128], strides = [1, 1]} : vector<26x128xbf16> to vector<1x128xbf16>
    %92 = vector.extract_strided_slice %83 {offsets = [8, 0], sizes = [1, 128], strides = [1, 1]} : vector<26x128xbf16> to vector<1x128xbf16>
    %93 = vector.extract_strided_slice %83 {offsets = [9, 0], sizes = [1, 128], strides = [1, 1]} : vector<26x128xbf16> to vector<1x128xbf16>
    %94 = vector.extract_strided_slice %83 {offsets = [10, 0], sizes = [1, 128], strides = [1, 1]} : vector<26x128xbf16> to vector<1x128xbf16>
    %95 = vector.extract_strided_slice %83 {offsets = [11, 0], sizes = [1, 128], strides = [1, 1]} : vector<26x128xbf16> to vector<1x128xbf16>
    %96 = vector.extract_strided_slice %83 {offsets = [12, 0], sizes = [1, 128], strides = [1, 1]} : vector<26x128xbf16> to vector<1x128xbf16>
    %97 = vector.extract_strided_slice %83 {offsets = [13, 0], sizes = [1, 128], strides = [1, 1]} : vector<26x128xbf16> to vector<1x128xbf16>
    %98 = vector.extract_strided_slice %83 {offsets = [14, 0], sizes = [1, 128], strides = [1, 1]} : vector<26x128xbf16> to vector<1x128xbf16>
    %99 = vector.extract_strided_slice %83 {offsets = [15, 0], sizes = [1, 128], strides = [1, 1]} : vector<26x128xbf16> to vector<1x128xbf16>
    %100 = vector.extract_strided_slice %83 {offsets = [16, 0], sizes = [1, 128], strides = [1, 1]} : vector<26x128xbf16> to vector<1x128xbf16>
    %101 = vector.extract_strided_slice %83 {offsets = [17, 0], sizes = [1, 128], strides = [1, 1]} : vector<26x128xbf16> to vector<1x128xbf16>
    %102 = vector.extract_strided_slice %83 {offsets = [18, 0], sizes = [1, 128], strides = [1, 1]} : vector<26x128xbf16> to vector<1x128xbf16>
    %103 = vector.extract_strided_slice %83 {offsets = [19, 0], sizes = [1, 128], strides = [1, 1]} : vector<26x128xbf16> to vector<1x128xbf16>
    %104 = vector.extract_strided_slice %83 {offsets = [20, 0], sizes = [1, 128], strides = [1, 1]} : vector<26x128xbf16> to vector<1x128xbf16>
    %105 = vector.extract_strided_slice %83 {offsets = [21, 0], sizes = [1, 128], strides = [1, 1]} : vector<26x128xbf16> to vector<1x128xbf16>
    %106 = vector.extract_strided_slice %83 {offsets = [22, 0], sizes = [1, 128], strides = [1, 1]} : vector<26x128xbf16> to vector<1x128xbf16>
    %107 = vector.extract_strided_slice %83 {offsets = [23, 0], sizes = [1, 128], strides = [1, 1]} : vector<26x128xbf16> to vector<1x128xbf16>
    %108 = vector.extract_strided_slice %83 {offsets = [24, 0], sizes = [1, 128], strides = [1, 1]} : vector<26x128xbf16> to vector<1x128xbf16>
    %109 = vector.extract_strided_slice %83 {offsets = [25, 0], sizes = [1, 128], strides = [1, 1]} : vector<26x128xbf16> to vector<1x128xbf16>
    %110 = tpu.concatenate %84, %85, %86, %87, %88, %89, %90, %91, %92, %93, %94, %95, %96, %97, %98, %99 in 1 : vector<1x128xbf16>, vector<1x128xbf16>, vector<1x128xbf16>, vector<1x128xbf16>, vector<1x128xbf16>, vector<1x128xbf16>, vector<1x128xbf16>, vector<1x128xbf16>, vector<1x128xbf16>, vector<1x128xbf16>, vector<1x128xbf16>, vector<1x128xbf16>, vector<1x128xbf16>, vector<1x128xbf16>, vector<1x128xbf16>, vector<1x128xbf16> -> vector<1x2048xbf16>
    %111 = tpu.concatenate %100, %101, %102, %103, %104, %105, %106, %107, %108, %109 in 1 : vector<1x128xbf16>, vector<1x128xbf16>, vector<1x128xbf16>, vector<1x128xbf16>, vector<1x128xbf16>, vector<1x128xbf16>, vector<1x128xbf16>, vector<1x128xbf16>, vector<1x128xbf16>, vector<1x128xbf16> -> vector<1x1280xbf16>
    %112 = tpu.concatenate %110, %111 in 1 : vector<1x2048xbf16>, vector<1x1280xbf16> -> vector<1x3328xbf16>
    %c0_64 = arith.constant 0 : index
    %c0_65 = arith.constant 0 : index
    %113 = vector.load %arg9[%c0_64, %c0_65] : memref<3328x256xbf16, #tpu.memory_space<vmem>>, vector<3328x256xbf16>
    %cst_66 = arith.constant dense<0.000000e+00> : vector<1x256xf32>
    %114 = tpu.matmul %112, %113, %cst_66 {dimension_numbers = #tpu.dot_dimension_numbers<[1], [0], [0], [1], [0, 0, 1, 1], [], []>} : vector<1x3328xbf16>, vector<3328x256xbf16>, vector<1x256xf32> -> vector<1x256xf32>
    %c0_67 = arith.constant 0 : index
    %c0_68 = arith.constant 0 : index
    %115 = vector.load %arg10[%c0_67, %c0_68] : memref<3x416xf32, #tpu.memory_space<vmem>>, vector<1x256xf32>
    %116 = arith.mulf %114, %115 : vector<1x256xf32>
    %c1_69 = arith.constant 1 : index
    %c0_70 = arith.constant 0 : index
    %117 = vector.load %arg10[%c1_69, %c0_70] : memref<3x416xf32, #tpu.memory_space<vmem>>, vector<1x256xf32>
    %118 = arith.addf %116, %117 : vector<1x256xf32>
    %119 = arith.truncf %118 : vector<1x256xf32> to vector<1x256xbf16>
    %c0_71 = arith.constant 0 : index
    %c0_72 = arith.constant 0 : index
    %120 = vector.load %arg11[%c0_71, %c0_72] : memref<256x416xbf16, #tpu.memory_space<vmem>>, vector<256x416xbf16>
    %cst_73 = arith.constant dense<0.000000e+00> : vector<1x416xf32>
    %121 = tpu.matmul %119, %120, %cst_73 {dimension_numbers = #tpu.dot_dimension_numbers<[1], [0], [0], [1], [0, 0, 1, 1], [], []>} : vector<1x256xbf16>, vector<256x416xbf16>, vector<1x416xf32> -> vector<1x416xf32>
    %c2_74 = arith.constant 2 : index
    %c0_75 = arith.constant 0 : index
    %122 = vector.load %arg10[%c2_74, %c0_75] : memref<3x416xf32, #tpu.memory_space<vmem>>, vector<1x416xf32>
    %123 = arith.addf %121, %122 : vector<1x416xf32>
    %c0_76 = arith.constant 0 : index
    %c0_77 = arith.constant 0 : index
    %c0_78 = arith.constant 0 : index
    %124 = vector.load %arg12[%c0_76, %c0_77, %c0_78] : memref<1x1x416xf32, #tpu.memory_space<vmem>>, vector<1x1x416xf32>
    %125 = vector.shape_cast %124 : vector<1x1x416xf32> to vector<1x416xf32>
    %126 = vector.shape_cast %123 : vector<1x416xf32> to vector<1x1x416xf32>
    tpu.vector_store %arg12[%c0_76, %c0_77, %c0_78], %126 {strides = array<i32>} : memref<1x1x416xf32, #tpu.memory_space<vmem>>, vector<1x1x416xf32>,
    return
  }
  func.func @transform_0(%arg0: i32) -> (i32, i32, i32) {
    %c0_i32 = arith.constant 0 : i32
    %c0_i32_0 = arith.constant 0 : i32
    %c0_i32_1 = arith.constant 0 : i32
    return %arg0, %c0_i32, %c0_i32_0 : i32, i32, i32
  }
  func.func @transform_1(%arg0: i32) -> (i32, i32) {
    %c0_i32 = arith.constant 0 : i32
    %c0_i32_0 = arith.constant 0 : i32
    %c0_i32_1 = arith.constant 0 : i32
    return %c0_i32, %c0_i32_0 : i32, i32
  }
  func.func @transform_2(%arg0: i32) -> (i32, i32) {
    %c0_i32 = arith.constant 0 : i32
    %c0_i32_0 = arith.constant 0 : i32
    %c0_i32_1 = arith.constant 0 : i32
    return %c0_i32, %c0_i32_0 : i32, i32
  }
  func.func @transform_3(%arg0: i32) -> (i32, i32, i32) {
    %c0_i32 = arith.constant 0 : i32
    %c0_i32_0 = arith.constant 0 : i32
    %c0_i32_1 = arith.constant 0 : i32
    %c0_i32_2 = arith.constant 0 : i32
    return %c0_i32, %c0_i32_0, %c0_i32_1 : i32, i32, i32
  }
  func.func @transform_4(%arg0: i32) -> (i32, i32, i32) {
    %c0_i32 = arith.constant 0 : i32
    %c0_i32_0 = arith.constant 0 : i32
    %c0_i32_1 = arith.constant 0 : i32
    %c0_i32_2 = arith.constant 0 : i32
    return %c0_i32, %c0_i32_0, %c0_i32_1 : i32, i32, i32
  }
  func.func @transform_5(%arg0: i32) -> (i32, i32, i32) {
    %c0_i32 = arith.constant 0 : i32
    %c0_i32_0 = arith.constant 0 : i32
    %c0_i32_1 = arith.constant 0 : i32
    %c0_i32_2 = arith.constant 0 : i32
    return %c0_i32, %c0_i32_0, %c0_i32_1 : i32, i32, i32
  }
  func.func @transform_6(%arg0: i32) -> (i32, i32, i32) {
    %c0_i32 = arith.constant 0 : i32
    %c0_i32_0 = arith.constant 0 : i32
    %c0_i32_1 = arith.constant 0 : i32
    %c0_i32_2 = arith.constant 0 : i32
    return %c0_i32, %c0_i32_0, %c0_i32_1 : i32, i32, i32
  }
  func.func @transform_7(%arg0: i32) -> (i32, i32) {
    %c0_i32 = arith.constant 0 : i32
    %c0_i32_0 = arith.constant 0 : i32
    %c0_i32_1 = arith.constant 0 : i32
    return %c0_i32, %c0_i32_0 : i32, i32
  }
  func.func @transform_8(%arg0: i32) -> (i32, i32) {
    %c0_i32 = arith.constant 0 : i32
    %c0_i32_0 = arith.constant 0 : i32
    %c0_i32_1 = arith.constant 0 : i32
    return %c0_i32, %c0_i32_0 : i32, i32
  }
  func.func @transform_9(%arg0: i32) -> (i32, i32) {
    %c0_i32 = arith.constant 0 : i32
    %c0_i32_0 = arith.constant 0 : i32
    %c0_i32_1 = arith.constant 0 : i32
    return %c0_i32, %c0_i32_0 : i32, i32
  }
  func.func @transform_10(%arg0: i32) -> (i32, i32) {
    %c0_i32 = arith.constant 0 : i32
    %c0_i32_0 = arith.constant 0 : i32
    %c0_i32_1 = arith.constant 0 : i32
    return %c0_i32, %c0_i32_0 : i32, i32
  }
  func.func @transform_11(%arg0: i32) -> (i32, i32, i32) {
    %c0_i32 = arith.constant 0 : i32
    %c0_i32_0 = arith.constant 0 : i32
    %c0_i32_1 = arith.constant 0 : i32
    return %arg0, %c0_i32, %c0_i32_0 : i32, i32, i32
  }
}

</mosaic_0001>

<llo_original>
// kernel: ripnet_forward.1
$region0: #{ripnet_forward.1}
  #allocation0 [shape = 'u32[]', space=smem, size = 0x4, offset = 0x4, fixed_abs, tag = 'smem constant byte address 0x4 - core index']
  #allocation1 [shape = 'u32[72,128]{1,0:T(1,128)}', space=vmem, size = 0x9000, scoped, tag = 'internal scratch']
  %s0 = inlined_call_operand.vmem [shape: bf16[2,104,24], index: 0, kind: input, shape index: {}]
  %s1 = inlined_call_operand.hbm [shape: bf16[24,128], index: 1, kind: input, shape index: {}]
  %s2 = inlined_call_operand.vmem [shape: bf16[128,32], index: 2, kind: input, shape index: {}]
  %s3 = inlined_call_operand.hbm [shape: bf16[3,52,104], index: 3, kind: input, shape index: {}]
  %s4 = inlined_call_operand.hbm [shape: bf16[3,32,64], index: 4, kind: input, shape index: {}]
  %s5 = inlined_call_operand.hbm [shape: bf16[3,26,52], index: 5, kind: input, shape index: {}]
  %s6 = inlined_call_operand.hbm [shape: bf16[3,64,128], index: 6, kind: input, shape index: {}]
  %s7 = inlined_call_operand.hbm [shape: f32[4,128], index: 7, kind: input, shape index: {}]
  %s8 = inlined_call_operand.hbm [shape: bf16[3328,256], index: 8, kind: input, shape index: {}]
  %s9 = inlined_call_operand.hbm [shape: f32[3,416], index: 9, kind: input, shape index: {}]
  %s10 = inlined_call_operand.vmem [shape: bf16[256,416], index: 10, kind: input, shape index: {}]
  %s11 = inlined_call_operand.vmem [shape: f32[2,1,416], index: 11, kind: output, shape index: {}]
  %s12 = sld [smem:[#allocation0]]
  $region109: #{ripnet_forward.1} parent=0
    _
  %s14 = ssub.s32 1, %s12
  %s15 = scalar_select 0, %s14, %s12
  $region1: #{ripnet_forward.1} parent=0
    #allocation2 [shape = 'u8[6144]{0}', space=vmem, size = 0x1800, scoped, tag = 'input window, operand 1, single buffered']
    #allocation3 [shape = 's32[2]{0}', space=sflag, size = 0x8, scoped, tag = 'scoped memory for ripnet_forward.1']
    #allocation4 [shape = 'u8[43008]{0}', space=vmem, size = 0xa800, scoped, tag = 'input window, operand 3, single buffered']
    #allocation5 [shape = 's32[1]{0}', space=sflag, size = 0x4, scoped, tag = 'scoped memory for ripnet_forward.1']
    #allocation6 [shape = 'u8[24576]{0}', space=vmem, size = 0x6000, scoped, tag = 'input window, operand 4, single buffered']
    #allocation7 [shape = 'u8[24576]{0}', space=vmem, size = 0x6000, scoped, tag = 'input window, operand 5, single buffered']
    #allocation8 [shape = 's32[1]{0}', space=sflag, size = 0x4, scoped, tag = 'scoped memory for ripnet_forward.1']
    #allocation9 [shape = 'u8[49152]{0}', space=vmem, size = 0xc000, scoped, tag = 'input window, operand 6, single buffered']
    #allocation10 [shape = 'u8[2048]{0}', space=vmem, size = 0x800, scoped, tag = 'input window, operand 7, single buffered']
    #allocation11 [shape = 's32[1]{0}', space=sflag, size = 0x4, scoped, tag = 'scoped memory for ripnet_forward.1']
    #allocation12 [shape = 'u8[1703936]{0}', space=vmem, size = 0x1a0000, scoped, tag = 'input window, operand 8, single buffered']
    #allocation13 [shape = 'u8[8192]{0}', space=vmem, size = 0x2000, scoped, tag = 'input window, operand 9, single buffered']
    #allocation14 [shape = 's32[1]{0}', space=sflag, size = 0x4, scoped, tag = 'scoped memory for ripnet_forward.1']
    %16 = vsyncpa [#allocation3], 0
    %17 = vsyncpa [#allocation5], 0
    %18 = vsyncpa [#allocation8], 0
    %19 = vsyncpa [#allocation11], 0
    %20 = vsyncpa [#allocation14], 0
    loop: start=0, step=1, limit=4
    $region2: #{ripnet_forward.1} parent=1 // loop_pre_header
      _
    $region3: #{ripnet_forward.1} parent=1 // loop_header
      %s22 = sphi 0, %s26
      %p23 = scmp.ge.s32.totalorder %s22, 4
      %s32 = sphi 0, %s34
      %s35 = sphi 0, %s32
      %s36 = sphi 0, %s35
      %s52 = sphi 0, %s36
      %s56 = sphi 0, %s56
      %s58 = sphi 0, %s56
      %s59 = sphi 0, %s58
      %s73 = sphi 0, %s59
      %s77 = sphi 0, %s77
      %s79 = sphi 0, %s77
      %s80 = sphi 0, %s79
      %s94 = sphi 0, %s80
      %s98 = sphi 0, %s98
      %s100 = sphi 0, %s98
      %s101 = sphi 0, %s100
      %s115 = sphi 0, %s101
      %s119 = sphi 0, %s119
      %s121 = sphi 0, %s119
      %s122 = sphi 0, %s121
      %s136 = sphi 0, %s122
      %s140 = sphi 0, %s140
      %s142 = sphi 0, %s140
      %s143 = sphi 0, %s142
      %s157 = sphi 0, %s143
      %s161 = sphi 0, %s161
      %s163 = sphi 0, %s161
      %s164 = sphi 0, %s163
      %s178 = sphi 0, %s164
      %s182 = sphi 0, %s182
      %s184 = sphi 0, %s182
      %s185 = sphi 0, %s184
      %s199 = sphi 0, %s185
      %s203 = sphi 0, %s203
      %s205 = sphi 0, %s203
      %s206 = sphi 0, %s205
      %s220 = sphi 0, %s206
      %s224 = sphi 0, %s224
      %s226 = sphi 0, %s224
      %s227 = sphi 0, %s226
      %s241 = sphi 0, %s227
      %s245 = sphi 0, %s245
      %s247 = sphi 0, %s245
      %s248 = sphi 0, %s247
      %s262 = sphi 0, %s248
      %s268 = sphi 0, %s270
      %s271 = sphi 0, %s268
      %s272 = sphi 0, %s271
      %s288 = sphi 0, %s272
    $region4: #{ripnet_forward.1} parent=1 // loop_header_branch
      %25 = sbr.rel (%p23) target = $region8
    $region5: #{ripnet_forward.1} parent=1 // loop_body
      %s27 = ssub.s32 %s22, 1
      %s28 = ssub.s32 %s22, 2
      %s29 = sadd.s32 %s22, 1
      %s30 = ssub.s32 %s22, %s29
      %p31 = scmp.eq.s32.totalorder %s30, 0
      %s33 = sadd.s32 %s32, 1
      %s34 = scalar_select %p31, %s32, %s33
      %p37 = pneg %p31
      %p38 = scmp.eq.s32.totalorder %s22, 1
      %p39 = por %p37, %p38
      %p40 = scmp.ne.s32.totalorder %s32, %s35
      %p41 = scmp.eq.s32.totalorder %s22, 0
      %p42 = por %p40, %p41
      %p43 = scmp.ne.s32.totalorder %s32, %s35
      %p44 = scmp.eq.s32.totalorder %s27, 1
      %p45 = por %p43, %p44
      %p46 = scmp.ne.s32.totalorder %s35, %s36
      %p47 = scmp.eq.s32.totalorder %s27, 0
      %p48 = por %p46, %p47
      %p49 = scmp.ne.s32.totalorder %s35, %s36
      %p50 = scmp.eq.s32.totalorder %s28, 1
      %p51 = por %p49, %p50
      %p53 = scmp.ne.s32.totalorder %s36, %s52
      %p54 = scmp.eq.s32.totalorder %s28, 0
      %p55 = por %p53, %p54
      %s57 = sadd.s32 %s56, 1
      %p60 = scmp.eq.s32.totalorder %s22, 1
      %p61 = scmp.ne.s32.totalorder %s56, %s58
      %p62 = scmp.eq.s32.totalorder %s22, 0
      %p63 = por %p61, %p62
      %p64 = scmp.ne.s32.totalorder %s56, %s58
      %p65 = scmp.eq.s32.totalorder %s27, 1
      %p66 = por %p64, %p65
      %p67 = scmp.ne.s32.totalorder %s58, %s59
      %p68 = scmp.eq.s32.totalorder %s27, 0
      %p69 = por %p67, %p68
      %p70 = scmp.ne.s32.totalorder %s58, %s59
      %p71 = scmp.eq.s32.totalorder %s28, 1
      %p72 = por %p70, %p71
      %p74 = scmp.ne.s32.totalorder %s59, %s73
      %p75 = scmp.eq.s32.totalorder %s28, 0
      %p76 = por %p74, %p75
      %s78 = sadd.s32 %s77, 1
      %p81 = scmp.eq.s32.totalorder %s22, 1
      %p82 = scmp.ne.s32.totalorder %s77, %s79
      %p83 = scmp.eq.s32.totalorder %s22, 0
      %p84 = por %p82, %p83
      %p85 = scmp.ne.s32.totalorder %s77, %s79
      %p86 = scmp.eq.s32.totalorder %s27, 1
      %p87 = por %p85, %p86
      %p88 = scmp.ne.s32.totalorder %s79, %s80
      %p89 = scmp.eq.s32.totalorder %s27, 0
      %p90 = por %p88, %p89
      %p91 = scmp.ne.s32.totalorder %s79, %s80
      %p92 = scmp.eq.s32.totalorder %s28, 1
      %p93 = por %p91, %p92
      %p95 = scmp.ne.s32.totalorder %s80, %s94
      %p96 = scmp.eq.s32.totalorder %s28, 0
      %p97 = por %p95, %p96
      %s99 = sadd.s32 %s98, 1
      %p102 = scmp.eq.s32.totalorder %s22, 1
      %p103 = scmp.ne.s32.totalorder %s98, %s100
      %p104 = scmp.eq.s32.totalorder %s22, 0
      %p105 = por %p103, %p104
      %p106 = scmp.ne.s32.totalorder %s98, %s100
      %p107 = scmp.eq.s32.totalorder %s27, 1
      %p108 = por %p106, %p107
      %p109 = scmp.ne.s32.totalorder %s100, %s101
      %p110 = scmp.eq.s32.totalorder %s27, 0
      %p111 = por %p109, %p110
      %p112 = scmp.ne.s32.totalorder %s100, %s101
      %p113 = scmp.eq.s32.totalorder %s28, 1
      %p114 = por %p112, %p113
      %p116 = scmp.ne.s32.totalorder %s101, %s115
      %p117 = scmp.eq.s32.totalorder %s28, 0
      %p118 = por %p116, %p117
      %s120 = sadd.s32 %s119, 1
      %p123 = scmp.eq.s32.totalorder %s22, 1
      %p124 = scmp.ne.s32.totalorder %s119, %s121
      %p125 = scmp.eq.s32.totalorder %s22, 0
      %p126 = por %p124, %p125
      %p127 = scmp.ne.s32.totalorder %s119, %s121
      %p128 = scmp.eq.s32.totalorder %s27, 1
      %p129 = por %p127, %p128
      %p130 = scmp.ne.s32.totalorder %s121, %s122
      %p131 = scmp.eq.s32.totalorder %s27, 0
      %p132 = por %p130, %p131
      %p133 = scmp.ne.s32.totalorder %s121, %s122
      %p134 = scmp.eq.s32.totalorder %s28, 1
      %p135 = por %p133, %p134
      %p137 = scmp.ne.s32.totalorder %s122, %s136
      %p138 = scmp.eq.s32.totalorder %s28, 0
      %p139 = por %p137, %p138
      %s141 = sadd.s32 %s140, 1
      %p144 = scmp.eq.s32.totalorder %s22, 1
      %p145 = scmp.ne.s32.totalorder %s140, %s142
      %p146 = scmp.eq.s32.totalorder %s22, 0
      %p147 = por %p145, %p146
      %p148 = scmp.ne.s32.totalorder %s140, %s142
      %p149 = scmp.eq.s32.totalorder %s27, 1
      %p150 = por %p148, %p149
      %p151 = scmp.ne.s32.totalorder %s142, %s143
      %p152 = scmp.eq.s32.totalorder %s27, 0
      %p153 = por %p151, %p152
      %p154 = scmp.ne.s32.totalorder %s142, %s143
      %p155 = scmp.eq.s32.totalorder %s28, 1
      %p156 = por %p154, %p155
      %p158 = scmp.ne.s32.totalorder %s143, %s157
      %p159 = scmp.eq.s32.totalorder %s28, 0
      %p160 = por %p158, %p159
      %s162 = sadd.s32 %s161, 1
      %p165 = scmp.eq.s32.totalorder %s22, 1
      %p166 = scmp.ne.s32.totalorder %s161, %s163
      %p167 = scmp.eq.s32.totalorder %s22, 0
      %p168 = por %p166, %p167
      %p169 = scmp.ne.s32.totalorder %s161, %s163
      %p170 = scmp.eq.s32.totalorder %s27, 1
      %p171 = por %p169, %p170
      %p172 = scmp.ne.s32.totalorder %s163, %s164
      %p173 = scmp.eq.s32.totalorder %s27, 0
      %p174 = por %p172, %p173
      %p175 = scmp.ne.s32.totalorder %s163, %s164
      %p176 = scmp.eq.s32.totalorder %s28, 1
      %p177 = por %p175, %p176
      %p179 = scmp.ne.s32.totalorder %s164, %s178
      %p180 = scmp.eq.s32.totalorder %s28, 0
      %p181 = por %p179, %p180
      %s183 = sadd.s32 %s182, 1
      %p186 = scmp.eq.s32.totalorder %s22, 1
      %p187 = scmp.ne.s32.totalorder %s182, %s184
      %p188 = scmp.eq.s32.totalorder %s22, 0
      %p189 = por %p187, %p188
      %p190 = scmp.ne.s32.totalorder %s182, %s184
      %p191 = scmp.eq.s32.totalorder %s27, 1
      %p192 = por %p190, %p191
      %p193 = scmp.ne.s32.totalorder %s184, %s185
      %p194 = scmp.eq.s32.totalorder %s27, 0
      %p195 = por %p193, %p194
      %p196 = scmp.ne.s32.totalorder %s184, %s185
      %p197 = scmp.eq.s32.totalorder %s28, 1
      %p198 = por %p196, %p197
      %p200 = scmp.ne.s32.totalorder %s185, %s199
      %p201 = scmp.eq.s32.totalorder %s28, 0
      %p202 = por %p200, %p201
      %s204 = sadd.s32 %s203, 1
      %p207 = scmp.eq.s32.totalorder %s22, 1
      %p208 = scmp.ne.s32.totalorder %s203, %s205
      %p209 = scmp.eq.s32.totalorder %s22, 0
      %p210 = por %p208, %p209
      %p211 = scmp.ne.s32.totalorder %s203, %s205
      %p212 = scmp.eq.s32.totalorder %s27, 1
      %p213 = por %p211, %p212
      %p214 = scmp.ne.s32.totalorder %s205, %s206
      %p215 = scmp.eq.s32.totalorder %s27, 0
      %p216 = por %p214, %p215
      %p217 = scmp.ne.s32.totalorder %s205, %s206
      %p218 = scmp.eq.s32.totalorder %s28, 1
      %p219 = por %p217, %p218
      %p221 = scmp.ne.s32.totalorder %s206, %s220
      %p222 = scmp.eq.s32.totalorder %s28, 0
      %p223 = por %p221, %p222
      %s225 = sadd.s32 %s224, 1
      %p228 = scmp.eq.s32.totalorder %s22, 1
      %p229 = scmp.ne.s32.totalorder %s224, %s226
      %p230 = scmp.eq.s32.totalorder %s22, 0
      %p231 = por %p229, %p230
      %p232 = scmp.ne.s32.totalorder %s224, %s226
      %p233 = scmp.eq.s32.totalorder %s27, 1
      %p234 = por %p232, %p233
      %p235 = scmp.ne.s32.totalorder %s226, %s227
      %p236 = scmp.eq.s32.totalorder %s27, 0
      %p237 = por %p235, %p236
      %p238 = scmp.ne.s32.totalorder %s226, %s227
      %p239 = scmp.eq.s32.totalorder %s28, 1
      %p240 = por %p238, %p239
      %p242 = scmp.ne.s32.totalorder %s227, %s241
      %p243 = scmp.eq.s32.totalorder %s28, 0
      %p244 = por %p242, %p243
      %s246 = sadd.s32 %s245, 1
      %p249 = scmp.eq.s32.totalorder %s22, 1
      %p250 = scmp.ne.s32.totalorder %s245, %s247
      %p251 = scmp.eq.s32.totalorder %s22, 0
      %p252 = por %p250, %p251
      %p253 = scmp.ne.s32.totalorder %s245, %s247
      %p254 = scmp.eq.s32.totalorder %s27, 1
      %p255 = por %p253, %p254
      %p256 = scmp.ne.s32.totalorder %s247, %s248
      %p257 = scmp.eq.s32.totalorder %s27, 0
      %p258 = por %p256, %p257
      %p259 = scmp.ne.s32.totalorder %s247, %s248
      %p260 = scmp.eq.s32.totalorder %s28, 1
      %p261 = por %p259, %p260
      %p263 = scmp.ne.s32.totalorder %s248, %s262
      %p264 = scmp.eq.s32.totalorder %s28, 0
      %p265 = por %p263, %p264
      %s266 = ssub.s32 %s22, %s29
      %p267 = scmp.eq.s32.totalorder %s266, 0
      %s269 = sadd.s32 %s268, 1
      %s270 = scalar_select %p267, %s268, %s269
      %p273 = pneg %p267
      %p274 = scmp.eq.s32.totalorder %s22, 1
      %p275 = por %p273, %p274
      %p276 = scmp.ne.s32.totalorder %s268, %s271
      %p277 = scmp.eq.s32.totalorder %s22, 0
      %p278 = por %p276, %p277
      %p279 = scmp.ne.s32.totalorder %s268, %s271
      %p280 = scmp.eq.s32.totalorder %s27, 1
      %p281 = por %p279, %p280
      %p282 = scmp.ne.s32.totalorder %s271, %s272
      %p283 = scmp.eq.s32.totalorder %s27, 0
      %p284 = por %p282, %p283
      %p285 = scmp.ne.s32.totalorder %s271, %s272
      %p286 = scmp.eq.s32.totalorder %s28, 1
      %p287 = por %p285, %p286
      %p289 = scmp.ne.s32.totalorder %s272, %s288
      %p290 = scmp.eq.s32.totalorder %s28, 0
      %p291 = por %p289, %p290
      %p292 = scmp.le.s32.totalorder 1, %s22
      %p293 = scmp.lt.s32.totalorder %s22, 3
      %p294 = pnand %p292, %p293
      %p295 = pneg %p294
      // Predicated region
      $region9: #{ripnet_forward.1} parent=5 // pred_check
        _
      $region10: #{ripnet_forward.1} parent=5 // pred_check_branch
        %297 = sbr.rel (%p294) target = $region12
      $region11: #{ripnet_forward.1} parent=5 // pred_region
        %s298 = ssub.s32 %s22, 1
        // Predicated region
        $region13: #{ripnet_forward.1} parent=11 // pred_check
          %p299 = pneg %p69
        $region14: #{ripnet_forward.1} parent=11 // pred_check_branch
          %301 = sbr.rel (%p299) target = $region16
        $region15: #{ripnet_forward.1} parent=11 // pred_region
          %303 = vsyncadd [#allocation3], 0
          %s304 = sshll.u32 %s1, 4
          %s305 = int_to_ptr.hbm [resolvable:$true] %s304
          %s306 = sshll.u32 [#allocation2], 4
          %s307 = int_to_ptr.vmem [resolvable:$true] %s306
          %312 = dma.hbm_to_vmem [thread:$0]  %s305, 192, %s307, [#allocation3], 64, 64, 4
        $region16: #{ripnet_forward.1} parent=11 // pred_fallthru
          _
        // Predicated region
        $region17: #{ripnet_forward.1} parent=11 // pred_check
          %p313 = pneg %p90
        $region18: #{ripnet_forward.1} parent=11 // pred_check_branch
          %315 = sbr.rel (%p313) target = $region20
        $region19: #{ripnet_forward.1} parent=11 // pred_region
          _
        $region20: #{ripnet_forward.1} parent=11 // pred_fallthru
          _
        // Predicated region
        $region21: #{ripnet_forward.1} parent=11 // pred_check
          %p316 = pneg %p111
        $region22: #{ripnet_forward.1} parent=11 // pred_check_branch
          %318 = sbr.rel (%p316) target = $region24
        $region23: #{ripnet_forward.1} parent=11 // pred_region
          %320 = vsyncadd [#allocation5], 0
          %s321 = sshll.u32 %s3, 4
          %s322 = int_to_ptr.hbm [resolvable:$true] %s321
          %s323 = sshll.u32 [#allocation4], 4
          %s324 = int_to_ptr.vmem [resolvable:$true] %s323
          %329 = dma.hbm_to_vmem [thread:$0]  %s322, 1344, %s324, [#allocation5], 64, 64, 4
        $region24: #{ripnet_forward.1} parent=11 // pred_fallthru
          _
        // Predicated region
        $region25: #{ripnet_forward.1} parent=11 // pred_check
          %p330 = pneg %p132
        $region26: #{ripnet_forward.1} parent=11 // pred_check_branch
          %332 = sbr.rel (%p330) target = $region28
        $region27: #{ripnet_forward.1} parent=11 // pred_region
          %334 = vsyncadd [#allocation5], 0
          %s335 = sshll.u32 %s4, 4
          %s336 = int_to_ptr.hbm [resolvable:$true] %s335
          %s337 = sshll.u32 [#allocation6], 4
          %s338 = int_to_ptr.vmem [resolvable:$true] %s337
          %343 = dma.hbm_to_vmem [thread:$0]  %s336, 768, %s338, [#allocation5], 64, 64, 4
        $region28: #{ripnet_forward.1} parent=11 // pred_fallthru
          _
        // Predicated region
        $region29: #{ripnet_forward.1} parent=11 // pred_check
          %p344 = pneg %p153
        $region30: #{ripnet_forward.1} parent=11 // pred_check_branch
          %346 = sbr.rel (%p344) target = $region32
        $region31: #{ripnet_forward.1} parent=11 // pred_region
          %348 = vsyncadd [#allocation8], 0
          %s349 = sshll.u32 %s5, 4
          %s350 = int_to_ptr.hbm [resolvable:$true] %s349
          %s351 = sshll.u32 [#allocation7], 4
          %s352 = int_to_ptr.vmem [resolvable:$true] %s351
          %357 = dma.hbm_to_vmem [thread:$0]  %s350, 768, %s352, [#allocation8], 64, 64, 4
        $region32: #{ripnet_forward.1} parent=11 // pred_fallthru
          _
        // Predicated region
        $region33: #{ripnet_forward.1} parent=11 // pred_check
          %p358 = pneg %p174
        $region34: #{ripnet_forward.1} parent=11 // pred_check_branch
          %360 = sbr.rel (%p358) target = $region36
        $region35: #{ripnet_forward.1} parent=11 // pred_region
          %362 = vsyncadd [#allocation8], 0
          %s363 = sshll.u32 %s6, 4
          %s364 = int_to_ptr.hbm [resolvable:$true] %s363
          %s365 = sshll.u32 [#allocation9], 4
          %s366 = int_to_ptr.vmem [resolvable:$true] %s365
          %371 = dma.hbm_to_vmem [thread:$0]  %s364, 1536, %s366, [#allocation8], 64, 64, 4
        $region36: #{ripnet_forward.1} parent=11 // pred_fallthru
          _
        // Predicated region
        $region37: #{ripnet_forward.1} parent=11 // pred_check
          %p372 = pneg %p195
        $region38: #{ripnet_forward.1} parent=11 // pred_check_branch
          %374 = sbr.rel (%p372) target = $region40
        $region39: #{ripnet_forward.1} parent=11 // pred_region
          %376 = vsyncadd [#allocation11], 0
          %s378 = sshll.u32 %s7, 4
          %s379 = int_to_ptr.hbm [resolvable:$true] %s378
          %s380 = sshll.u32 [#allocation10], 4
          %s381 = int_to_ptr.vmem [resolvable:$true] %s380
          %383 = dma.hbm_to_vmem [thread:$0]  %s379, 64, %s381, [#allocation11]
        $region40: #{ripnet_forward.1} parent=11 // pred_fallthru
          _
        // Predicated region
        $region41: #{ripnet_forward.1} parent=11 // pred_check
          %p384 = pneg %p216
        $region42: #{ripnet_forward.1} parent=11 // pred_check_branch
          %386 = sbr.rel (%p384) target = $region44
        $region43: #{ripnet_forward.1} parent=11 // pred_region
          %388 = vsyncadd [#allocation11], 0
          %s389 = sshll.u32 %s8, 4
          %s390 = int_to_ptr.hbm [resolvable:$true] %s389
          %s391 = sshll.u32 [#allocation12], 4
          %s392 = int_to_ptr.vmem [resolvable:$true] %s391
          %397 = dma.hbm_to_vmem [thread:$0]  %s390, 53248, %s392, [#allocation11], 128, 128, 8
        $region44: #{ripnet_forward.1} parent=11 // pred_fallthru
          _
        // Predicated region
        $region45: #{ripnet_forward.1} parent=11 // pred_check
          %p398 = pneg %p237
        $region46: #{ripnet_forward.1} parent=11 // pred_check_branch
          %400 = sbr.rel (%p398) target = $region48
        $region47: #{ripnet_forward.1} parent=11 // pred_region
          %402 = vsyncadd [#allocation14], 0
          %s404 = sshll.u32 %s9, 4
          %s405 = int_to_ptr.hbm [resolvable:$true] %s404
          %s406 = sshll.u32 [#allocation13], 4
          %s407 = int_to_ptr.vmem [resolvable:$true] %s406
          %409 = dma.hbm_to_vmem [thread:$0]  %s405, 256, %s407, [#allocation14]
        $region48: #{ripnet_forward.1} parent=11 // pred_fallthru
          _
        // Predicated region
        $region49: #{ripnet_forward.1} parent=11 // pred_check
          %p410 = pneg %p258
        $region50: #{ripnet_forward.1} parent=11 // pred_check_branch
          %412 = sbr.rel (%p410) target = $region52
        $region51: #{ripnet_forward.1} parent=11 // pred_region
          _
        $region52: #{ripnet_forward.1} parent=11 // pred_fallthru
          _
      $region12: #{ripnet_forward.1} parent=5 // pred_fallthru
        _
      %p413 = scmp.lt.s32.totalorder %s22, 2
      // Predicated region
      $region53: #{ripnet_forward.1} parent=5 // pred_check
        %p414 = pneg %p413
      $region54: #{ripnet_forward.1} parent=5 // pred_check_branch
        %416 = sbr.rel (%p414) target = $region56
      $region55: #{ripnet_forward.1} parent=5 // pred_region
        // Predicated region
        $region57: #{ripnet_forward.1} parent=55 // pred_check
          %p417 = pneg %p42
        $region58: #{ripnet_forward.1} parent=55 // pred_check_branch
          %419 = sbr.rel (%p417) target = $region60
        $region59: #{ripnet_forward.1} parent=55 // pred_region
          %p420 = scmp.lt.s32.totalorder %s22, 1
          %s421 = scalar_select %p420, %s22, 1
          %s422 = smul.addr %s421, 13
          %s423 = smul.addr %s422, 4
          %s424 = scalar_lea.vmem %s0, %s423
        $region60: #{ripnet_forward.1} parent=55 // pred_fallthru
          _
      $region56: #{ripnet_forward.1} parent=5 // pred_fallthru
        _
      %p425 = scmp.le.s32.totalorder 1, %s22
      %p426 = scmp.lt.s32.totalorder %s22, 3
      %p427 = pnand %p425, %p426
      %p428 = pneg %p427
      // Predicated region
      $region61: #{ripnet_forward.1} parent=5 // pred_check
        _
      $region62: #{ripnet_forward.1} parent=5 // pred_check_branch
        %430 = sbr.rel (%p427) target = $region64
      $region63: #{ripnet_forward.1} parent=5 // pred_region
        %s431 = ssub.s32 %s22, 1
        // Predicated region
        $region65: #{ripnet_forward.1} parent=63 // pred_check
          %p432 = pneg %p69
        $region66: #{ripnet_forward.1} parent=63 // pred_check_branch
          %434 = sbr.rel (%p432) target = $region68
        $region67: #{ripnet_forward.1} parent=63 // pred_region
          %436 = dma.done [#allocation3], 192
        $region68: #{ripnet_forward.1} parent=63 // pred_fallthru
          _
        // Predicated region
        $region69: #{ripnet_forward.1} parent=63 // pred_check
          %p437 = pneg %p111
        $region70: #{ripnet_forward.1} parent=63 // pred_check_branch
          %439 = sbr.rel (%p437) target = $region72
        $region71: #{ripnet_forward.1} parent=63 // pred_region
          %441 = dma.done [#allocation5], 1344
        $region72: #{ripnet_forward.1} parent=63 // pred_fallthru
          _
        // Predicated region
        $region73: #{ripnet_forward.1} parent=63 // pred_check
          %p442 = pneg %p132
        $region74: #{ripnet_forward.1} parent=63 // pred_check_branch
          %444 = sbr.rel (%p442) target = $region76
        $region75: #{ripnet_forward.1} parent=63 // pred_region
          %446 = dma.done [#allocation5], 768
        $region76: #{ripnet_forward.1} parent=63 // pred_fallthru
          _
        // Predicated region
        $region77: #{ripnet_forward.1} parent=63 // pred_check
          %p447 = pneg %p153
        $region78: #{ripnet_forward.1} parent=63 // pred_check_branch
          %449 = sbr.rel (%p447) target = $region80
        $region79: #{ripnet_forward.1} parent=63 // pred_region
          %451 = dma.done [#allocation8], 768
        $region80: #{ripnet_forward.1} parent=63 // pred_fallthru
          _
        // Predicated region
        $region81: #{ripnet_forward.1} parent=63 // pred_check
          %p452 = pneg %p174
        $region82: #{ripnet_forward.1} parent=63 // pred_check_branch
          %454 = sbr.rel (%p452) target = $region84
        $region83: #{ripnet_forward.1} parent=63 // pred_region
          %456 = dma.done [#allocation8], 1536
        $region84: #{ripnet_forward.1} parent=63 // pred_fallthru
          _
        // Predicated region
        $region85: #{ripnet_forward.1} parent=63 // pred_check
          %p457 = pneg %p195
        $region86: #{ripnet_forward.1} parent=63 // pred_check_branch
          %459 = sbr.rel (%p457) target = $region88
        $region87: #{ripnet_forward.1} parent=63 // pred_region
          %461 = dma.done [#allocation11], 64
        $region88: #{ripnet_forward.1} parent=63 // pred_fallthru
          _
        // Predicated region
        $region89: #{ripnet_forward.1} parent=63 // pred_check
          %p462 = pneg %p216
        $region90: #{ripnet_forward.1} parent=63 // pred_check_branch
          %464 = sbr.rel (%p462) target = $region92
        $region91: #{ripnet_forward.1} parent=63 // pred_region
          %466 = dma.done [#allocation11], 53248
        $region92: #{ripnet_forward.1} parent=63 // pred_fallthru
          _
        // Predicated region
        $region93: #{ripnet_forward.1} parent=63 // pred_check
          %p467 = pneg %p237
        $region94: #{ripnet_forward.1} parent=63 // pred_check_branch
          %469 = sbr.rel (%p467) target = $region96
        $region95: #{ripnet_forward.1} parent=63 // pred_region
          %471 = dma.done [#allocation14], 256
        $region96: #{ripnet_forward.1} parent=63 // pred_fallthru
          _
        %p472 = scmp.lt.s32.totalorder %s27, 1
        %s473 = scalar_select %p472, %s27, 1
        %s474 = smul.addr %s473, 13
        %s475 = smul.addr %s474, 4
        %s476 = scalar_lea.vmem %s0, %s475
        %p477 = pneg %p48
        %p478 = pneg %p45
        %p479 = pneg %p69
        %p480 = pneg %p66
        %p481 = pneg %p90
        %p482 = pneg %p87
        %p483 = pneg %p111
        %p484 = pneg %p108
        %p485 = pneg %p132
        %p486 = pneg %p129
        %p487 = pneg %p153
        %p488 = pneg %p150
        %p489 = pneg %p174
        %p490 = pneg %p171
        %p491 = pneg %p195
        %p492 = pneg %p192
        %p493 = pneg %p216
        %p494 = pneg %p213
        %p495 = pneg %p237
        %p496 = pneg %p234
        %p497 = pneg %p258
        %p498 = pneg %p255
        %p499 = pneg %p284
        %p500 = pneg %p281
        %p501 = scmp.lt.s32.totalorder %s27, 1
        %s502 = scalar_select %p501, %s27, 1
        %s503 = smul.addr %s502, 4
        %s504 = scalar_lea.vmem %s11, %s503
        %p505 = scmp.lt.s32.totalorder %s27, 1
        %s506 = scalar_select %p505, %s27, 1
        %s507 = smul.addr %s506, 13
        %s508 = smul.addr %s507, 4
        %s509 = scalar_lea.vmem %s0, %s508
        %p510 = scmp.lt.s32.totalorder %s27, 1
        %s511 = scalar_select %p510, %s27, 1
        %s512 = smul.addr %s511, 4
        %s513 = scalar_lea.vmem %s11, %s512
        %v515 = vld [vmem:[%s509] sm:$0xf]
        %v516 = vld [vmem:[%s509 + $0x4] sm:$0xf]
        %v517 = vld [vmem:[%s509 + $0x8] sm:$0xf]
        %v518 = vld [vmem:[%s509 + $0xc] sm:$0xf]
        %v519 = vld [vmem:[%s509 + $0x10] sm:$0xf]
        %v520 = vld [vmem:[%s509 + $0x14] sm:$0xf]
        %v521 = vld [vmem:[%s509 + $0x18] sm:$0xf]
        %v522 = vld [vmem:[%s509 + $0x1c] sm:$0xf]
        %v523 = vld [vmem:[%s509 + $0x20] sm:$0xf]
        %v524 = vld [vmem:[%s509 + $0x24] sm:$0xf]
        %v525 = vld [vmem:[%s509 + $0x28] sm:$0xf]
        %v526 = vld [vmem:[%s509 + $0x2c] sm:$0xf]
        %v527 = vld [vmem:[%s509 + $0x30] sm:$0xf]
        %v528 = vld [vmem:[#allocation2] sm:$0xf]
        %v529 = vld [vmem:[#allocation2 + $0x4] sm:$0xf]
        %v530 = vld [vmem:[#allocation2 + $0x8] sm:$0xf]
        %v531 = vld [vmem:[#allocation10] sm:$0x1]
        %v532 = vperm.slane %v531, 0
        %v546 = vunpack.c.l.b16 %v515
        %v547 = vunpack.c.l.b16 %v516
        %v548 = vunpack.c.l.b16 %v517
        %v549 = vunpack.c.l.b16 %v518
        %v550 = vunpack.c.l.b16 %v519
        %v551 = vunpack.c.l.b16 %v520
        %v552 = vunpack.c.l.b16 %v521
        %v553 = vunpack.c.l.b16 %v522
        %v554 = vunpack.c.l.b16 %v523
        %v555 = vunpack.c.l.b16 %v524
        %v556 = vunpack.c.l.b16 %v525
        %v557 = vunpack.c.l.b16 %v526
        %v558 = vunpack.c.l.b16 %v527
        %v559 = vpack.c.b16 %v547, %v546
        %v560 = vpack.c.b16 %v549, %v548
        %v561 = vpack.c.b16 %v551, %v550
        %v562 = vpack.c.b16 %v553, %v552
        %v563 = vpack.c.b16 %v555, %v554
        %v564 = vpack.c.b16 %v557, %v556
        %v565 = vpack.c.b16 %v558, %v558
        %v569 = vunpack.c.l.b16 %v528
        %v570 = vunpack.c.l.b16 %v529
        %v571 = vunpack.c.l.b16 %v530
        %v572 = vpack.c.b16 %v570, %v569
        %v573 = vpack.c.b16 %v571, %v571
        %vm575 = vcmask 195584
        %v577 = vsel %vm575, %v559, 0
        %v580 = vsel %vm575, %v560, 0
        %v583 = vsel %vm575, %v561, 0
        %v586 = vsel %vm575, %v562, 0
        %v589 = vsel %vm575, %v563, 0
        %v592 = vsel %vm575, %v564, 0
        %v595 = vsel %vm575, %v565, 0
        %vm597 = vcmask 1043456
        %v599 = vsel %vm597, %v573, 0
        %601 = vmatpush.bf16.msra.mxu0 0
        %602 = vmatpush.bf16.msra.mxu0 0
        %603 = vmatpush.bf16.msra.mxu0 0
        %604 = vmatpush.bf16.msra.mxu0 0
        %605 = vmatpush.bf16.msra.mxu0 0
        %606 = vmatpush.bf16.msra.mxu0 0
        %607 = vmatpush.bf16.msra.mxu0 %v599
        %608 = vmatpush.bf16.msra.mxu0 %v572
        %609 = vmatmul.bf16.gmra.mxu0 %v577
        %v610 = vpop.f32.mrf.mxu0
        %v611 = vadd.f32 %v532, %v610
        %v612 = vpop.f32.mrf.mxu0
        %v613 = vadd.f32 %v532, %v612
        %614 = vmatmul.bf16.gmra.mxu0 %v580
        %v615 = vpop.f32.mrf.mxu0
        %v616 = vadd.f32 %v532, %v615
        %v617 = vpop.f32.mrf.mxu0
        %v618 = vadd.f32 %v532, %v617
        %619 = vmatmul.bf16.gmra.mxu0 %v583
        %v620 = vpop.f32.mrf.mxu0
        %v621 = vadd.f32 %v532, %v620
        %v622 = vpop.f32.mrf.mxu0
        %v623 = vadd.f32 %v532, %v622
        %624 = vmatmul.bf16.gmra.mxu0 %v586
        %v625 = vpop.f32.mrf.mxu0
        %v626 = vadd.f32 %v532, %v625
        %v627 = vpop.f32.mrf.mxu0
        %v628 = vadd.f32 %v532, %v627
        %629 = vmatmul.bf16.gmra.mxu0 %v589
        %v630 = vpop.f32.mrf.mxu0
        %v631 = vadd.f32 %v532, %v630
        %v632 = vpop.f32.mrf.mxu0
        %v633 = vadd.f32 %v532, %v632
        %634 = vmatmul.bf16.gmra.mxu0 %v592
        %v635 = vpop.f32.mrf.mxu0
        %v636 = vadd.f32 %v532, %v635
        %v637 = vpop.f32.mrf.mxu0
        %v638 = vadd.f32 %v532, %v637
        %639 = vmatmul.bf16.gmra.mxu0 %v595
        %v640 = vpop.f32.mrf.mxu0
        %v641 = vadd.f32 %v532, %v640
        %v642 = vpop.f32.mrf.mxu0
        %643 = vdwg.mxu0
        %v644 = vmax.f32 %v611, 0.0
        %v645 = vmax.f32 %v613, 0.0
        %v646 = vmax.f32 %v616, 0.0
        %v647 = vmax.f32 %v618, 0.0
        %v648 = vmax.f32 %v621, 0.0
        %v649 = vmax.f32 %v623, 0.0
        %v650 = vmax.f32 %v626, 0.0
        %v651 = vmax.f32 %v628, 0.0
        %v652 = vmax.f32 %v631, 0.0
        %v653 = vmax.f32 %v633, 0.0
        %v654 = vmax.f32 %v636, 0.0
        %v655 = vmax.f32 %v638, 0.0
        %v656 = vmax.f32 %v641, 0.0
        %v657 = vpack.c.bf16 %v645, %v644
        %v658 = vpack.c.bf16 %v647, %v646
        %v659 = vpack.c.bf16 %v649, %v648
        %v660 = vpack.c.bf16 %v651, %v650
        %v661 = vpack.c.bf16 %v653, %v652
        %v662 = vpack.c.bf16 %v655, %v654
        %v663 = vpack.c.bf16 %v656, %v656
        %v664 = vld [vmem:[%s2] sm:$0xf]
        %v665 = vld [vmem:[%s2 + $0x4] sm:$0xf]
        %v666 = vld [vmem:[%s2 + $0x8] sm:$0xf]
        %v667 = vld [vmem:[%s2 + $0xc] sm:$0xf]
        %v668 = vld [vmem:[%s2 + $0x10] sm:$0xf]
        %v669 = vld [vmem:[%s2 + $0x14] sm:$0xf]
        %v670 = vld [vmem:[%s2 + $0x18] sm:$0xf]
        %v671 = vld [vmem:[%s2 + $0x1c] sm:$0xf]
        %v672 = vld [vmem:[%s2 + $0x20] sm:$0xf]
        %v673 = vld [vmem:[%s2 + $0x24] sm:$0xf]
        %v674 = vld [vmem:[%s2 + $0x28] sm:$0xf]
        %v675 = vld [vmem:[%s2 + $0x2c] sm:$0xf]
        %v676 = vld [vmem:[%s2 + $0x30] sm:$0xf]
        %v677 = vld [vmem:[%s2 + $0x34] sm:$0xf]
        %v678 = vld [vmem:[%s2 + $0x38] sm:$0xf]
        %v679 = vld [vmem:[%s2 + $0x3c] sm:$0xf]
        %v680 = vld [vmem:[#allocation10 + $0x1] sm:$0x1]
        %v681 = vperm.slane %v680, 0
        %v698 = vunpack.c.l.b16 %v664
        %v699 = vunpack.c.l.b16 %v665
        %v700 = vunpack.c.l.b16 %v666
        %v701 = vunpack.c.l.b16 %v667
        %v702 = vunpack.c.l.b16 %v668
        %v703 = vunpack.c.l.b16 %v669
        %v704 = vunpack.c.l.b16 %v670
        %v705 = vunpack.c.l.b16 %v671
        %v706 = vunpack.c.l.b16 %v672
        %v707 = vunpack.c.l.b16 %v673
        %v708 = vunpack.c.l.b16 %v674
        %v709 = vunpack.c.l.b16 %v675
        %v710 = vunpack.c.l.b16 %v676
        %v711 = vunpack.c.l.b16 %v677
        %v712 = vunpack.c.l.b16 %v678
        %v713 = vunpack.c.l.b16 %v679
        %v714 = vpack.c.b16 %v699, %v698
        %v715 = vpack.c.b16 %v701, %v700
        %v716 = vpack.c.b16 %v703, %v702
        %v717 = vpack.c.b16 %v705, %v704
        %v718 = vpack.c.b16 %v707, %v706
        %v719 = vpack.c.b16 %v709, %v708
        %v720 = vpack.c.b16 %v711, %v710
        %v721 = vpack.c.b16 %v713, %v712
        %730 = vmatpush.bf16.msra.mxu0 %v721
        %731 = vmatpush.bf16.msra.mxu0 %v720
        %732 = vmatpush.bf16.msra.mxu0 %v719
        %733 = vmatpush.bf16.msra.mxu0 %v718
        %734 = vmatpush.bf16.msra.mxu0 %v717
        %735 = vmatpush.bf16.msra.mxu0 %v716
        %736 = vmatpush.bf16.msra.mxu0 %v715
        %737 = vmatpush.bf16.msra.mxu0 %v714
        %738 = vmatmul.bf16.gmra.mxu0 %v657
        %v739 = vpop.f32.mrf.mxu0
        %v740 = vadd.f32 %v681, %v739
        %v741 = vpop.f32.mrf.mxu0
        %v742 = vadd.f32 %v681, %v741
        %743 = vmatmul.bf16.gmra.mxu0 %v658
        %v744 = vpop.f32.mrf.mxu0
        %v745 = vadd.f32 %v681, %v744
        %v746 = vpop.f32.mrf.mxu0
        %v747 = vadd.f32 %v681, %v746
        %748 = vmatmul.bf16.gmra.mxu0 %v659
        %v749 = vpop.f32.mrf.mxu0
        %v750 = vadd.f32 %v681, %v749
        %v751 = vpop.f32.mrf.mxu0
        %v752 = vadd.f32 %v681, %v751
        %753 = vmatmul.bf16.gmra.mxu0 %v660
        %v754 = vpop.f32.mrf.mxu0
        %v755 = vadd.f32 %v681, %v754
        %v756 = vpop.f32.mrf.mxu0
        %v757 = vadd.f32 %v681, %v756
        %758 = vmatmul.bf16.gmra.mxu0 %v661
        %v759 = vpop.f32.mrf.mxu0
        %v760 = vadd.f32 %v681, %v759
        %v761 = vpop.f32.mrf.mxu0
        %v762 = vadd.f32 %v681, %v761
        %763 = vmatmul.bf16.gmra.mxu0 %v662
        %v764 = vpop.f32.mrf.mxu0
        %v765 = vadd.f32 %v681, %v764
        %v766 = vpop.f32.mrf.mxu0
        %v767 = vadd.f32 %v681, %v766
        %768 = vmatmul.bf16.gmra.mxu0 %v663
        %v769 = vpop.f32.mrf.mxu0
        %v770 = vadd.f32 %v681, %v769
        %v771 = vpop.f32.mrf.mxu0
        %772 = vdwg.mxu0
        %v773 = vmax.f32 %v740, 0.0
        %v774 = vmax.f32 %v742, 0.0
        %v775 = vmax.f32 %v745, 0.0
        %v776 = vmax.f32 %v747, 0.0
        %v777 = vmax.f32 %v750, 0.0
        %v778 = vmax.f32 %v752, 0.0
        %v779 = vmax.f32 %v755, 0.0
        %v780 = vmax.f32 %v757, 0.0
        %v781 = vmax.f32 %v760, 0.0
        %v782 = vmax.f32 %v762, 0.0
        %v783 = vmax.f32 %v765, 0.0
        %v784 = vmax.f32 %v767, 0.0
        %v785 = vmax.f32 %v770, 0.0
        %v786 = vpack.c.bf16 %v774, %v773
        %v787 = vpack.c.bf16 %v776, %v775
        %v788 = vpack.c.bf16 %v778, %v777
        %v789 = vpack.c.bf16 %v780, %v779
        %v790 = vpack.c.bf16 %v782, %v781
        %v791 = vpack.c.bf16 %v784, %v783
        %v792 = vpack.c.bf16 %v785, %v785
        %v793 = vld [vmem:[#allocation4] sm:$0xf]
        %v794 = vld [vmem:[#allocation4 + $0x4] sm:$0xf]
        %v795 = vld [vmem:[#allocation4 + $0x8] sm:$0xf]
        %v796 = vld [vmem:[#allocation4 + $0xc] sm:$0xf]
        %v797 = vld [vmem:[#allocation4 + $0x10] sm:$0xf]
        %v798 = vld [vmem:[#allocation4 + $0x14] sm:$0xf]
        %v799 = vld [vmem:[#allocation4 + $0x18] sm:$0x3]
        %v807 = vunpack.c.l.b16 %v793
        %v808 = vunpack.c.l.b16 %v794
        %v809 = vunpack.c.l.b16 %v795
        %v810 = vunpack.c.l.b16 %v796
        %v811 = vunpack.c.l.b16 %v797
        %v812 = vunpack.c.l.b16 %v798
        %v813 = vunpack.c.l.b16 %v799
        %v814 = vpack.c.b16 %v808, %v807
        %v815 = vpack.c.b16 %v810, %v809
        %v816 = vpack.c.b16 %v812, %v811
        %v817 = vpack.c.b16 %v813, %v813
        %vm818 = vcmask 850944
        %v820 = vsel %vm818, %v814, 0
        %v823 = vsel %vm818, %v815, 0
        %v826 = vsel %vm818, %v816, 0
        %v829 = vsel %vm818, %v817, 0
        %v832 = vsel %vm597, %v792, 0
        %834 = vmatpush.bf16.msra.mxu0 0
        %835 = vmatpush.bf16.msra.mxu0 %v832
        %836 = vmatpush.bf16.msra.mxu0 %v791
        %837 = vmatpush.bf16.msra.mxu0 %v790
        %838 = vmatpush.bf16.msra.mxu0 %v789
        %839 = vmatpush.bf16.msra.mxu0 %v788
        %840 = vmatpush.bf16.msra.mxu0 %v787
        %841 = vmatpush.bf16.msra.mxu0 %v786
        %842 = vmatmul.bf16.gmra.mxu0 %v820
        %v843 = vpop.f32.mrf.mxu0
        %v844 = vadd.f32 0.0, %v843
        %v845 = vpop.f32.mrf.mxu0
        %v846 = vadd.f32 0.0, %v845
        %847 = vmatmul.bf16.gmra.mxu0 %v823
        %v848 = vpop.f32.mrf.mxu0
        %v849 = vadd.f32 0.0, %v848
        %v850 = vpop.f32.mrf.mxu0
        %v851 = vadd.f32 0.0, %v850
        %852 = vmatmul.bf16.gmra.mxu0 %v826
        %v853 = vpop.f32.mrf.mxu0
        %v854 = vadd.f32 0.0, %v853
        %v855 = vpop.f32.mrf.mxu0
        %v856 = vadd.f32 0.0, %v855
        %857 = vmatmul.bf16.gmra.mxu0 %v829
        %v858 = vpop.f32.mrf.mxu0
        %v859 = vadd.f32 0.0, %v858
        %v860 = vpop.f32.mrf.mxu0
        %861 = vdwg.mxu0
        %v862 = vpack.c.bf16 %v846, %v844
        %v863 = vpack.c.bf16 %v851, %v849
        %v864 = vpack.c.bf16 %v856, %v854
        %v865 = vpack.c.bf16 %v859, %v859
        %v866 = vld [vmem:[#allocation6] sm:$0xf]
        %v867 = vld [vmem:[#allocation6 + $0x4] sm:$0xf]
        %v868 = vld [vmem:[#allocation6 + $0x8] sm:$0xf]
        %v869 = vld [vmem:[#allocation6 + $0xc] sm:$0xf]
        %s870 = scalar_lea.vmem [#allocation4], 28
        %v871 = vld [vmem:[%s870] sm:$0xf]
        %v872 = vld [vmem:[%s870 + $0x4] sm:$0xf]
        %v873 = vld [vmem:[%s870 + $0x8] sm:$0xf]
        %v874 = vld [vmem:[%s870 + $0xc] sm:$0xf]
        %v875 = vld [vmem:[%s870 + $0x10] sm:$0xf]
        %v876 = vld [vmem:[%s870 + $0x14] sm:$0xf]
        %v877 = vld [vmem:[%s870 + $0x18] sm:$0x3]
        %v885 = vunpack.c.l.b16 %v871
        %v886 = vunpack.c.l.b16 %v872
        %v887 = vunpack.c.l.b16 %v873
        %v888 = vunpack.c.l.b16 %v874
        %v889 = vunpack.c.l.b16 %v875
        %v890 = vunpack.c.l.b16 %v876
        %v891 = vunpack.c.l.b16 %v877
        %v892 = vpack.c.b16 %v886, %v885
        %v893 = vpack.c.b16 %v888, %v887
        %v894 = vpack.c.b16 %v890, %v889
        %v895 = vpack.c.b16 %v891, %v891
        %v897 = vsel %vm818, %v892, 0
        %v900 = vsel %vm818, %v893, 0
        %v903 = vsel %vm818, %v894, 0
        %v906 = vsel %vm818, %v895, 0
        %908 = vmatpush.bf16.msra.mxu0 0
        %909 = vmatpush.bf16.msra.mxu0 %v832
        %910 = vmatpush.bf16.msra.mxu0 %v791
        %911 = vmatpush.bf16.msra.mxu0 %v790
        %912 = vmatpush.bf16.msra.mxu0 %v789
        %913 = vmatpush.bf16.msra.mxu0 %v788
        %914 = vmatpush.bf16.msra.mxu0 %v787
        %915 = vmatpush.bf16.msra.mxu0 %v786
        %916 = vmatmul.bf16.gmra.mxu0 %v897
        %v917 = vpop.f32.mrf.mxu0
        %v918 = vadd.f32 0.0, %v917
        %v919 = vpop.f32.mrf.mxu0
        %v920 = vadd.f32 0.0, %v919
        %921 = vmatmul.bf16.gmra.mxu0 %v900
        %v922 = vpop.f32.mrf.mxu0
        %v923 = vadd.f32 0.0, %v922
        %v924 = vpop.f32.mrf.mxu0
        %v925 = vadd.f32 0.0, %v924
        %926 = vmatmul.bf16.gmra.mxu0 %v903
        %v927 = vpop.f32.mrf.mxu0
        %v928 = vadd.f32 0.0, %v927
        %v929 = vpop.f32.mrf.mxu0
        %v930 = vadd.f32 0.0, %v929
        %931 = vmatmul.bf16.gmra.mxu0 %v906
        %v932 = vpop.f32.mrf.mxu0
        %v933 = vadd.f32 0.0, %v932
        %v934 = vpop.f32.mrf.mxu0
        %935 = vdwg.mxu0
        %v936 = vpack.c.bf16 %v920, %v918
        %v937 = vpack.c.bf16 %v925, %v923
        %v938 = vpack.c.bf16 %v930, %v928
        %v939 = vpack.c.bf16 %v933, %v933
        %s940 = scalar_lea.vmem [#allocation6], 16
        %v941 = vld [vmem:[%s940] sm:$0xf]
        %v942 = vld [vmem:[%s940 + $0x4] sm:$0xf]
        %v943 = vld [vmem:[%s940 + $0x8] sm:$0xf]
        %v944 = vld [vmem:[%s940 + $0xc] sm:$0xf]
        %v949 = vunpack.c.l.b16 %v941
        %v950 = vunpack.c.l.b16 %v942
        %v951 = vunpack.c.l.b16 %v943
        %v952 = vunpack.c.l.b16 %v944
        %v953 = vpack.c.b16 %v950, %v949
        %v954 = vpack.c.b16 %v952, %v951
        %vm957 = vcmask 261120
        %v959 = vsel %vm957, %v936, 0
        %v962 = vsel %vm957, %v937, 0
        %v965 = vsel %vm957, %v938, 0
        %v968 = vsel %vm957, %v939, 0
        %970 = vmatpush.bf16.msra.mxu0 0
        %971 = vmatpush.bf16.msra.mxu0 0
        %972 = vmatpush.bf16.msra.mxu0 0
        %973 = vmatpush.bf16.msra.mxu0 0
        %974 = vmatpush.bf16.msra.mxu0 0
        %975 = vmatpush.bf16.msra.mxu0 0
        %976 = vmatpush.bf16.msra.mxu0 %v954
        %977 = vmatpush.bf16.msra.mxu0 %v953
        %978 = vmatmul.bf16.gmra.mxu0 %v959
        %v979 = vpop.f32.mrf.mxu0
        %v980 = vadd.f32 0.0, %v979
        %v981 = vpop.f32.mrf.mxu0
        %v982 = vadd.f32 0.0, %v981
        %983 = vmatmul.bf16.gmra.mxu0 %v962
        %v984 = vpop.f32.mrf.mxu0
        %v985 = vadd.f32 0.0, %v984
        %v986 = vpop.f32.mrf.mxu0
        %v987 = vadd.f32 0.0, %v986
        %988 = vmatmul.bf16.gmra.mxu0 %v965
        %v989 = vpop.f32.mrf.mxu0
        %v990 = vadd.f32 0.0, %v989
        %v991 = vpop.f32.mrf.mxu0
        %v992 = vadd.f32 0.0, %v991
        %993 = vmatmul.bf16.gmra.mxu0 %v968
        %v994 = vpop.f32.mrf.mxu0
        %v995 = vadd.f32 0.0, %v994
        %v996 = vpop.f32.mrf.mxu0
        %997 = vdwg.mxu0
        %v1002 = vunpack.c.l.b16 %v866
        %v1003 = vunpack.c.l.b16 %v867
        %v1004 = vunpack.c.l.b16 %v868
        %v1005 = vunpack.c.l.b16 %v869
        %v1006 = vpack.c.b16 %v1003, %v1002
        %v1007 = vpack.c.b16 %v1005, %v1004
        %v1011 = vsel %vm957, %v862, 0
        %v1014 = vsel %vm957, %v863, 0
        %v1017 = vsel %vm957, %v864, 0
        %v1020 = vsel %vm957, %v865, 0
        %1022 = vmatpush.bf16.msra.mxu0 0
        %1023 = vmatpush.bf16.msra.mxu0 0
        %1024 = vmatpush.bf16.msra.mxu0 0
        %1025 = vmatpush.bf16.msra.mxu0 0
        %1026 = vmatpush.bf16.msra.mxu0 0
        %1027 = vmatpush.bf16.msra.mxu0 0
        %1028 = vmatpush.bf16.msra.mxu0 %v1007
        %1029 = vmatpush.bf16.msra.mxu0 %v1006
        %1030 = vmatmul.bf16.gmra.mxu0 %v1011
        %v1031 = vpop.f32.mrf.mxu0
        %v1032 = vadd.f32 %v980, %v1031
        %v1033 = vpop.f32.mrf.mxu0
        %v1034 = vadd.f32 %v982, %v1033
        %1035 = vmatmul.bf16.gmra.mxu0 %v1014
        %v1036 = vpop.f32.mrf.mxu0
        %v1037 = vadd.f32 %v985, %v1036
        %v1038 = vpop.f32.mrf.mxu0
        %v1039 = vadd.f32 %v987, %v1038
        %1040 = vmatmul.bf16.gmra.mxu0 %v1017
        %v1041 = vpop.f32.mrf.mxu0
        %v1042 = vadd.f32 %v990, %v1041
        %v1043 = vpop.f32.mrf.mxu0
        %v1044 = vadd.f32 %v992, %v1043
        %1045 = vmatmul.bf16.gmra.mxu0 %v1020
        %v1046 = vpop.f32.mrf.mxu0
        %v1047 = vadd.f32 %v995, %v1046
        %v1048 = vpop.f32.mrf.mxu0
        %1049 = vdwg.mxu0
        %s1050 = scalar_lea.vmem [#allocation4], 56
        %v1051 = vld [vmem:[%s1050] sm:$0xf]
        %v1052 = vld [vmem:[%s1050 + $0x4] sm:$0xf]
        %v1053 = vld [vmem:[%s1050 + $0x8] sm:$0xf]
        %v1054 = vld [vmem:[%s1050 + $0xc] sm:$0xf]
        %v1055 = vld [vmem:[%s1050 + $0x10] sm:$0xf]
        %v1056 = vld [vmem:[%s1050 + $0x14] sm:$0xf]
        %v1057 = vld [vmem:[%s1050 + $0x18] sm:$0x3]
        %v1065 = vunpack.c.l.b16 %v1051
        %v1066 = vunpack.c.l.b16 %v1052
        %v1067 = vunpack.c.l.b16 %v1053
        %v1068 = vunpack.c.l.b16 %v1054
        %v1069 = vunpack.c.l.b16 %v1055
        %v1070 = vunpack.c.l.b16 %v1056
        %v1071 = vunpack.c.l.b16 %v1057
        %v1072 = vpack.c.b16 %v1066, %v1065
        %v1073 = vpack.c.b16 %v1068, %v1067
        %v1074 = vpack.c.b16 %v1070, %v1069
        %v1075 = vpack.c.b16 %v1071, %v1071
        %v1077 = vsel %vm818, %v1072, 0
        %v1080 = vsel %vm818, %v1073, 0
        %v1083 = vsel %vm818, %v1074, 0
        %v1086 = vsel %vm818, %v1075, 0
        %1088 = vmatpush.bf16.msra.mxu0 0
        %1089 = vmatpush.bf16.msra.mxu0 %v832
        %1090 = vmatpush.bf16.msra.mxu0 %v791
        %1091 = vmatpush.bf16.msra.mxu0 %v790
        %1092 = vmatpush.bf16.msra.mxu0 %v789
        %1093 = vmatpush.bf16.msra.mxu0 %v788
        %1094 = vmatpush.bf16.msra.mxu0 %v787
        %1095 = vmatpush.bf16.msra.mxu0 %v786
        %1096 = vmatmul.bf16.gmra.mxu0 %v1077
        %v1097 = vpop.f32.mrf.mxu0
        %v1098 = vadd.f32 0.0, %v1097
        %v1099 = vpop.f32.mrf.mxu0
        %v1100 = vadd.f32 0.0, %v1099
        %1101 = vmatmul.bf16.gmra.mxu0 %v1080
        %v1102 = vpop.f32.mrf.mxu0
        %v1103 = vadd.f32 0.0, %v1102
        %v1104 = vpop.f32.mrf.mxu0
        %v1105 = vadd.f32 0.0, %v1104
        %1106 = vmatmul.bf16.gmra.mxu0 %v1083
        %v1107 = vpop.f32.mrf.mxu0
        %v1108 = vadd.f32 0.0, %v1107
        %v1109 = vpop.f32.mrf.mxu0
        %v1110 = vadd.f32 0.0, %v1109
        %1111 = vmatmul.bf16.gmra.mxu0 %v1086
        %v1112 = vpop.f32.mrf.mxu0
        %v1113 = vadd.f32 0.0, %v1112
        %v1114 = vpop.f32.mrf.mxu0
        %1115 = vdwg.mxu0
        %v1116 = vpack.c.bf16 %v1100, %v1098
        %v1117 = vpack.c.bf16 %v1105, %v1103
        %v1118 = vpack.c.bf16 %v1110, %v1108
        %v1119 = vpack.c.bf16 %v1113, %v1113
        %s1120 = scalar_lea.vmem [#allocation6], 32
        %v1121 = vld [vmem:[%s1120] sm:$0xf]
        %v1122 = vld [vmem:[%s1120 + $0x4] sm:$0xf]
        %v1123 = vld [vmem:[%s1120 + $0x8] sm:$0xf]
        %v1124 = vld [vmem:[%s1120 + $0xc] sm:$0xf]
        %v1129 = vunpack.c.l.b16 %v1121
        %v1130 = vunpack.c.l.b16 %v1122
        %v1131 = vunpack.c.l.b16 %v1123
        %v1132 = vunpack.c.l.b16 %v1124
        %v1133 = vpack.c.b16 %v1130, %v1129
        %v1134 = vpack.c.b16 %v1132, %v1131
        %v1138 = vsel %vm957, %v1116, 0
        %v1141 = vsel %vm957, %v1117, 0
        %v1144 = vsel %vm957, %v1118, 0
        %v1147 = vsel %vm957, %v1119, 0
        %1149 = vmatpush.bf16.msra.mxu0 0
        %1150 = vmatpush.bf16.msra.mxu0 0
        %1151 = vmatpush.bf16.msra.mxu0 0
        %1152 = vmatpush.bf16.msra.mxu0 0
        %1153 = vmatpush.bf16.msra.mxu0 0
        %1154 = vmatpush.bf16.msra.mxu0 0
        %1155 = vmatpush.bf16.msra.mxu0 %v1134
        %1156 = vmatpush.bf16.msra.mxu0 %v1133
        %1157 = vmatmul.bf16.gmra.mxu0 %v1138
        %v1158 = vpop.f32.mrf.mxu0
        %v1159 = vadd.f32 0.0, %v1158
        %v1160 = vpop.f32.mrf.mxu0
        %v1161 = vadd.f32 0.0, %v1160
        %1162 = vmatmul.bf16.gmra.mxu0 %v1141
        %v1163 = vpop.f32.mrf.mxu0
        %v1164 = vadd.f32 0.0, %v1163
        %v1165 = vpop.f32.mrf.mxu0
        %v1166 = vadd.f32 0.0, %v1165
        %1167 = vmatmul.bf16.gmra.mxu0 %v1144
        %v1168 = vpop.f32.mrf.mxu0
        %v1169 = vadd.f32 0.0, %v1168
        %v1170 = vpop.f32.mrf.mxu0
        %v1171 = vadd.f32 0.0, %v1170
        %1172 = vmatmul.bf16.gmra.mxu0 %v1147
        %v1173 = vpop.f32.mrf.mxu0
        %v1174 = vadd.f32 0.0, %v1173
        %v1175 = vpop.f32.mrf.mxu0
        %1176 = vdwg.mxu0
        %v1177 = vadd.f32 %v1032, %v1159
        %v1178 = vadd.f32 %v1034, %v1161
        %v1179 = vadd.f32 %v1037, %v1164
        %v1180 = vadd.f32 %v1039, %v1166
        %v1181 = vadd.f32 %v1042, %v1169
        %v1182 = vadd.f32 %v1044, %v1171
        %v1183 = vadd.f32 %v1047, %v1174
        %v1184 = vld [vmem:[#allocation10 + $0x2] sm:$0x1]
        %v1185 = vperm.slane %v1184, 0
        %v1186 = vadd.f32 %v1177, %v1185
        %v1187 = vadd.f32 %v1178, %v1185
        %v1188 = vadd.f32 %v1179, %v1185
        %v1189 = vadd.f32 %v1180, %v1185
        %v1190 = vadd.f32 %v1181, %v1185
        %v1191 = vadd.f32 %v1182, %v1185
        %v1192 = vadd.f32 %v1183, %v1185
        %v1193 = vmax.f32 %v1186, 0.0
        %v1194 = vmax.f32 %v1187, 0.0
        %v1195 = vmax.f32 %v1188, 0.0
        %v1196 = vmax.f32 %v1189, 0.0
        %v1197 = vmax.f32 %v1190, 0.0
        %v1198 = vmax.f32 %v1191, 0.0
        %v1199 = vmax.f32 %v1192, 0.0
        %v1200 = vpack.c.bf16 %v1194, %v1193
        %v1201 = vpack.c.bf16 %v1196, %v1195
        %v1202 = vpack.c.bf16 %v1198, %v1197
        %v1203 = vpack.c.bf16 %v1199, %v1199
        %v1204 = vld [vmem:[#allocation7] sm:$0xf]
        %v1205 = vld [vmem:[#allocation7 + $0x4] sm:$0xf]
        %v1206 = vld [vmem:[#allocation7 + $0x8] sm:$0xf]
        %v1207 = vld [vmem:[#allocation7 + $0xc] sm:$0x1]
        %v1212 = vunpack.c.l.b16 %v1204
        %v1213 = vunpack.c.l.b16 %v1205
        %v1214 = vunpack.c.l.b16 %v1206
        %v1215 = vunpack.c.l.b16 %v1207
        %v1216 = vpack.c.b16 %v1213, %v1212
        %v1217 = vpack.c.b16 %v1215, %v1214
        %vm1218 = vcmask 424960
        %v1220 = vsel %vm1218, %v1216, 0
        %v1223 = vsel %vm1218, %v1217, 0
        %vm1225 = vcmask 1041408
        %v1227 = vsel %vm1225, %v1203, 0
        %1229 = vmatpush.bf16.msra.mxu0 0
        %1230 = vmatpush.bf16.msra.mxu0 0
        %1231 = vmatpush.bf16.msra.mxu0 0
        %1232 = vmatpush.bf16.msra.mxu0 0
        %1233 = vmatpush.bf16.msra.mxu0 %v1227
        %1234 = vmatpush.bf16.msra.mxu0 %v1202
        %1235 = vmatpush.bf16.msra.mxu0 %v1201
        %1236 = vmatpush.bf16.msra.mxu0 %v1200
        %1237 = vmatmul.bf16.gmra.mxu0 %v1220
        %v1238 = vpop.f32.mrf.mxu0
        %v1239 = vadd.f32 0.0, %v1238
        %v1240 = vpop.f32.mrf.mxu0
        %v1241 = vadd.f32 0.0, %v1240
        %1242 = vmatmul.bf16.gmra.mxu0 %v1223
        %v1243 = vpop.f32.mrf.mxu0
        %v1244 = vadd.f32 0.0, %v1243
        %v1245 = vpop.f32.mrf.mxu0
        %v1246 = vadd.f32 0.0, %v1245
        %1247 = vdwg.mxu0
        %v1248 = vpack.c.bf16 %v1241, %v1239
        %v1249 = vpack.c.bf16 %v1246, %v1244
        %v1250 = vld [vmem:[#allocation9] sm:$0xf]
        %v1251 = vld [vmem:[#allocation9 + $0x4] sm:$0xf]
        %v1252 = vld [vmem:[#allocation9 + $0x8] sm:$0xf]
        %v1253 = vld [vmem:[#allocation9 + $0xc] sm:$0xf]
        %v1254 = vld [vmem:[#allocation9 + $0x10] sm:$0xf]
        %v1255 = vld [vmem:[#allocation9 + $0x14] sm:$0xf]
        %v1256 = vld [vmem:[#allocation9 + $0x18] sm:$0xf]
        %v1257 = vld [vmem:[#allocation9 + $0x1c] sm:$0xf]
        %s1258 = scalar_lea.vmem [#allocation7], 16
        %v1259 = vld [vmem:[%s1258] sm:$0xf]
        %v1260 = vld [vmem:[%s1258 + $0x4] sm:$0xf]
        %v1261 = vld [vmem:[%s1258 + $0x8] sm:$0xf]
        %v1262 = vld [vmem:[%s1258 + $0xc] sm:$0x1]
        %v1267 = vunpack.c.l.b16 %v1259
        %v1268 = vunpack.c.l.b16 %v1260
        %v1269 = vunpack.c.l.b16 %v1261
        %v1270 = vunpack.c.l.b16 %v1262
        %v1271 = vpack.c.b16 %v1268, %v1267
        %v1272 = vpack.c.b16 %v1270, %v1269
        %v1274 = vsel %vm1218, %v1271, 0
        %v1277 = vsel %vm1218, %v1272, 0
        %1279 = vmatpush.bf16.msra.mxu0 0
        %1280 = vmatpush.bf16.msra.mxu0 0
        %1281 = vmatpush.bf16.msra.mxu0 0
        %1282 = vmatpush.bf16.msra.mxu0 0
        %1283 = vmatpush.bf16.msra.mxu0 %v1227
        %1284 = vmatpush.bf16.msra.mxu0 %v1202
        %1285 = vmatpush.bf16.msra.mxu0 %v1201
        %1286 = vmatpush.bf16.msra.mxu0 %v1200
        %1287 = vmatmul.bf16.gmra.mxu0 %v1274
        %v1288 = vpop.f32.mrf.mxu0
        %v1289 = vadd.f32 0.0, %v1288
        %v1290 = vpop.f32.mrf.mxu0
        %v1291 = vadd.f32 0.0, %v1290
        %1292 = vmatmul.bf16.gmra.mxu0 %v1277
        %v1293 = vpop.f32.mrf.mxu0
        %v1294 = vadd.f32 0.0, %v1293
        %v1295 = vpop.f32.mrf.mxu0
        %v1296 = vadd.f32 0.0, %v1295
        %1297 = vdwg.mxu0
        %v1298 = vpack.c.bf16 %v1291, %v1289
        %v1299 = vpack.c.bf16 %v1296, %v1294
        %s1300 = scalar_lea.vmem [#allocation9], 32
        %v1301 = vld [vmem:[%s1300] sm:$0xf]
        %v1302 = vld [vmem:[%s1300 + $0x4] sm:$0xf]
        %v1303 = vld [vmem:[%s1300 + $0x8] sm:$0xf]
        %v1304 = vld [vmem:[%s1300 + $0xc] sm:$0xf]
        %v1305 = vld [vmem:[%s1300 + $0x10] sm:$0xf]
        %v1306 = vld [vmem:[%s1300 + $0x14] sm:$0xf]
        %v1307 = vld [vmem:[%s1300 + $0x18] sm:$0xf]
        %v1308 = vld [vmem:[%s1300 + $0x1c] sm:$0xf]
        %v1317 = vunpack.c.l.b16 %v1301
        %v1318 = vunpack.c.l.b16 %v1302
        %v1319 = vunpack.c.l.b16 %v1303
        %v1320 = vunpack.c.l.b16 %v1304
        %v1321 = vunpack.c.l.b16 %v1305
        %v1322 = vunpack.c.l.b16 %v1306
        %v1323 = vunpack.c.l.b16 %v1307
        %v1324 = vunpack.c.l.b16 %v1308
        %v1325 = vpack.c.b16 %v1318, %v1317
        %v1326 = vpack.c.b16 %v1320, %v1319
        %v1327 = vpack.c.b16 %v1322, %v1321
        %v1328 = vpack.c.b16 %v1324, %v1323
        %vm1333 = vcmask 523264
        %v1335 = vsel %vm1333, %v1298, 0
        %v1338 = vsel %vm1333, %v1299, 0
        %1340 = vmatpush.bf16.msra.mxu0 0
        %1341 = vmatpush.bf16.msra.mxu0 0
        %1342 = vmatpush.bf16.msra.mxu0 0
        %1343 = vmatpush.bf16.msra.mxu0 0
        %1344 = vmatpush.bf16.msra.mxu0 %v1328
        %1345 = vmatpush.bf16.msra.mxu0 %v1327
        %1346 = vmatpush.bf16.msra.mxu0 %v1326
        %1347 = vmatpush.bf16.msra.mxu0 %v1325
        %1348 = vmatmul.bf16.gmra.mxu0 %v1335
        %v1349 = vpop.f32.mrf.mxu0
        %v1350 = vadd.f32 0.0, %v1349
        %v1351 = vpop.f32.mrf.mxu0
        %v1352 = vadd.f32 0.0, %v1351
        %1353 = vmatmul.bf16.gmra.mxu0 %v1338
        %v1354 = vpop.f32.mrf.mxu0
        %v1355 = vadd.f32 0.0, %v1354
        %v1356 = vpop.f32.mrf.mxu0
        %v1357 = vadd.f32 0.0, %v1356
        %1358 = vdwg.mxu0
        %v1367 = vunpack.c.l.b16 %v1250
        %v1368 = vunpack.c.l.b16 %v1251
        %v1369 = vunpack.c.l.b16 %v1252
        %v1370 = vunpack.c.l.b16 %v1253
        %v1371 = vunpack.c.l.b16 %v1254
        %v1372 = vunpack.c.l.b16 %v1255
        %v1373 = vunpack.c.l.b16 %v1256
        %v1374 = vunpack.c.l.b16 %v1257
        %v1375 = vpack.c.b16 %v1368, %v1367
        %v1376 = vpack.c.b16 %v1370, %v1369
        %v1377 = vpack.c.b16 %v1372, %v1371
        %v1378 = vpack.c.b16 %v1374, %v1373
        %v1384 = vsel %vm1333, %v1248, 0
        %v1387 = vsel %vm1333, %v1249, 0
        %1389 = vmatpush.bf16.msra.mxu0 0
        %1390 = vmatpush.bf16.msra.mxu0 0
        %1391 = vmatpush.bf16.msra.mxu0 0
        %1392 = vmatpush.bf16.msra.mxu0 0
        %1393 = vmatpush.bf16.msra.mxu0 %v1378
        %1394 = vmatpush.bf16.msra.mxu0 %v1377
        %1395 = vmatpush.bf16.msra.mxu0 %v1376
        %1396 = vmatpush.bf16.msra.mxu0 %v1375
        %1397 = vmatmul.bf16.gmra.mxu0 %v1384
        %v1398 = vpop.f32.mrf.mxu0
        %v1399 = vadd.f32 %v1350, %v1398
        %v1400 = vpop.f32.mrf.mxu0
        %v1401 = vadd.f32 %v1352, %v1400
        %1402 = vmatmul.bf16.gmra.mxu0 %v1387
        %v1403 = vpop.f32.mrf.mxu0
        %v1404 = vadd.f32 %v1355, %v1403
        %v1405 = vpop.f32.mrf.mxu0
        %v1406 = vadd.f32 %v1357, %v1405
        %1407 = vdwg.mxu0
        %s1408 = scalar_lea.vmem [#allocation7], 32
        %v1409 = vld [vmem:[%s1408] sm:$0xf]
        %v1410 = vld [vmem:[%s1408 + $0x4] sm:$0xf]
        %v1411 = vld [vmem:[%s1408 + $0x8] sm:$0xf]
        %v1412 = vld [vmem:[%s1408 + $0xc] sm:$0x1]
        %v1417 = vunpack.c.l.b16 %v1409
        %v1418 = vunpack.c.l.b16 %v1410
        %v1419 = vunpack.c.l.b16 %v1411
        %v1420 = vunpack.c.l.b16 %v1412
        %v1421 = vpack.c.b16 %v1418, %v1417
        %v1422 = vpack.c.b16 %v1420, %v1419
        %v1424 = vsel %vm1218, %v1421, 0
        %v1427 = vsel %vm1218, %v1422, 0
        %1429 = vmatpush.bf16.msra.mxu0 0
        %1430 = vmatpush.bf16.msra.mxu0 0
        %1431 = vmatpush.bf16.msra.mxu0 0
        %1432 = vmatpush.bf16.msra.mxu0 0
        %1433 = vmatpush.bf16.msra.mxu0 %v1227
        %1434 = vmatpush.bf16.msra.mxu0 %v1202
        %1435 = vmatpush.bf16.msra.mxu0 %v1201
        %1436 = vmatpush.bf16.msra.mxu0 %v1200
        %1437 = vmatmul.bf16.gmra.mxu0 %v1424
        %v1438 = vpop.f32.mrf.mxu0
        %v1439 = vadd.f32 0.0, %v1438
        %v1440 = vpop.f32.mrf.mxu0
        %v1441 = vadd.f32 0.0, %v1440
        %1442 = vmatmul.bf16.gmra.mxu0 %v1427
        %v1443 = vpop.f32.mrf.mxu0
        %v1444 = vadd.f32 0.0, %v1443
        %v1445 = vpop.f32.mrf.mxu0
        %v1446 = vadd.f32 0.0, %v1445
        %1447 = vdwg.mxu0
        %v1448 = vpack.c.bf16 %v1441, %v1439
        %v1449 = vpack.c.bf16 %v1446, %v1444
        %s1450 = scalar_lea.vmem [#allocation9], 64
        %v1451 = vld [vmem:[%s1450] sm:$0xf]
        %v1452 = vld [vmem:[%s1450 + $0x4] sm:$0xf]
        %v1453 = vld [vmem:[%s1450 + $0x8] sm:$0xf]
        %v1454 = vld [vmem:[%s1450 + $0xc] sm:$0xf]
        %v1455 = vld [vmem:[%s1450 + $0x10] sm:$0xf]
        %v1456 = vld [vmem:[%s1450 + $0x14] sm:$0xf]
        %v1457 = vld [vmem:[%s1450 + $0x18] sm:$0xf]
        %v1458 = vld [vmem:[%s1450 + $0x1c] sm:$0xf]
        %v1467 = vunpack.c.l.b16 %v1451
        %v1468 = vunpack.c.l.b16 %v1452
        %v1469 = vunpack.c.l.b16 %v1453
        %v1470 = vunpack.c.l.b16 %v1454
        %v1471 = vunpack.c.l.b16 %v1455
        %v1472 = vunpack.c.l.b16 %v1456
        %v1473 = vunpack.c.l.b16 %v1457
        %v1474 = vunpack.c.l.b16 %v1458
        %v1475 = vpack.c.b16 %v1468, %v1467
        %v1476 = vpack.c.b16 %v1470, %v1469
        %v1477 = vpack.c.b16 %v1472, %v1471
        %v1478 = vpack.c.b16 %v1474, %v1473
        %v1484 = vsel %vm1333, %v1448, 0
        %v1487 = vsel %vm1333, %v1449, 0
        %1489 = vmatpush.bf16.msra.mxu0 0
        %1490 = vmatpush.bf16.msra.mxu0 0
        %1491 = vmatpush.bf16.msra.mxu0 0
        %1492 = vmatpush.bf16.msra.mxu0 0
        %1493 = vmatpush.bf16.msra.mxu0 %v1478
        %1494 = vmatpush.bf16.msra.mxu0 %v1477
        %1495 = vmatpush.bf16.msra.mxu0 %v1476
        %1496 = vmatpush.bf16.msra.mxu0 %v1475
        %1497 = vmatmul.bf16.gmra.mxu0 %v1484
        %v1498 = vpop.f32.mrf.mxu0
        %v1499 = vadd.f32 0.0, %v1498
        %v1500 = vpop.f32.mrf.mxu0
        %v1501 = vadd.f32 0.0, %v1500
        %1502 = vmatmul.bf16.gmra.mxu0 %v1487
        %v1503 = vpop.f32.mrf.mxu0
        %v1504 = vadd.f32 0.0, %v1503
        %v1505 = vpop.f32.mrf.mxu0
        %v1506 = vadd.f32 0.0, %v1505
        %1507 = vdwg.mxu0
        %v1508 = vadd.f32 %v1399, %v1499
        %v1509 = vadd.f32 %v1401, %v1501
        %v1510 = vadd.f32 %v1404, %v1504
        %v1511 = vadd.f32 %v1406, %v1506
        %v1512 = vld [vmem:[#allocation10 + $0x3] sm:$0x1]
        %v1513 = vperm.slane %v1512, 0
        %v1514 = vadd.f32 %v1508, %v1513
        %v1515 = vadd.f32 %v1509, %v1513
        %v1516 = vadd.f32 %v1510, %v1513
        %v1517 = vadd.f32 %v1511, %v1513
        %v1518 = vmax.f32 %v1514, 0.0
        %v1519 = vmax.f32 %v1515, 0.0
        %v1520 = vmax.f32 %v1516, 0.0
        %v1521 = vmax.f32 %v1517, 0.0
        %v1522 = vpack.c.bf16 %v1518, %v1518
        %v1523 = vpack.c.bf16 %v1519, %v1519
        %v1524 = vpack.c.bf16 %v1520, %v1520
        %v1525 = vpack.c.bf16 %v1521, %v1521
        %v1527 = vunpack.c.l.b16 %v1522
        %v1528 = vpack.c.b16 %v1527, %v1527
        %v1530 = vshrl.u32 %v1528, 16
        %v1533 = vrot.slane %v1528, 1
        %v1535 = vrot.slane %v1530, 1
        %v1537 = vrot.slane %v1528, 2
        %v1539 = vrot.slane %v1530, 2
        %v1541 = vrot.slane %v1528, 3
        %v1543 = vrot.slane %v1530, 3
        %v1546 = vunpack.c.l.b16 %v1523
        %v1547 = vpack.c.b16 %v1546, %v1546
        %v1549 = vshrl.u32 %v1547, 16
        %v1552 = vrot.slane %v1547, 1
        %v1554 = vrot.slane %v1549, 1
        %v1556 = vrot.slane %v1547, 2
        %v1558 = vrot.slane %v1549, 2
        %v1560 = vrot.slane %v1547, 3
        %v1562 = vrot.slane %v1549, 3
        %v1565 = vunpack.c.l.b16 %v1524
        %v1566 = vpack.c.b16 %v1565, %v1565
        %v1568 = vshrl.u32 %v1566, 16
        %v1571 = vrot.slane %v1566, 1
        %v1573 = vrot.slane %v1568, 1
        %v1575 = vrot.slane %v1566, 2
        %v1577 = vrot.slane %v1568, 2
        %v1579 = vrot.slane %v1566, 3
        %v1581 = vrot.slane %v1568, 3
        %v1584 = vunpack.c.l.b16 %v1525
        %v1585 = vpack.c.b16 %v1584, %v1584
        %v1587 = vshrl.u32 %v1585, 16
        %v1590 = vld [vmem:[#allocation12] sm:$0xff]
        %v1591 = vld [vmem:[#allocation12 + $0x8] sm:$0xff]
        %v1592 = vld [vmem:[#allocation12 + $0x10] sm:$0xff]
        %v1593 = vld [vmem:[#allocation12 + $0x18] sm:$0xff]
        %v1594 = vld [vmem:[#allocation12 + $0x20] sm:$0xff]
        %v1595 = vld [vmem:[#allocation12 + $0x28] sm:$0xff]
        %v1596 = vld [vmem:[#allocation12 + $0x30] sm:$0xff]
        %v1597 = vld [vmem:[#allocation12 + $0x38] sm:$0xff]
        %v1598 = vld [vmem:[#allocation12 + $0x40] sm:$0xff]
        %v1599 = vld [vmem:[#allocation12 + $0x48] sm:$0xff]
        %v1600 = vld [vmem:[#allocation12 + $0x50] sm:$0xff]
        %v1601 = vld [vmem:[#allocation12 + $0x58] sm:$0xff]
        %v1602 = vld [vmem:[#allocation12 + $0x60] sm:$0xff]
        %v1603 = vld [vmem:[#allocation12 + $0x68] sm:$0xff]
        %v1604 = vld [vmem:[#allocation12 + $0x70] sm:$0xff]
        %v1605 = vld [vmem:[#allocation12 + $0x78] sm:$0xff]
        %v1606 = vld [vmem:[#allocation12 + $0x80] sm:$0xff]
        %v1607 = vld [vmem:[#allocation12 + $0x88] sm:$0xff]
        %v1608 = vld [vmem:[#allocation12 + $0x90] sm:$0xff]
        %v1609 = vld [vmem:[#allocation12 + $0x98] sm:$0xff]
        %v1610 = vld [vmem:[#allocation12 + $0xa0] sm:$0xff]
        %v1611 = vld [vmem:[#allocation12 + $0xa8] sm:$0xff]
        %v1612 = vld [vmem:[#allocation12 + $0xb0] sm:$0xff]
        %v1613 = vld [vmem:[#allocation12 + $0xb8] sm:$0xff]
        %v1614 = vld [vmem:[#allocation12 + $0xc0] sm:$0xff]
        %v1615 = vld [vmem:[#allocation12 + $0xc8] sm:$0xff]
        %v1616 = vld [vmem:[#allocation12 + $0xd0] sm:$0xff]
        %v1617 = vld [vmem:[#allocation12 + $0xd8] sm:$0xff]
        %v1618 = vld [vmem:[#allocation12 + $0xe0] sm:$0xff]
        %v1619 = vld [vmem:[#allocation12 + $0xe8] sm:$0xff]
        %v1620 = vld [vmem:[#allocation12 + $0xf0] sm:$0xff]
        %v1621 = vld [vmem:[#allocation12 + $0xf8] sm:$0xff]
        %v1622 = vld [vmem:[#allocation12 + $0x100] sm:$0xff]
        %v1623 = vld [vmem:[#allocation12 + $0x108] sm:$0xff]
        %v1624 = vld [vmem:[#allocation12 + $0x110] sm:$0xff]
        %v1625 = vld [vmem:[#allocation12 + $0x118] sm:$0xff]
        %v1626 = vld [vmem:[#allocation12 + $0x120] sm:$0xff]
        %v1627 = vld [vmem:[#allocation12 + $0x128] sm:$0xff]
        %v1628 = vld [vmem:[#allocation12 + $0x130] sm:$0xff]
        %v1629 = vld [vmem:[#allocation12 + $0x138] sm:$0xff]
        %v1630 = vld [vmem:[#allocation12 + $0x140] sm:$0xff]
        %v1631 = vld [vmem:[#allocation12 + $0x148] sm:$0xff]
        %v1632 = vld [vmem:[#allocation12 + $0x150] sm:$0xff]
        %v1633 = vld [vmem:[#allocation12 + $0x158] sm:$0xff]
        %v1634 = vld [vmem:[#allocation12 + $0x160] sm:$0xff]
        %v1635 = vld [vmem:[#allocation12 + $0x168] sm:$0xff]
        %v1636 = vld [vmem:[#allocation12 + $0x170] sm:$0xff]
        %v1637 = vld [vmem:[#allocation12 + $0x178] sm:$0xff]
        %v1638 = vld [vmem:[#allocation12 + $0x180] sm:$0xff]
        %v1639 = vld [vmem:[#allocation12 + $0x188] sm:$0xff]
        %v1640 = vld [vmem:[#allocation12 + $0x190] sm:$0xff]
        %v1641 = vld [vmem:[#allocation12 + $0x198] sm:$0xff]
        %v1642 = vld [vmem:[#allocation12 + $0x1a0] sm:$0xff]
        %v1643 = vld [vmem:[#allocation12 + $0x1a8] sm:$0xff]
        %v1644 = vld [vmem:[#allocation12 + $0x1b0] sm:$0xff]
        %v1645 = vld [vmem:[#allocation12 + $0x1b8] sm:$0xff]
        %v1646 = vld [vmem:[#allocation12 + $0x1c0] sm:$0xff]
        %v1647 = vld [vmem:[#allocation12 + $0x1c8] sm:$0xff]
        %v1648 = vld [vmem:[#allocation12 + $0x1d0] sm:$0xff]
        %v1649 = vld [vmem:[#allocation12 + $0x1d8] sm:$0xff]
        %v1650 = vld [vmem:[#allocation12 + $0x1e0] sm:$0xff]
        %v1651 = vld [vmem:[#allocation12 + $0x1e8] sm:$0xff]
        %v1652 = vld [vmem:[#allocation12 + $0x1f0] sm:$0xff]
        %v1653 = vld [vmem:[#allocation12 + $0x1f8] sm:$0xff]
        %v1654 = vld [vmem:[#allocation12 + $0x200] sm:$0xff]
        %v1655 = vld [vmem:[#allocation12 + $0x208] sm:$0xff]
        %v1656 = vld [vmem:[#allocation12 + $0x210] sm:$0xff]
        %v1657 = vld [vmem:[#allocation12 + $0x218] sm:$0xff]
        %v1658 = vld [vmem:[#allocation12 + $0x220] sm:$0xff]
        %v1659 = vld [vmem:[#allocation12 + $0x228] sm:$0xff]
        %v1660 = vld [vmem:[#allocation12 + $0x230] sm:$0xff]
        %v1661 = vld [vmem:[#allocation12 + $0x238] sm:$0xff]
        %v1662 = vld [vmem:[#allocation12 + $0x240] sm:$0xff]
        %v1663 = vld [vmem:[#allocation12 + $0x248] sm:$0xff]
        %v1664 = vld [vmem:[#allocation12 + $0x250] sm:$0xff]
        %v1665 = vld [vmem:[#allocation12 + $0x258] sm:$0xff]
        %v1666 = vld [vmem:[#allocation12 + $0x260] sm:$0xff]
        %v1667 = vld [vmem:[#allocation12 + $0x268] sm:$0xff]
        %v1668 = vld [vmem:[#allocation12 + $0x270] sm:$0xff]
        %v1669 = vld [vmem:[#allocation12 + $0x278] sm:$0xff]
        %v1670 = vld [vmem:[#allocation12 + $0x280] sm:$0xff]
        %v1671 = vld [vmem:[#allocation12 + $0x288] sm:$0xff]
        %v1672 = vld [vmem:[#allocation12 + $0x290] sm:$0xff]
        %v1673 = vld [vmem:[#allocation12 + $0x298] sm:$0xff]
        %v1674 = vld [vmem:[#allocation12 + $0x2a0] sm:$0xff]
        %v1675 = vld [vmem:[#allocation12 + $0x2a8] sm:$0xff]
        %v1676 = vld [vmem:[#allocation12 + $0x2b0] sm:$0xff]
        %v1677 = vld [vmem:[#allocation12 + $0x2b8] sm:$0xff]
        %v1678 = vld [vmem:[#allocation12 + $0x2c0] sm:$0xff]
        %v1679 = vld [vmem:[#allocation12 + $0x2c8] sm:$0xff]
        %v1680 = vld [vmem:[#allocation12 + $0x2d0] sm:$0xff]
        %v1681 = vld [vmem:[#allocation12 + $0x2d8] sm:$0xff]
        %v1682 = vld [vmem:[#allocation12 + $0x2e0] sm:$0xff]
        %v1683 = vld [vmem:[#allocation12 + $0x2e8] sm:$0xff]
        %v1684 = vld [vmem:[#allocation12 + $0x2f0] sm:$0xff]
        %v1685 = vld [vmem:[#allocation12 + $0x2f8] sm:$0xff]
        %v1686 = vld [vmem:[#allocation12 + $0x300] sm:$0xff]
        %v1687 = vld [vmem:[#allocation12 + $0x308] sm:$0xff]
        %v1688 = vld [vmem:[#allocation12 + $0x310] sm:$0xff]
        %v1689 = vld [vmem:[#allocation12 + $0x318] sm:$0xff]
        %v1690 = vld [vmem:[#allocation12 + $0x320] sm:$0xff]
        %v1691 = vld [vmem:[#allocation12 + $0x328] sm:$0xff]
        %v1692 = vld [vmem:[#allocation12 + $0x330] sm:$0xff]
        %v1693 = vld [vmem:[#allocation12 + $0x338] sm:$0xff]
        %v1694 = vld [vmem:[#allocation12 + $0x340] sm:$0xff]
        %v1695 = vld [vmem:[#allocation12 + $0x348] sm:$0xff]
        %v1696 = vld [vmem:[#allocation12 + $0x350] sm:$0xff]
        %v1697 = vld [vmem:[#allocation12 + $0x358] sm:$0xff]
        %v1698 = vld [vmem:[#allocation12 + $0x360] sm:$0xff]
        %v1699 = vld [vmem:[#allocation12 + $0x368] sm:$0xff]
        %v1700 = vld [vmem:[#allocation12 + $0x370] sm:$0xff]
        %v1701 = vld [vmem:[#allocation12 + $0x378] sm:$0xff]
        %v1702 = vld [vmem:[#allocation12 + $0x380] sm:$0xff]
        %v1703 = vld [vmem:[#allocation12 + $0x388] sm:$0xff]
        %v1704 = vld [vmem:[#allocation12 + $0x390] sm:$0xff]
        %v1705 = vld [vmem:[#allocation12 + $0x398] sm:$0xff]
        %v1706 = vld [vmem:[#allocation12 + $0x3a0] sm:$0xff]
        %v1707 = vld [vmem:[#allocation12 + $0x3a8] sm:$0xff]
        %v1708 = vld [vmem:[#allocation12 + $0x3b0] sm:$0xff]
        %v1709 = vld [vmem:[#allocation12 + $0x3b8] sm:$0xff]
        %v1710 = vld [vmem:[#allocation12 + $0x3c0] sm:$0xff]
        %v1711 = vld [vmem:[#allocation12 + $0x3c8] sm:$0xff]
        %v1712 = vld [vmem:[#allocation12 + $0x3d0] sm:$0xff]
        %v1713 = vld [vmem:[#allocation12 + $0x3d8] sm:$0xff]
        %v1714 = vld [vmem:[#allocation12 + $0x3e0] sm:$0xff]
        %v1715 = vld [vmem:[#allocation12 + $0x3e8] sm:$0xff]
        %v1716 = vld [vmem:[#allocation12 + $0x3f0] sm:$0xff]
        %v1717 = vld [vmem:[#allocation12 + $0x3f8] sm:$0xff]
        %v1718 = vld [vmem:[#allocation12 + $0x400] sm:$0xff]
        %v1719 = vld [vmem:[#allocation12 + $0x408] sm:$0xff]
        %v1720 = vld [vmem:[#allocation12 + $0x410] sm:$0xff]
        %v1721 = vld [vmem:[#allocation12 + $0x418] sm:$0xff]
        %v1722 = vld [vmem:[#allocation12 + $0x420] sm:$0xff]
        %v1723 = vld [vmem:[#allocation12 + $0x428] sm:$0xff]
        %v1724 = vld [vmem:[#allocation12 + $0x430] sm:$0xff]
        %v1725 = vld [vmem:[#allocation12 + $0x438] sm:$0xff]
        %v1726 = vld [vmem:[#allocation12 + $0x440] sm:$0xff]
        %v1727 = vld [vmem:[#allocation12 + $0x448] sm:$0xff]
        %v1728 = vld [vmem:[#allocation12 + $0x450] sm:$0xff]
        %v1729 = vld [vmem:[#allocation12 + $0x458] sm:$0xff]
        %v1730 = vld [vmem:[#allocation12 + $0x460] sm:$0xff]
        %v1731 = vld [vmem:[#allocation12 + $0x468] sm:$0xff]
        %v1732 = vld [vmem:[#allocation12 + $0x470] sm:$0xff]
        %v1733 = vld [vmem:[#allocation12 + $0x478] sm:$0xff]
        %v1734 = vld [vmem:[#allocation12 + $0x480] sm:$0xff]
        %v1735 = vld [vmem:[#allocation12 + $0x488] sm:$0xff]
        %v1736 = vld [vmem:[#allocation12 + $0x490] sm:$0xff]
        %v1737 = vld [vmem:[#allocation12 + $0x498] sm:$0xff]
        %v1738 = vld [vmem:[#allocation12 + $0x4a0] sm:$0xff]
        %v1739 = vld [vmem:[#allocation12 + $0x4a8] sm:$0xff]
        %v1740 = vld [vmem:[#allocation12 + $0x4b0] sm:$0xff]
        %v1741 = vld [vmem:[#allocation12 + $0x4b8] sm:$0xff]
        %v1742 = vld [vmem:[#allocation12 + $0x4c0] sm:$0xff]
        %v1743 = vld [vmem:[#allocation12 + $0x4c8] sm:$0xff]
        %v1744 = vld [vmem:[#allocation12 + $0x4d0] sm:$0xff]
        %v1745 = vld [vmem:[#allocation12 + $0x4d8] sm:$0xff]
        %v1746 = vld [vmem:[#allocation12 + $0x4e0] sm:$0xff]
        %v1747 = vld [vmem:[#allocation12 + $0x4e8] sm:$0xff]
        %v1748 = vld [vmem:[#allocation12 + $0x4f0] sm:$0xff]
        %v1749 = vld [vmem:[#allocation12 + $0x4f8] sm:$0xff]
        %v1750 = vld [vmem:[#allocation12 + $0x500] sm:$0xff]
        %v1751 = vld [vmem:[#allocation12 + $0x508] sm:$0xff]
        %v1752 = vld [vmem:[#allocation12 + $0x510] sm:$0xff]
        %v1753 = vld [vmem:[#allocation12 + $0x518] sm:$0xff]
        %v1754 = vld [vmem:[#allocation12 + $0x520] sm:$0xff]
        %v1755 = vld [vmem:[#allocation12 + $0x528] sm:$0xff]
        %v1756 = vld [vmem:[#allocation12 + $0x530] sm:$0xff]
        %v1757 = vld [vmem:[#allocation12 + $0x538] sm:$0xff]
        %v1758 = vld [vmem:[#allocation12 + $0x540] sm:$0xff]
        %v1759 = vld [vmem:[#allocation12 + $0x548] sm:$0xff]
        %v1760 = vld [vmem:[#allocation12 + $0x550] sm:$0xff]
        %v1761 = vld [vmem:[#allocation12 + $0x558] sm:$0xff]
        %v1762 = vld [vmem:[#allocation12 + $0x560] sm:$0xff]
        %v1763 = vld [vmem:[#allocation12 + $0x568] sm:$0xff]
        %v1764 = vld [vmem:[#allocation12 + $0x570] sm:$0xff]
        %v1765 = vld [vmem:[#allocation12 + $0x578] sm:$0xff]
        %v1766 = vld [vmem:[#allocation12 + $0x580] sm:$0xff]
        %v1767 = vld [vmem:[#allocation12 + $0x588] sm:$0xff]
        %v1768 = vld [vmem:[#allocation12 + $0x590] sm:$0xff]
        %v1769 = vld [vmem:[#allocation12 + $0x598] sm:$0xff]
        %v1770 = vld [vmem:[#allocation12 + $0x5a0] sm:$0xff]
        %v1771 = vld [vmem:[#allocation12 + $0x5a8] sm:$0xff]
        %v1772 = vld [vmem:[#allocation12 + $0x5b0] sm:$0xff]
        %v1773 = vld [vmem:[#allocation12 + $0x5b8] sm:$0xff]
        %v1774 = vld [vmem:[#allocation12 + $0x5c0] sm:$0xff]
        %v1775 = vld [vmem:[#allocation12 + $0x5c8] sm:$0xff]
        %v1776 = vld [vmem:[#allocation12 + $0x5d0] sm:$0xff]
        %v1777 = vld [vmem:[#allocation12 + $0x5d8] sm:$0xff]
        %v1778 = vld [vmem:[#allocation12 + $0x5e0] sm:$0xff]
        %v1779 = vld [vmem:[#allocation12 + $0x5e8] sm:$0xff]
        %v1780 = vld [vmem:[#allocation12 + $0x5f0] sm:$0xff]
        %v1781 = vld [vmem:[#allocation12 + $0x5f8] sm:$0xff]
        %v1782 = vld [vmem:[#allocation12 + $0x600] sm:$0xff]
        %v1783 = vld [vmem:[#allocation12 + $0x608] sm:$0xff]
        %v1784 = vld [vmem:[#allocation12 + $0x610] sm:$0xff]
        %v1785 = vld [vmem:[#allocation12 + $0x618] sm:$0xff]
        %v1786 = vld [vmem:[#allocation12 + $0x620] sm:$0xff]
        %v1787 = vld [vmem:[#allocation12 + $0x628] sm:$0xff]
        %v1788 = vld [vmem:[#allocation12 + $0x630] sm:$0xff]
        %v1789 = vld [vmem:[#allocation12 + $0x638] sm:$0xff]
        %v1790 = vld [vmem:[#allocation12 + $0x640] sm:$0xff]
        %v1791 = vld [vmem:[#allocation12 + $0x648] sm:$0xff]
        %v1792 = vld [vmem:[#allocation12 + $0x650] sm:$0xff]
        %v1793 = vld [vmem:[#allocation12 + $0x658] sm:$0xff]
        %v1794 = vld [vmem:[#allocation12 + $0x660] sm:$0xff]
        %v1795 = vld [vmem:[#allocation12 + $0x668] sm:$0xff]
        %v1796 = vld [vmem:[#allocation12 + $0x670] sm:$0xff]
        %v1797 = vld [vmem:[#allocation12 + $0x678] sm:$0xff]
        %v1798 = vld [vmem:[#allocation12 + $0x680] sm:$0xff]
        %v1799 = vld [vmem:[#allocation12 + $0x688] sm:$0xff]
        %v1800 = vld [vmem:[#allocation12 + $0x690] sm:$0xff]
        %v1801 = vld [vmem:[#allocation12 + $0x698] sm:$0xff]
        %v1802 = vld [vmem:[#allocation12 + $0x6a0] sm:$0xff]
        %v1803 = vld [vmem:[#allocation12 + $0x6a8] sm:$0xff]
        %v1804 = vld [vmem:[#allocation12 + $0x6b0] sm:$0xff]
        %v1805 = vld [vmem:[#allocation12 + $0x6b8] sm:$0xff]
        %v1806 = vld [vmem:[#allocation12 + $0x6c0] sm:$0xff]
        %v1807 = vld [vmem:[#allocation12 + $0x6c8] sm:$0xff]
        %v1808 = vld [vmem:[#allocation12 + $0x6d0] sm:$0xff]
        %v1809 = vld [vmem:[#allocation12 + $0x6d8] sm:$0xff]
        %v1810 = vld [vmem:[#allocation12 + $0x6e0] sm:$0xff]
        %v1811 = vld [vmem:[#allocation12 + $0x6e8] sm:$0xff]
        %v1812 = vld [vmem:[#allocation12 + $0x6f0] sm:$0xff]
        %v1813 = vld [vmem:[#allocation12 + $0x6f8] sm:$0xff]
        %v1814 = vld [vmem:[#allocation12 + $0x700] sm:$0xff]
        %v1815 = vld [vmem:[#allocation12 + $0x708] sm:$0xff]
        %v1816 = vld [vmem:[#allocation12 + $0x710] sm:$0xff]
        %v1817 = vld [vmem:[#allocation12 + $0x718] sm:$0xff]
        %v1818 = vld [vmem:[#allocation12 + $0x720] sm:$0xff]
        %v1819 = vld [vmem:[#allocation12 + $0x728] sm:$0xff]
        %v1820 = vld [vmem:[#allocation12 + $0x730] sm:$0xff]
        %v1821 = vld [vmem:[#allocation12 + $0x738] sm:$0xff]
        %v1822 = vld [vmem:[#allocation12 + $0x740] sm:$0xff]
        %v1823 = vld [vmem:[#allocation12 + $0x748] sm:$0xff]
        %v1824 = vld [vmem:[#allocation12 + $0x750] sm:$0xff]
        %v1825 = vld [vmem:[#allocation12 + $0x758] sm:$0xff]
        %v1826 = vld [vmem:[#allocation12 + $0x760] sm:$0xff]
        %v1827 = vld [vmem:[#allocation12 + $0x768] sm:$0xff]
        %v1828 = vld [vmem:[#allocation12 + $0x770] sm:$0xff]
        %v1829 = vld [vmem:[#allocation12 + $0x778] sm:$0xff]
        %v1830 = vld [vmem:[#allocation12 + $0x780] sm:$0xff]
        %v1831 = vld [vmem:[#allocation12 + $0x788] sm:$0xff]
        %v1832 = vld [vmem:[#allocation12 + $0x790] sm:$0xff]
        %v1833 = vld [vmem:[#allocation12 + $0x798] sm:$0xff]
        %v1834 = vld [vmem:[#allocation12 + $0x7a0] sm:$0xff]
        %v1835 = vld [vmem:[#allocation12 + $0x7a8] sm:$0xff]
        %v1836 = vld [vmem:[#allocation12 + $0x7b0] sm:$0xff]
        %v1837 = vld [vmem:[#allocation12 + $0x7b8] sm:$0xff]
        %v1838 = vld [vmem:[#allocation12 + $0x7c0] sm:$0xff]
        %v1839 = vld [vmem:[#allocation12 + $0x7c8] sm:$0xff]
        %v1840 = vld [vmem:[#allocation12 + $0x7d0] sm:$0xff]
        %v1841 = vld [vmem:[#allocation12 + $0x7d8] sm:$0xff]
        %v1842 = vld [vmem:[#allocation12 + $0x7e0] sm:$0xff]
        %v1843 = vld [vmem:[#allocation12 + $0x7e8] sm:$0xff]
        %v1844 = vld [vmem:[#allocation12 + $0x7f0] sm:$0xff]
        %v1845 = vld [vmem:[#allocation12 + $0x7f8] sm:$0xff]
        %v1846 = vld [vmem:[#allocation12 + $0x800] sm:$0xff]
        %v1847 = vld [vmem:[#allocation12 + $0x808] sm:$0xff]
        %v1848 = vld [vmem:[#allocation12 + $0x810] sm:$0xff]
        %v1849 = vld [vmem:[#allocation12 + $0x818] sm:$0xff]
        %v1850 = vld [vmem:[#allocation12 + $0x820] sm:$0xff]
        %v1851 = vld [vmem:[#allocation12 + $0x828] sm:$0xff]
        %v1852 = vld [vmem:[#allocation12 + $0x830] sm:$0xff]
        %v1853 = vld [vmem:[#allocation12 + $0x838] sm:$0xff]
        %v1854 = vld [vmem:[#allocation12 + $0x840] sm:$0xff]
        %v1855 = vld [vmem:[#allocation12 + $0x848] sm:$0xff]
        %v1856 = vld [vmem:[#allocation12 + $0x850] sm:$0xff]
        %v1857 = vld [vmem:[#allocation12 + $0x858] sm:$0xff]
        %v1858 = vld [vmem:[#allocation12 + $0x860] sm:$0xff]
        %v1859 = vld [vmem:[#allocation12 + $0x868] sm:$0xff]
        %v1860 = vld [vmem:[#allocation12 + $0x870] sm:$0xff]
        %v1861 = vld [vmem:[#allocation12 + $0x878] sm:$0xff]
        %v1862 = vld [vmem:[#allocation12 + $0x880] sm:$0xff]
        %v1863 = vld [vmem:[#allocation12 + $0x888] sm:$0xff]
        %v1864 = vld [vmem:[#allocation12 + $0x890] sm:$0xff]
        %v1865 = vld [vmem:[#allocation12 + $0x898] sm:$0xff]
        %v1866 = vld [vmem:[#allocation12 + $0x8a0] sm:$0xff]
        %v1867 = vld [vmem:[#allocation12 + $0x8a8] sm:$0xff]
        %v1868 = vld [vmem:[#allocation12 + $0x8b0] sm:$0xff]
        %v1869 = vld [vmem:[#allocation12 + $0x8b8] sm:$0xff]
        %v1870 = vld [vmem:[#allocation12 + $0x8c0] sm:$0xff]
        %v1871 = vld [vmem:[#allocation12 + $0x8c8] sm:$0xff]
        %v1872 = vld [vmem:[#allocation12 + $0x8d0] sm:$0xff]
        %v1873 = vld [vmem:[#allocation12 + $0x8d8] sm:$0xff]
        %v1874 = vld [vmem:[#allocation12 + $0x8e0] sm:$0xff]
        %v1875 = vld [vmem:[#allocation12 + $0x8e8] sm:$0xff]
        %v1876 = vld [vmem:[#allocation12 + $0x8f0] sm:$0xff]
        %v1877 = vld [vmem:[#allocation12 + $0x8f8] sm:$0xff]
        %v1878 = vld [vmem:[#allocation12 + $0x900] sm:$0xff]
        %v1879 = vld [vmem:[#allocation12 + $0x908] sm:$0xff]
        %v1880 = vld [vmem:[#allocation12 + $0x910] sm:$0xff]
        %v1881 = vld [vmem:[#allocation12 + $0x918] sm:$0xff]
        %v1882 = vld [vmem:[#allocation12 + $0x920] sm:$0xff]
        %v1883 = vld [vmem:[#allocation12 + $0x928] sm:$0xff]
        %v1884 = vld [vmem:[#allocation12 + $0x930] sm:$0xff]
        %v1885 = vld [vmem:[#allocation12 + $0x938] sm:$0xff]
        %v1886 = vld [vmem:[#allocation12 + $0x940] sm:$0xff]
        %v1887 = vld [vmem:[#allocation12 + $0x948] sm:$0xff]
        %v1888 = vld [vmem:[#allocation12 + $0x950] sm:$0xff]
        %v1889 = vld [vmem:[#allocation12 + $0x958] sm:$0xff]
        %v1890 = vld [vmem:[#allocation12 + $0x960] sm:$0xff]
        %v1891 = vld [vmem:[#allocation12 + $0x968] sm:$0xff]
        %v1892 = vld [vmem:[#allocation12 + $0x970] sm:$0xff]
        %v1893 = vld [vmem:[#allocation12 + $0x978] sm:$0xff]
        %v1894 = vld [vmem:[#allocation12 + $0x980] sm:$0xff]
        %v1895 = vld [vmem:[#allocation12 + $0x988] sm:$0xff]
        %v1896 = vld [vmem:[#allocation12 + $0x990] sm:$0xff]
        %v1897 = vld [vmem:[#allocation12 + $0x998] sm:$0xff]
        %v1898 = vld [vmem:[#allocation12 + $0x9a0] sm:$0xff]
        %v1899 = vld [vmem:[#allocation12 + $0x9a8] sm:$0xff]
        %v1900 = vld [vmem:[#allocation12 + $0x9b0] sm:$0xff]
        %v1901 = vld [vmem:[#allocation12 + $0x9b8] sm:$0xff]
        %v1902 = vld [vmem:[#allocation12 + $0x9c0] sm:$0xff]
        %v1903 = vld [vmem:[#allocation12 + $0x9c8] sm:$0xff]
        %v1904 = vld [vmem:[#allocation12 + $0x9d0] sm:$0xff]
        %v1905 = vld [vmem:[#allocation12 + $0x9d8] sm:$0xff]
        %v1906 = vld [vmem:[#allocation12 + $0x9e0] sm:$0xff]
        %v1907 = vld [vmem:[#allocation12 + $0x9e8] sm:$0xff]
        %v1908 = vld [vmem:[#allocation12 + $0x9f0] sm:$0xff]
        %v1909 = vld [vmem:[#allocation12 + $0x9f8] sm:$0xff]
        %v1910 = vld [vmem:[#allocation12 + $0xa00] sm:$0xff]
        %v1911 = vld [vmem:[#allocation12 + $0xa08] sm:$0xff]
        %v1912 = vld [vmem:[#allocation12 + $0xa10] sm:$0xff]
        %v1913 = vld [vmem:[#allocation12 + $0xa18] sm:$0xff]
        %v1914 = vld [vmem:[#allocation12 + $0xa20] sm:$0xff]
        %v1915 = vld [vmem:[#allocation12 + $0xa28] sm:$0xff]
        %v1916 = vld [vmem:[#allocation12 + $0xa30] sm:$0xff]
        %v1917 = vld [vmem:[#allocation12 + $0xa38] sm:$0xff]
        %v1918 = vld [vmem:[#allocation12 + $0xa40] sm:$0xff]
        %v1919 = vld [vmem:[#allocation12 + $0xa48] sm:$0xff]
        %v1920 = vld [vmem:[#allocation12 + $0xa50] sm:$0xff]
        %v1921 = vld [vmem:[#allocation12 + $0xa58] sm:$0xff]
        %v1922 = vld [vmem:[#allocation12 + $0xa60] sm:$0xff]
        %v1923 = vld [vmem:[#allocation12 + $0xa68] sm:$0xff]
        %v1924 = vld [vmem:[#allocation12 + $0xa70] sm:$0xff]
        %v1925 = vld [vmem:[#allocation12 + $0xa78] sm:$0xff]
        %v1926 = vld [vmem:[#allocation12 + $0xa80] sm:$0xff]
        %v1927 = vld [vmem:[#allocation12 + $0xa88] sm:$0xff]
        %v1928 = vld [vmem:[#allocation12 + $0xa90] sm:$0xff]
        %v1929 = vld [vmem:[#allocation12 + $0xa98] sm:$0xff]
        %v1930 = vld [vmem:[#allocation12 + $0xaa0] sm:$0xff]
        %v1931 = vld [vmem:[#allocation12 + $0xaa8] sm:$0xff]
        %v1932 = vld [vmem:[#allocation12 + $0xab0] sm:$0xff]
        %v1933 = vld [vmem:[#allocation12 + $0xab8] sm:$0xff]
        %v1934 = vld [vmem:[#allocation12 + $0xac0] sm:$0xff]
        %v1935 = vld [vmem:[#allocation12 + $0xac8] sm:$0xff]
        %v1936 = vld [vmem:[#allocation12 + $0xad0] sm:$0xff]
        %v1937 = vld [vmem:[#allocation12 + $0xad8] sm:$0xff]
        %v1938 = vld [vmem:[#allocation12 + $0xae0] sm:$0xff]
        %v1939 = vld [vmem:[#allocation12 + $0xae8] sm:$0xff]
        %v1940 = vld [vmem:[#allocation12 + $0xaf0] sm:$0xff]
        %v1941 = vld [vmem:[#allocation12 + $0xaf8] sm:$0xff]
        %v1942 = vld [vmem:[#allocation12 + $0xb00] sm:$0xff]
        %v1943 = vld [vmem:[#allocation12 + $0xb08] sm:$0xff]
        %v1944 = vld [vmem:[#allocation12 + $0xb10] sm:$0xff]
        %v1945 = vld [vmem:[#allocation12 + $0xb18] sm:$0xff]
        %v1946 = vld [vmem:[#allocation12 + $0xb20] sm:$0xff]
        %v1947 = vld [vmem:[#allocation12 + $0xb28] sm:$0xff]
        %v1948 = vld [vmem:[#allocation12 + $0xb30] sm:$0xff]
        %v1949 = vld [vmem:[#allocation12 + $0xb38] sm:$0xff]
        %v1950 = vld [vmem:[#allocation12 + $0xb40] sm:$0xff]
        %v1951 = vld [vmem:[#allocation12 + $0xb48] sm:$0xff]
        %v1952 = vld [vmem:[#allocation12 + $0xb50] sm:$0xff]
        %v1953 = vld [vmem:[#allocation12 + $0xb58] sm:$0xff]
        %v1954 = vld [vmem:[#allocation12 + $0xb60] sm:$0xff]
        %v1955 = vld [vmem:[#allocation12 + $0xb68] sm:$0xff]
        %v1956 = vld [vmem:[#allocation12 + $0xb70] sm:$0xff]
        %v1957 = vld [vmem:[#allocation12 + $0xb78] sm:$0xff]
        %v1958 = vld [vmem:[#allocation12 + $0xb80] sm:$0xff]
        %v1959 = vld [vmem:[#allocation12 + $0xb88] sm:$0xff]
        %v1960 = vld [vmem:[#allocation12 + $0xb90] sm:$0xff]
        %v1961 = vld [vmem:[#allocation12 + $0xb98] sm:$0xff]
        %v1962 = vld [vmem:[#allocation12 + $0xba0] sm:$0xff]
        %v1963 = vld [vmem:[#allocation12 + $0xba8] sm:$0xff]
        %v1964 = vld [vmem:[#allocation12 + $0xbb0] sm:$0xff]
        %v1965 = vld [vmem:[#allocation12 + $0xbb8] sm:$0xff]
        %v1966 = vld [vmem:[#allocation12 + $0xbc0] sm:$0xff]
        %v1967 = vld [vmem:[#allocation12 + $0xbc8] sm:$0xff]
        %v1968 = vld [vmem:[#allocation12 + $0xbd0] sm:$0xff]
        %v1969 = vld [vmem:[#allocation12 + $0xbd8] sm:$0xff]
        %v1970 = vld [vmem:[#allocation12 + $0xbe0] sm:$0xff]
        %v1971 = vld [vmem:[#allocation12 + $0xbe8] sm:$0xff]
        %v1972 = vld [vmem:[#allocation12 + $0xbf0] sm:$0xff]
        %v1973 = vld [vmem:[#allocation12 + $0xbf8] sm:$0xff]
        %v1974 = vld [vmem:[#allocation12 + $0xc00] sm:$0xff]
        %v1975 = vld [vmem:[#allocation12 + $0xc08] sm:$0xff]
        %v1976 = vld [vmem:[#allocation12 + $0xc10] sm:$0xff]
        %v1977 = vld [vmem:[#allocation12 + $0xc18] sm:$0xff]
        %v1978 = vld [vmem:[#allocation12 + $0xc20] sm:$0xff]
        %v1979 = vld [vmem:[#allocation12 + $0xc28] sm:$0xff]
        %v1980 = vld [vmem:[#allocation12 + $0xc30] sm:$0xff]
        %v1981 = vld [vmem:[#allocation12 + $0xc38] sm:$0xff]
        %v1982 = vld [vmem:[#allocation12 + $0xc40] sm:$0xff]
        %v1983 = vld [vmem:[#allocation12 + $0xc48] sm:$0xff]
        %v1984 = vld [vmem:[#allocation12 + $0xc50] sm:$0xff]
        %v1985 = vld [vmem:[#allocation12 + $0xc58] sm:$0xff]
        %v1986 = vld [vmem:[#allocation12 + $0xc60] sm:$0xff]
        %v1987 = vld [vmem:[#allocation12 + $0xc68] sm:$0xff]
        %v1988 = vld [vmem:[#allocation12 + $0xc70] sm:$0xff]
        %v1989 = vld [vmem:[#allocation12 + $0xc78] sm:$0xff]
        %v1990 = vld [vmem:[#allocation12 + $0xc80] sm:$0xff]
        %v1991 = vld [vmem:[#allocation12 + $0xc88] sm:$0xff]
        %v1992 = vld [vmem:[#allocation12 + $0xc90] sm:$0xff]
        %v1993 = vld [vmem:[#allocation12 + $0xc98] sm:$0xff]
        %v1994 = vld [vmem:[#allocation12 + $0xca0] sm:$0xff]
        %v1995 = vld [vmem:[#allocation12 + $0xca8] sm:$0xff]
        %v1996 = vld [vmem:[#allocation12 + $0xcb0] sm:$0xff]
        %v1997 = vld [vmem:[#allocation12 + $0xcb8] sm:$0xff]
        %v1998 = vld [vmem:[#allocation12 + $0xcc0] sm:$0xff]
        %v1999 = vld [vmem:[#allocation12 + $0xcc8] sm:$0xff]
        %v2000 = vld [vmem:[#allocation12 + $0xcd0] sm:$0xff]
        %v2001 = vld [vmem:[#allocation12 + $0xcd8] sm:$0xff]
        %v2002 = vld [vmem:[#allocation12 + $0xce0] sm:$0xff]
        %v2003 = vld [vmem:[#allocation12 + $0xce8] sm:$0xff]
        %v2004 = vld [vmem:[#allocation12 + $0xcf0] sm:$0xff]
        %v2005 = vld [vmem:[#allocation12 + $0xcf8] sm:$0xff]
        %v2422 = vunpack.c.l.b16 %v1590
        %v2423 = vunpack.c.h.b16 %v1590
        %v2424 = vunpack.c.l.b16 %v1591
        %v2425 = vunpack.c.h.b16 %v1591
        %v2426 = vunpack.c.l.b16 %v1592
        %v2427 = vunpack.c.h.b16 %v1592
        %v2428 = vunpack.c.l.b16 %v1593
        %v2429 = vunpack.c.h.b16 %v1593
        %v2430 = vunpack.c.l.b16 %v1594
        %v2431 = vunpack.c.h.b16 %v1594
        %v2432 = vunpack.c.l.b16 %v1595
        %v2433 = vunpack.c.h.b16 %v1595
        %v2434 = vunpack.c.l.b16 %v1596
        %v2435 = vunpack.c.h.b16 %v1596
        %v2436 = vunpack.c.l.b16 %v1597
        %v2437 = vunpack.c.h.b16 %v1597
        %v2438 = vunpack.c.l.b16 %v1598
        %v2439 = vunpack.c.h.b16 %v1598
        %v2440 = vunpack.c.l.b16 %v1599
        %v2441 = vunpack.c.h.b16 %v1599
        %v2442 = vunpack.c.l.b16 %v1600
        %v2443 = vunpack.c.h.b16 %v1600
        %v2444 = vunpack.c.l.b16 %v1601
        %v2445 = vunpack.c.h.b16 %v1601
        %v2446 = vunpack.c.l.b16 %v1602
        %v2447 = vunpack.c.h.b16 %v1602
        %v2448 = vunpack.c.l.b16 %v1603
        %v2449 = vunpack.c.h.b16 %v1603
        %v2450 = vunpack.c.l.b16 %v1604
        %v2451 = vunpack.c.h.b16 %v1604
        %v2452 = vunpack.c.l.b16 %v1605
        %v2453 = vunpack.c.h.b16 %v1605
        %v2454 = vunpack.c.l.b16 %v1606
        %v2455 = vunpack.c.h.b16 %v1606
        %v2456 = vunpack.c.l.b16 %v1607
        %v2457 = vunpack.c.h.b16 %v1607
        %v2458 = vunpack.c.l.b16 %v1608
        %v2459 = vunpack.c.h.b16 %v1608
        %v2460 = vunpack.c.l.b16 %v1609
        %v2461 = vunpack.c.h.b16 %v1609
        %v2462 = vunpack.c.l.b16 %v1610
        %v2463 = vunpack.c.h.b16 %v1610
        %v2464 = vunpack.c.l.b16 %v1611
        %v2465 = vunpack.c.h.b16 %v1611
        %v2466 = vunpack.c.l.b16 %v1612
        %v2467 = vunpack.c.h.b16 %v1612
        %v2468 = vunpack.c.l.b16 %v1613
        %v2469 = vunpack.c.h.b16 %v1613
        %v2470 = vunpack.c.l.b16 %v1614
        %v2471 = vunpack.c.h.b16 %v1614
        %v2472 = vunpack.c.l.b16 %v1615
        %v2473 = vunpack.c.h.b16 %v1615
        %v2474 = vunpack.c.l.b16 %v1616
        %v2475 = vunpack.c.h.b16 %v1616
        %v2476 = vunpack.c.l.b16 %v1617
        %v2477 = vunpack.c.h.b16 %v1617
        %v2478 = vunpack.c.l.b16 %v1618
        %v2479 = vunpack.c.h.b16 %v1618
        %v2480 = vunpack.c.l.b16 %v1619
        %v2481 = vunpack.c.h.b16 %v1619
        %v2482 = vunpack.c.l.b16 %v1620
        %v2483 = vunpack.c.h.b16 %v1620
        %v2484 = vunpack.c.l.b16 %v1621
        %v2485 = vunpack.c.h.b16 %v1621
        %v2486 = vunpack.c.l.b16 %v1622
        %v2487 = vunpack.c.h.b16 %v1622
        %v2488 = vunpack.c.l.b16 %v1623
        %v2489 = vunpack.c.h.b16 %v1623
        %v2490 = vunpack.c.l.b16 %v1624
        %v2491 = vunpack.c.h.b16 %v1624
        %v2492 = vunpack.c.l.b16 %v1625
        %v2493 = vunpack.c.h.b16 %v1625
        %v2494 = vunpack.c.l.b16 %v1626
        %v2495 = vunpack.c.h.b16 %v1626
        %v2496 = vunpack.c.l.b16 %v1627
        %v2497 = vunpack.c.h.b16 %v1627
        %v2498 = vunpack.c.l.b16 %v1628
        %v2499 = vunpack.c.h.b16 %v1628
        %v2500 = vunpack.c.l.b16 %v1629
        %v2501 = vunpack.c.h.b16 %v1629
        %v2502 = vunpack.c.l.b16 %v1630
        %v2503 = vunpack.c.h.b16 %v1630
        %v2504 = vunpack.c.l.b16 %v1631
        %v2505 = vunpack.c.h.b16 %v1631
        %v2506 = vunpack.c.l.b16 %v1632
        %v2507 = vunpack.c.h.b16 %v1632
        %v2508 = vunpack.c.l.b16 %v1633
        %v2509 = vunpack.c.h.b16 %v1633
        %v2510 = vunpack.c.l.b16 %v1634
        %v2511 = vunpack.c.h.b16 %v1634
        %v2512 = vunpack.c.l.b16 %v1635
        %v2513 = vunpack.c.h.b16 %v1635
        %v2514 = vunpack.c.l.b16 %v1636
        %v2515 = vunpack.c.h.b16 %v1636
        %v2516 = vunpack.c.l.b16 %v1637
        %v2517 = vunpack.c.h.b16 %v1637
        %v2518 = vunpack.c.l.b16 %v1638
        %v2519 = vunpack.c.h.b16 %v1638
        %v2520 = vunpack.c.l.b16 %v1639
        %v2521 = vunpack.c.h.b16 %v1639
        %v2522 = vunpack.c.l.b16 %v1640
        %v2523 = vunpack.c.h.b16 %v1640
        %v2524 = vunpack.c.l.b16 %v1641
        %v2525 = vunpack.c.h.b16 %v1641
        %v2526 = vunpack.c.l.b16 %v1642
        %v2527 = vunpack.c.h.b16 %v1642
        %v2528 = vunpack.c.l.b16 %v1643
        %v2529 = vunpack.c.h.b16 %v1643
        %v2530 = vunpack.c.l.b16 %v1644
        %v2531 = vunpack.c.h.b16 %v1644
        %v2532 = vunpack.c.l.b16 %v1645
        %v2533 = vunpack.c.h.b16 %v1645
        %v2534 = vunpack.c.l.b16 %v1646
        %v2535 = vunpack.c.h.b16 %v1646
        %v2536 = vunpack.c.l.b16 %v1647
        %v2537 = vunpack.c.h.b16 %v1647
        %v2538 = vunpack.c.l.b16 %v1648
        %v2539 = vunpack.c.h.b16 %v1648
        %v2540 = vunpack.c.l.b16 %v1649
        %v2541 = vunpack.c.h.b16 %v1649
        %v2542 = vunpack.c.l.b16 %v1650
        %v2543 = vunpack.c.h.b16 %v1650
        %v2544 = vunpack.c.l.b16 %v1651
        %v2545 = vunpack.c.h.b16 %v1651
        %v2546 = vunpack.c.l.b16 %v1652
        %v2547 = vunpack.c.h.b16 %v1652
        %v2548 = vunpack.c.l.b16 %v1653
        %v2549 = vunpack.c.h.b16 %v1653
        %v2550 = vunpack.c.l.b16 %v1654
        %v2551 = vunpack.c.h.b16 %v1654
        %v2552 = vunpack.c.l.b16 %v1655
        %v2553 = vunpack.c.h.b16 %v1655
        %v2554 = vunpack.c.l.b16 %v1656
        %v2555 = vunpack.c.h.b16 %v1656
        %v2556 = vunpack.c.l.b16 %v1657
        %v2557 = vunpack.c.h.b16 %v1657
        %v2558 = vunpack.c.l.b16 %v1658
        %v2559 = vunpack.c.h.b16 %v1658
        %v2560 = vunpack.c.l.b16 %v1659
        %v2561 = vunpack.c.h.b16 %v1659
        %v2562 = vunpack.c.l.b16 %v1660
        %v2563 = vunpack.c.h.b16 %v1660
        %v2564 = vunpack.c.l.b16 %v1661
        %v2565 = vunpack.c.h.b16 %v1661
        %v2566 = vunpack.c.l.b16 %v1662
        %v2567 = vunpack.c.h.b16 %v1662
        %v2568 = vunpack.c.l.b16 %v1663
        %v2569 = vunpack.c.h.b16 %v1663
        %v2570 = vunpack.c.l.b16 %v1664
        %v2571 = vunpack.c.h.b16 %v1664
        %v2572 = vunpack.c.l.b16 %v1665
        %v2573 = vunpack.c.h.b16 %v1665
        %v2574 = vunpack.c.l.b16 %v1666
        %v2575 = vunpack.c.h.b16 %v1666
        %v2576 = vunpack.c.l.b16 %v1667
        %v2577 = vunpack.c.h.b16 %v1667
        %v2578 = vunpack.c.l.b16 %v1668
        %v2579 = vunpack.c.h.b16 %v1668
        %v2580 = vunpack.c.l.b16 %v1669
        %v2581 = vunpack.c.h.b16 %v1669
        %v2582 = vunpack.c.l.b16 %v1670
        %v2583 = vunpack.c.h.b16 %v1670
        %v2584 = vunpack.c.l.b16 %v1671
        %v2585 = vunpack.c.h.b16 %v1671
        %v2586 = vunpack.c.l.b16 %v1672
        %v2587 = vunpack.c.h.b16 %v1672
        %v2588 = vunpack.c.l.b16 %v1673
        %v2589 = vunpack.c.h.b16 %v1673
        %v2590 = vunpack.c.l.b16 %v1674
        %v2591 = vunpack.c.h.b16 %v1674
        %v2592 = vunpack.c.l.b16 %v1675
        %v2593 = vunpack.c.h.b16 %v1675
        %v2594 = vunpack.c.l.b16 %v1676
        %v2595 = vunpack.c.h.b16 %v1676
        %v2596 = vunpack.c.l.b16 %v1677
        %v2597 = vunpack.c.h.b16 %v1677
        %v2598 = vunpack.c.l.b16 %v1678
        %v2599 = vunpack.c.h.b16 %v1678
        %v2600 = vunpack.c.l.b16 %v1679
        %v2601 = vunpack.c.h.b16 %v1679
        %v2602 = vunpack.c.l.b16 %v1680
        %v2603 = vunpack.c.h.b16 %v1680
        %v2604 = vunpack.c.l.b16 %v1681
        %v2605 = vunpack.c.h.b16 %v1681
        %v2606 = vunpack.c.l.b16 %v1682
        %v2607 = vunpack.c.h.b16 %v1682
        %v2608 = vunpack.c.l.b16 %v1683
        %v2609 = vunpack.c.h.b16 %v1683
        %v2610 = vunpack.c.l.b16 %v1684
        %v2611 = vunpack.c.h.b16 %v1684
        %v2612 = vunpack.c.l.b16 %v1685
        %v2613 = vunpack.c.h.b16 %v1685
        %v2614 = vunpack.c.l.b16 %v1686
        %v2615 = vunpack.c.h.b16 %v1686
        %v2616 = vunpack.c.l.b16 %v1687
        %v2617 = vunpack.c.h.b16 %v1687
        %v2618 = vunpack.c.l.b16 %v1688
        %v2619 = vunpack.c.h.b16 %v1688
        %v2620 = vunpack.c.l.b16 %v1689
        %v2621 = vunpack.c.h.b16 %v1689
        %v2622 = vunpack.c.l.b16 %v1690
        %v2623 = vunpack.c.h.b16 %v1690
        %v2624 = vunpack.c.l.b16 %v1691
        %v2625 = vunpack.c.h.b16 %v1691
        %v2626 = vunpack.c.l.b16 %v1692
        %v2627 = vunpack.c.h.b16 %v1692
        %v2628 = vunpack.c.l.b16 %v1693
        %v2629 = vunpack.c.h.b16 %v1693
        %v2630 = vunpack.c.l.b16 %v1694
        %v2631 = vunpack.c.h.b16 %v1694
        %v2632 = vunpack.c.l.b16 %v1695
        %v2633 = vunpack.c.h.b16 %v1695
        %v2634 = vunpack.c.l.b16 %v1696
        %v2635 = vunpack.c.h.b16 %v1696
        %v2636 = vunpack.c.l.b16 %v1697
        %v2637 = vunpack.c.h.b16 %v1697
        %v2638 = vunpack.c.l.b16 %v1698
        %v2639 = vunpack.c.h.b16 %v1698
        %v2640 = vunpack.c.l.b16 %v1699
        %v2641 = vunpack.c.h.b16 %v1699
        %v2642 = vunpack.c.l.b16 %v1700
        %v2643 = vunpack.c.h.b16 %v1700
        %v2644 = vunpack.c.l.b16 %v1701
        %v2645 = vunpack.c.h.b16 %v1701
        %v2646 = vunpack.c.l.b16 %v1702
        %v2647 = vunpack.c.h.b16 %v1702
        %v2648 = vunpack.c.l.b16 %v1703
        %v2649 = vunpack.c.h.b16 %v1703
        %v2650 = vunpack.c.l.b16 %v1704
        %v2651 = vunpack.c.h.b16 %v1704
        %v2652 = vunpack.c.l.b16 %v1705
        %v2653 = vunpack.c.h.b16 %v1705
        %v2654 = vunpack.c.l.b16 %v1706
        %v2655 = vunpack.c.h.b16 %v1706
        %v2656 = vunpack.c.l.b16 %v1707
        %v2657 = vunpack.c.h.b16 %v1707
        %v2658 = vunpack.c.l.b16 %v1708
        %v2659 = vunpack.c.h.b16 %v1708
        %v2660 = vunpack.c.l.b16 %v1709
        %v2661 = vunpack.c.h.b16 %v1709
        %v2662 = vunpack.c.l.b16 %v1710
        %v2663 = vunpack.c.h.b16 %v1710
        %v2664 = vunpack.c.l.b16 %v1711
        %v2665 = vunpack.c.h.b16 %v1711
        %v2666 = vunpack.c.l.b16 %v1712
        %v2667 = vunpack.c.h.b16 %v1712
        %v2668 = vunpack.c.l.b16 %v1713
        %v2669 = vunpack.c.h.b16 %v1713
        %v2670 = vunpack.c.l.b16 %v1714
        %v2671 = vunpack.c.h.b16 %v1714
        %v2672 = vunpack.c.l.b16 %v1715
        %v2673 = vunpack.c.h.b16 %v1715
        %v2674 = vunpack.c.l.b16 %v1716
        %v2675 = vunpack.c.h.b16 %v1716
        %v2676 = vunpack.c.l.b16 %v1717
        %v2677 = vunpack.c.h.b16 %v1717
        %v2678 = vunpack.c.l.b16 %v1718
        %v2679 = vunpack.c.h.b16 %v1718
        %v2680 = vunpack.c.l.b16 %v1719
        %v2681 = vunpack.c.h.b16 %v1719
        %v2682 = vunpack.c.l.b16 %v1720
        %v2683 = vunpack.c.h.b16 %v1720
        %v2684 = vunpack.c.l.b16 %v1721
        %v2685 = vunpack.c.h.b16 %v1721
        %v2686 = vunpack.c.l.b16 %v1722
        %v2687 = vunpack.c.h.b16 %v1722
        %v2688 = vunpack.c.l.b16 %v1723
        %v2689 = vunpack.c.h.b16 %v1723
        %v2690 = vunpack.c.l.b16 %v1724
        %v2691 = vunpack.c.h.b16 %v1724
        %v2692 = vunpack.c.l.b16 %v1725
        %v2693 = vunpack.c.h.b16 %v1725
        %v2694 = vunpack.c.l.b16 %v1726
        %v2695 = vunpack.c.h.b16 %v1726
        %v2696 = vunpack.c.l.b16 %v1727
        %v2697 = vunpack.c.h.b16 %v1727
        %v2698 = vunpack.c.l.b16 %v1728
        %v2699 = vunpack.c.h.b16 %v1728
        %v2700 = vunpack.c.l.b16 %v1729
        %v2701 = vunpack.c.h.b16 %v1729
        %v2702 = vunpack.c.l.b16 %v1730
        %v2703 = vunpack.c.h.b16 %v1730
        %v2704 = vunpack.c.l.b16 %v1731
        %v2705 = vunpack.c.h.b16 %v1731
        %v2706 = vunpack.c.l.b16 %v1732
        %v2707 = vunpack.c.h.b16 %v1732
        %v2708 = vunpack.c.l.b16 %v1733
        %v2709 = vunpack.c.h.b16 %v1733
        %v2710 = vunpack.c.l.b16 %v1734
        %v2711 = vunpack.c.h.b16 %v1734
        %v2712 = vunpack.c.l.b16 %v1735
        %v2713 = vunpack.c.h.b16 %v1735
        %v2714 = vunpack.c.l.b16 %v1736
        %v2715 = vunpack.c.h.b16 %v1736
        %v2716 = vunpack.c.l.b16 %v1737
        %v2717 = vunpack.c.h.b16 %v1737
        %v2718 = vunpack.c.l.b16 %v1738
        %v2719 = vunpack.c.h.b16 %v1738
        %v2720 = vunpack.c.l.b16 %v1739
        %v2721 = vunpack.c.h.b16 %v1739
        %v2722 = vunpack.c.l.b16 %v1740
        %v2723 = vunpack.c.h.b16 %v1740
        %v2724 = vunpack.c.l.b16 %v1741
        %v2725 = vunpack.c.h.b16 %v1741
        %v2726 = vunpack.c.l.b16 %v1742
        %v2727 = vunpack.c.h.b16 %v1742
        %v2728 = vunpack.c.l.b16 %v1743
        %v2729 = vunpack.c.h.b16 %v1743
        %v2730 = vunpack.c.l.b16 %v1744
        %v2731 = vunpack.c.h.b16 %v1744
        %v2732 = vunpack.c.l.b16 %v1745
        %v2733 = vunpack.c.h.b16 %v1745
        %v2734 = vunpack.c.l.b16 %v1746
        %v2735 = vunpack.c.h.b16 %v1746
        %v2736 = vunpack.c.l.b16 %v1747
        %v2737 = vunpack.c.h.b16 %v1747
        %v2738 = vunpack.c.l.b16 %v1748
        %v2739 = vunpack.c.h.b16 %v1748
        %v2740 = vunpack.c.l.b16 %v1749
        %v2741 = vunpack.c.h.b16 %v1749
        %v2742 = vunpack.c.l.b16 %v1750
        %v2743 = vunpack.c.h.b16 %v1750
        %v2744 = vunpack.c.l.b16 %v1751
        %v2745 = vunpack.c.h.b16 %v1751
        %v2746 = vunpack.c.l.b16 %v1752
        %v2747 = vunpack.c.h.b16 %v1752
        %v2748 = vunpack.c.l.b16 %v1753
        %v2749 = vunpack.c.h.b16 %v1753
        %v2750 = vunpack.c.l.b16 %v1754
        %v2751 = vunpack.c.h.b16 %v1754
        %v2752 = vunpack.c.l.b16 %v1755
        %v2753 = vunpack.c.h.b16 %v1755
        %v2754 = vunpack.c.l.b16 %v1756
        %v2755 = vunpack.c.h.b16 %v1756
        %v2756 = vunpack.c.l.b16 %v1757
        %v2757 = vunpack.c.h.b16 %v1757
        %v2758 = vunpack.c.l.b16 %v1758
        %v2759 = vunpack.c.h.b16 %v1758
        %v2760 = vunpack.c.l.b16 %v1759
        %v2761 = vunpack.c.h.b16 %v1759
        %v2762 = vunpack.c.l.b16 %v1760
        %v2763 = vunpack.c.h.b16 %v1760
        %v2764 = vunpack.c.l.b16 %v1761
        %v2765 = vunpack.c.h.b16 %v1761
        %v2766 = vunpack.c.l.b16 %v1762
        %v2767 = vunpack.c.h.b16 %v1762
        %v2768 = vunpack.c.l.b16 %v1763
        %v2769 = vunpack.c.h.b16 %v1763
        %v2770 = vunpack.c.l.b16 %v1764
        %v2771 = vunpack.c.h.b16 %v1764
        %v2772 = vunpack.c.l.b16 %v1765
        %v2773 = vunpack.c.h.b16 %v1765
        %v2774 = vunpack.c.l.b16 %v1766
        %v2775 = vunpack.c.h.b16 %v1766
        %v2776 = vunpack.c.l.b16 %v1767
        %v2777 = vunpack.c.h.b16 %v1767
        %v2778 = vunpack.c.l.b16 %v1768
        %v2779 = vunpack.c.h.b16 %v1768
        %v2780 = vunpack.c.l.b16 %v1769
        %v2781 = vunpack.c.h.b16 %v1769
        %v2782 = vunpack.c.l.b16 %v1770
        %v2783 = vunpack.c.h.b16 %v1770
        %v2784 = vunpack.c.l.b16 %v1771
        %v2785 = vunpack.c.h.b16 %v1771
        %v2786 = vunpack.c.l.b16 %v1772
        %v2787 = vunpack.c.h.b16 %v1772
        %v2788 = vunpack.c.l.b16 %v1773
        %v2789 = vunpack.c.h.b16 %v1773
        %v2790 = vunpack.c.l.b16 %v1774
        %v2791 = vunpack.c.h.b16 %v1774
        %v2792 = vunpack.c.l.b16 %v1775
        %v2793 = vunpack.c.h.b16 %v1775
        %v2794 = vunpack.c.l.b16 %v1776
        %v2795 = vunpack.c.h.b16 %v1776
        %v2796 = vunpack.c.l.b16 %v1777
        %v2797 = vunpack.c.h.b16 %v1777
        %v2798 = vunpack.c.l.b16 %v1778
        %v2799 = vunpack.c.h.b16 %v1778
        %v2800 = vunpack.c.l.b16 %v1779
        %v2801 = vunpack.c.h.b16 %v1779
        %v2802 = vunpack.c.l.b16 %v1780
        %v2803 = vunpack.c.h.b16 %v1780
        %v2804 = vunpack.c.l.b16 %v1781
        %v2805 = vunpack.c.h.b16 %v1781
        %v2806 = vunpack.c.l.b16 %v1782
        %v2807 = vunpack.c.h.b16 %v1782
        %v2808 = vunpack.c.l.b16 %v1783
        %v2809 = vunpack.c.h.b16 %v1783
        %v2810 = vunpack.c.l.b16 %v1784
        %v2811 = vunpack.c.h.b16 %v1784
        %v2812 = vunpack.c.l.b16 %v1785
        %v2813 = vunpack.c.h.b16 %v1785
        %v2814 = vunpack.c.l.b16 %v1786
        %v2815 = vunpack.c.h.b16 %v1786
        %v2816 = vunpack.c.l.b16 %v1787
        %v2817 = vunpack.c.h.b16 %v1787
        %v2818 = vunpack.c.l.b16 %v1788
        %v2819 = vunpack.c.h.b16 %v1788
        %v2820 = vunpack.c.l.b16 %v1789
        %v2821 = vunpack.c.h.b16 %v1789
        %v2822 = vunpack.c.l.b16 %v1790
        %v2823 = vunpack.c.h.b16 %v1790
        %v2824 = vunpack.c.l.b16 %v1791
        %v2825 = vunpack.c.h.b16 %v1791
        %v2826 = vunpack.c.l.b16 %v1792
        %v2827 = vunpack.c.h.b16 %v1792
        %v2828 = vunpack.c.l.b16 %v1793
        %v2829 = vunpack.c.h.b16 %v1793
        %v2830 = vunpack.c.l.b16 %v1794
        %v2831 = vunpack.c.h.b16 %v1794
        %v2832 = vunpack.c.l.b16 %v1795
        %v2833 = vunpack.c.h.b16 %v1795
        %v2834 = vunpack.c.l.b16 %v1796
        %v2835 = vunpack.c.h.b16 %v1796
        %v2836 = vunpack.c.l.b16 %v1797
        %v2837 = vunpack.c.h.b16 %v1797
        %v2838 = vunpack.c.l.b16 %v1798
        %v2839 = vunpack.c.h.b16 %v1798
        %v2840 = vunpack.c.l.b16 %v1799
        %v2841 = vunpack.c.h.b16 %v1799
        %v2842 = vunpack.c.l.b16 %v1800
        %v2843 = vunpack.c.h.b16 %v1800
        %v2844 = vunpack.c.l.b16 %v1801
        %v2845 = vunpack.c.h.b16 %v1801
        %v2846 = vunpack.c.l.b16 %v1802
        %v2847 = vunpack.c.h.b16 %v1802
        %v2848 = vunpack.c.l.b16 %v1803
        %v2849 = vunpack.c.h.b16 %v1803
        %v2850 = vunpack.c.l.b16 %v1804
        %v2851 = vunpack.c.h.b16 %v1804
        %v2852 = vunpack.c.l.b16 %v1805
        %v2853 = vunpack.c.h.b16 %v1805
        %v2854 = vunpack.c.l.b16 %v1806
        %v2855 = vunpack.c.h.b16 %v1806
        %v2856 = vunpack.c.l.b16 %v1807
        %v2857 = vunpack.c.h.b16 %v1807
        %v2858 = vunpack.c.l.b16 %v1808
        %v2859 = vunpack.c.h.b16 %v1808
        %v2860 = vunpack.c.l.b16 %v1809
        %v2861 = vunpack.c.h.b16 %v1809
        %v2862 = vunpack.c.l.b16 %v1810
        %v2863 = vunpack.c.h.b16 %v1810
        %v2864 = vunpack.c.l.b16 %v1811
        %v2865 = vunpack.c.h.b16 %v1811
        %v2866 = vunpack.c.l.b16 %v1812
        %v2867 = vunpack.c.h.b16 %v1812
        %v2868 = vunpack.c.l.b16 %v1813
        %v2869 = vunpack.c.h.b16 %v1813
        %v2870 = vunpack.c.l.b16 %v1814
        %v2871 = vunpack.c.h.b16 %v1814
        %v2872 = vunpack.c.l.b16 %v1815
        %v2873 = vunpack.c.h.b16 %v1815
        %v2874 = vunpack.c.l.b16 %v1816
        %v2875 = vunpack.c.h.b16 %v1816
        %v2876 = vunpack.c.l.b16 %v1817
        %v2877 = vunpack.c.h.b16 %v1817
        %v2878 = vunpack.c.l.b16 %v1818
        %v2879 = vunpack.c.h.b16 %v1818
        %v2880 = vunpack.c.l.b16 %v1819
        %v2881 = vunpack.c.h.b16 %v1819
        %v2882 = vunpack.c.l.b16 %v1820
        %v2883 = vunpack.c.h.b16 %v1820
        %v2884 = vunpack.c.l.b16 %v1821
        %v2885 = vunpack.c.h.b16 %v1821
        %v2886 = vunpack.c.l.b16 %v1822
        %v2887 = vunpack.c.h.b16 %v1822
        %v2888 = vunpack.c.l.b16 %v1823
        %v2889 = vunpack.c.h.b16 %v1823
        %v2890 = vunpack.c.l.b16 %v1824
        %v2891 = vunpack.c.h.b16 %v1824
        %v2892 = vunpack.c.l.b16 %v1825
        %v2893 = vunpack.c.h.b16 %v1825
        %v2894 = vunpack.c.l.b16 %v1826
        %v2895 = vunpack.c.h.b16 %v1826
        %v2896 = vunpack.c.l.b16 %v1827
        %v2897 = vunpack.c.h.b16 %v1827
        %v2898 = vunpack.c.l.b16 %v1828
        %v2899 = vunpack.c.h.b16 %v1828
        %v2900 = vunpack.c.l.b16 %v1829
        %v2901 = vunpack.c.h.b16 %v1829
        %v2902 = vunpack.c.l.b16 %v1830
        %v2903 = vunpack.c.h.b16 %v1830
        %v2904 = vunpack.c.l.b16 %v1831
        %v2905 = vunpack.c.h.b16 %v1831
        %v2906 = vunpack.c.l.b16 %v1832
        %v2907 = vunpack.c.h.b16 %v1832
        %v2908 = vunpack.c.l.b16 %v1833
        %v2909 = vunpack.c.h.b16 %v1833
        %v2910 = vunpack.c.l.b16 %v1834
        %v2911 = vunpack.c.h.b16 %v1834
        %v2912 = vunpack.c.l.b16 %v1835
        %v2913 = vunpack.c.h.b16 %v1835
        %v2914 = vunpack.c.l.b16 %v1836
        %v2915 = vunpack.c.h.b16 %v1836
        %v2916 = vunpack.c.l.b16 %v1837
        %v2917 = vunpack.c.h.b16 %v1837
        %v2918 = vunpack.c.l.b16 %v1838
        %v2919 = vunpack.c.h.b16 %v1838
        %v2920 = vunpack.c.l.b16 %v1839
        %v2921 = vunpack.c.h.b16 %v1839
        %v2922 = vunpack.c.l.b16 %v1840
        %v2923 = vunpack.c.h.b16 %v1840
        %v2924 = vunpack.c.l.b16 %v1841
        %v2925 = vunpack.c.h.b16 %v1841
        %v2926 = vunpack.c.l.b16 %v1842
        %v2927 = vunpack.c.h.b16 %v1842
        %v2928 = vunpack.c.l.b16 %v1843
        %v2929 = vunpack.c.h.b16 %v1843
        %v2930 = vunpack.c.l.b16 %v1844
        %v2931 = vunpack.c.h.b16 %v1844
        %v2932 = vunpack.c.l.b16 %v1845
        %v2933 = vunpack.c.h.b16 %v1845
        %v2934 = vunpack.c.l.b16 %v1846
        %v2935 = vunpack.c.h.b16 %v1846
        %v2936 = vunpack.c.l.b16 %v1847
        %v2937 = vunpack.c.h.b16 %v1847
        %v2938 = vunpack.c.l.b16 %v1848
        %v2939 = vunpack.c.h.b16 %v1848
        %v2940 = vunpack.c.l.b16 %v1849
        %v2941 = vunpack.c.h.b16 %v1849
        %v2942 = vunpack.c.l.b16 %v1850
        %v2943 = vunpack.c.h.b16 %v1850
        %v2944 = vunpack.c.l.b16 %v1851
        %v2945 = vunpack.c.h.b16 %v1851
        %v2946 = vunpack.c.l.b16 %v1852
        %v2947 = vunpack.c.h.b16 %v1852
        %v2948 = vunpack.c.l.b16 %v1853
        %v2949 = vunpack.c.h.b16 %v1853
        %v2950 = vunpack.c.l.b16 %v1854
        %v2951 = vunpack.c.h.b16 %v1854
        %v2952 = vunpack.c.l.b16 %v1855
        %v2953 = vunpack.c.h.b16 %v1855
        %v2954 = vunpack.c.l.b16 %v1856
        %v2955 = vunpack.c.h.b16 %v1856
        %v2956 = vunpack.c.l.b16 %v1857
        %v2957 = vunpack.c.h.b16 %v1857
        %v2958 = vunpack.c.l.b16 %v1858
        %v2959 = vunpack.c.h.b16 %v1858
        %v2960 = vunpack.c.l.b16 %v1859
        %v2961 = vunpack.c.h.b16 %v1859
        %v2962 = vunpack.c.l.b16 %v1860
        %v2963 = vunpack.c.h.b16 %v1860
        %v2964 = vunpack.c.l.b16 %v1861
        %v2965 = vunpack.c.h.b16 %v1861
        %v2966 = vunpack.c.l.b16 %v1862
        %v2967 = vunpack.c.h.b16 %v1862
        %v2968 = vunpack.c.l.b16 %v1863
        %v2969 = vunpack.c.h.b16 %v1863
        %v2970 = vunpack.c.l.b16 %v1864
        %v2971 = vunpack.c.h.b16 %v1864
        %v2972 = vunpack.c.l.b16 %v1865
        %v2973 = vunpack.c.h.b16 %v1865
        %v2974 = vunpack.c.l.b16 %v1866
        %v2975 = vunpack.c.h.b16 %v1866
        %v2976 = vunpack.c.l.b16 %v1867
        %v2977 = vunpack.c.h.b16 %v1867
        %v2978 = vunpack.c.l.b16 %v1868
        %v2979 = vunpack.c.h.b16 %v1868
        %v2980 = vunpack.c.l.b16 %v1869
        %v2981 = vunpack.c.h.b16 %v1869
        %v2982 = vunpack.c.l.b16 %v1870
        %v2983 = vunpack.c.h.b16 %v1870
        %v2984 = vunpack.c.l.b16 %v1871
        %v2985 = vunpack.c.h.b16 %v1871
        %v2986 = vunpack.c.l.b16 %v1872
        %v2987 = vunpack.c.h.b16 %v1872
        %v2988 = vunpack.c.l.b16 %v1873
        %v2989 = vunpack.c.h.b16 %v1873
        %v2990 = vunpack.c.l.b16 %v1874
        %v2991 = vunpack.c.h.b16 %v1874
        %v2992 = vunpack.c.l.b16 %v1875
        %v2993 = vunpack.c.h.b16 %v1875
        %v2994 = vunpack.c.l.b16 %v1876
        %v2995 = vunpack.c.h.b16 %v1876
        %v2996 = vunpack.c.l.b16 %v1877
        %v2997 = vunpack.c.h.b16 %v1877
        %v2998 = vunpack.c.l.b16 %v1878
        %v2999 = vunpack.c.h.b16 %v1878
        %v3000 = vunpack.c.l.b16 %v1879
        %v3001 = vunpack.c.h.b16 %v1879
        %v3002 = vunpack.c.l.b16 %v1880
        %v3003 = vunpack.c.h.b16 %v1880
        %v3004 = vunpack.c.l.b16 %v1881
        %v3005 = vunpack.c.h.b16 %v1881
        %v3006 = vunpack.c.l.b16 %v1882
        %v3007 = vunpack.c.h.b16 %v1882
        %v3008 = vunpack.c.l.b16 %v1883
        %v3009 = vunpack.c.h.b16 %v1883
        %v3010 = vunpack.c.l.b16 %v1884
        %v3011 = vunpack.c.h.b16 %v1884
        %v3012 = vunpack.c.l.b16 %v1885
        %v3013 = vunpack.c.h.b16 %v1885
        %v3014 = vunpack.c.l.b16 %v1886
        %v3015 = vunpack.c.h.b16 %v1886
        %v3016 = vunpack.c.l.b16 %v1887
        %v3017 = vunpack.c.h.b16 %v1887
        %v3018 = vunpack.c.l.b16 %v1888
        %v3019 = vunpack.c.h.b16 %v1888
        %v3020 = vunpack.c.l.b16 %v1889
        %v3021 = vunpack.c.h.b16 %v1889
        %v3022 = vunpack.c.l.b16 %v1890
        %v3023 = vunpack.c.h.b16 %v1890
        %v3024 = vunpack.c.l.b16 %v1891
        %v3025 = vunpack.c.h.b16 %v1891
        %v3026 = vunpack.c.l.b16 %v1892
        %v3027 = vunpack.c.h.b16 %v1892
        %v3028 = vunpack.c.l.b16 %v1893
        %v3029 = vunpack.c.h.b16 %v1893
        %v3030 = vunpack.c.l.b16 %v1894
        %v3031 = vunpack.c.h.b16 %v1894
        %v3032 = vunpack.c.l.b16 %v1895
        %v3033 = vunpack.c.h.b16 %v1895
        %v3034 = vunpack.c.l.b16 %v1896
        %v3035 = vunpack.c.h.b16 %v1896
        %v3036 = vunpack.c.l.b16 %v1897
        %v3037 = vunpack.c.h.b16 %v1897
        %v3038 = vunpack.c.l.b16 %v1898
        %v3039 = vunpack.c.h.b16 %v1898
        %v3040 = vunpack.c.l.b16 %v1899
        %v3041 = vunpack.c.h.b16 %v1899
        %v3042 = vunpack.c.l.b16 %v1900
        %v3043 = vunpack.c.h.b16 %v1900
        %v3044 = vunpack.c.l.b16 %v1901
        %v3045 = vunpack.c.h.b16 %v1901
        %v3046 = vunpack.c.l.b16 %v1902
        %v3047 = vunpack.c.h.b16 %v1902
        %v3048 = vunpack.c.l.b16 %v1903
        %v3049 = vunpack.c.h.b16 %v1903
        %v3050 = vunpack.c.l.b16 %v1904
        %v3051 = vunpack.c.h.b16 %v1904
        %v3052 = vunpack.c.l.b16 %v1905
        %v3053 = vunpack.c.h.b16 %v1905
        %v3054 = vunpack.c.l.b16 %v1906
        %v3055 = vunpack.c.h.b16 %v1906
        %v3056 = vunpack.c.l.b16 %v1907
        %v3057 = vunpack.c.h.b16 %v1907
        %v3058 = vunpack.c.l.b16 %v1908
        %v3059 = vunpack.c.h.b16 %v1908
        %v3060 = vunpack.c.l.b16 %v1909
        %v3061 = vunpack.c.h.b16 %v1909
        %v3062 = vunpack.c.l.b16 %v1910
        %v3063 = vunpack.c.h.b16 %v1910
        %v3064 = vunpack.c.l.b16 %v1911
        %v3065 = vunpack.c.h.b16 %v1911
        %v3066 = vunpack.c.l.b16 %v1912
        %v3067 = vunpack.c.h.b16 %v1912
        %v3068 = vunpack.c.l.b16 %v1913
        %v3069 = vunpack.c.h.b16 %v1913
        %v3070 = vunpack.c.l.b16 %v1914
        %v3071 = vunpack.c.h.b16 %v1914
        %v3072 = vunpack.c.l.b16 %v1915
        %v3073 = vunpack.c.h.b16 %v1915
        %v3074 = vunpack.c.l.b16 %v1916
        %v3075 = vunpack.c.h.b16 %v1916
        %v3076 = vunpack.c.l.b16 %v1917
        %v3077 = vunpack.c.h.b16 %v1917
        %v3078 = vunpack.c.l.b16 %v1918
        %v3079 = vunpack.c.h.b16 %v1918
        %v3080 = vunpack.c.l.b16 %v1919
        %v3081 = vunpack.c.h.b16 %v1919
        %v3082 = vunpack.c.l.b16 %v1920
        %v3083 = vunpack.c.h.b16 %v1920
        %v3084 = vunpack.c.l.b16 %v1921
        %v3085 = vunpack.c.h.b16 %v1921
        %v3086 = vunpack.c.l.b16 %v1922
        %v3087 = vunpack.c.h.b16 %v1922
        %v3088 = vunpack.c.l.b16 %v1923
        %v3089 = vunpack.c.h.b16 %v1923
        %v3090 = vunpack.c.l.b16 %v1924
        %v3091 = vunpack.c.h.b16 %v1924
        %v3092 = vunpack.c.l.b16 %v1925
        %v3093 = vunpack.c.h.b16 %v1925
        %v3094 = vunpack.c.l.b16 %v1926
        %v3095 = vunpack.c.h.b16 %v1926
        %v3096 = vunpack.c.l.b16 %v1927
        %v3097 = vunpack.c.h.b16 %v1927
        %v3098 = vunpack.c.l.b16 %v1928
        %v3099 = vunpack.c.h.b16 %v1928
        %v3100 = vunpack.c.l.b16 %v1929
        %v3101 = vunpack.c.h.b16 %v1929
        %v3102 = vunpack.c.l.b16 %v1930
        %v3103 = vunpack.c.h.b16 %v1930
        %v3104 = vunpack.c.l.b16 %v1931
        %v3105 = vunpack.c.h.b16 %v1931
        %v3106 = vunpack.c.l.b16 %v1932
        %v3107 = vunpack.c.h.b16 %v1932
        %v3108 = vunpack.c.l.b16 %v1933
        %v3109 = vunpack.c.h.b16 %v1933
        %v3110 = vunpack.c.l.b16 %v1934
        %v3111 = vunpack.c.h.b16 %v1934
        %v3112 = vunpack.c.l.b16 %v1935
        %v3113 = vunpack.c.h.b16 %v1935
        %v3114 = vunpack.c.l.b16 %v1936
        %v3115 = vunpack.c.h.b16 %v1936
        %v3116 = vunpack.c.l.b16 %v1937
        %v3117 = vunpack.c.h.b16 %v1937
        %v3118 = vunpack.c.l.b16 %v1938
        %v3119 = vunpack.c.h.b16 %v1938
        %v3120 = vunpack.c.l.b16 %v1939
        %v3121 = vunpack.c.h.b16 %v1939
        %v3122 = vunpack.c.l.b16 %v1940
        %v3123 = vunpack.c.h.b16 %v1940
        %v3124 = vunpack.c.l.b16 %v1941
        %v3125 = vunpack.c.h.b16 %v1941
        %v3126 = vunpack.c.l.b16 %v1942
        %v3127 = vunpack.c.h.b16 %v1942
        %v3128 = vunpack.c.l.b16 %v1943
        %v3129 = vunpack.c.h.b16 %v1943
        %v3130 = vunpack.c.l.b16 %v1944
        %v3131 = vunpack.c.h.b16 %v1944
        %v3132 = vunpack.c.l.b16 %v1945
        %v3133 = vunpack.c.h.b16 %v1945
        %v3134 = vunpack.c.l.b16 %v1946
        %v3135 = vunpack.c.h.b16 %v1946
        %v3136 = vunpack.c.l.b16 %v1947
        %v3137 = vunpack.c.h.b16 %v1947
        %v3138 = vunpack.c.l.b16 %v1948
        %v3139 = vunpack.c.h.b16 %v1948
        %v3140 = vunpack.c.l.b16 %v1949
        %v3141 = vunpack.c.h.b16 %v1949
        %v3142 = vunpack.c.l.b16 %v1950
        %v3143 = vunpack.c.h.b16 %v1950
        %v3144 = vunpack.c.l.b16 %v1951
        %v3145 = vunpack.c.h.b16 %v1951
        %v3146 = vunpack.c.l.b16 %v1952
        %v3147 = vunpack.c.h.b16 %v1952
        %v3148 = vunpack.c.l.b16 %v1953
        %v3149 = vunpack.c.h.b16 %v1953
        %v3150 = vunpack.c.l.b16 %v1954
        %v3151 = vunpack.c.h.b16 %v1954
        %v3152 = vunpack.c.l.b16 %v1955
        %v3153 = vunpack.c.h.b16 %v1955
        %v3154 = vunpack.c.l.b16 %v1956
        %v3155 = vunpack.c.h.b16 %v1956
        %v3156 = vunpack.c.l.b16 %v1957
        %v3157 = vunpack.c.h.b16 %v1957
        %v3158 = vunpack.c.l.b16 %v1958
        %v3159 = vunpack.c.h.b16 %v1958
        %v3160 = vunpack.c.l.b16 %v1959
        %v3161 = vunpack.c.h.b16 %v1959
        %v3162 = vunpack.c.l.b16 %v1960
        %v3163 = vunpack.c.h.b16 %v1960
        %v3164 = vunpack.c.l.b16 %v1961
        %v3165 = vunpack.c.h.b16 %v1961
        %v3166 = vunpack.c.l.b16 %v1962
        %v3167 = vunpack.c.h.b16 %v1962
        %v3168 = vunpack.c.l.b16 %v1963
        %v3169 = vunpack.c.h.b16 %v1963
        %v3170 = vunpack.c.l.b16 %v1964
        %v3171 = vunpack.c.h.b16 %v1964
        %v3172 = vunpack.c.l.b16 %v1965
        %v3173 = vunpack.c.h.b16 %v1965
        %v3174 = vunpack.c.l.b16 %v1966
        %v3175 = vunpack.c.h.b16 %v1966
        %v3176 = vunpack.c.l.b16 %v1967
        %v3177 = vunpack.c.h.b16 %v1967
        %v3178 = vunpack.c.l.b16 %v1968
        %v3179 = vunpack.c.h.b16 %v1968
        %v3180 = vunpack.c.l.b16 %v1969
        %v3181 = vunpack.c.h.b16 %v1969
        %v3182 = vunpack.c.l.b16 %v1970
        %v3183 = vunpack.c.h.b16 %v1970
        %v3184 = vunpack.c.l.b16 %v1971
        %v3185 = vunpack.c.h.b16 %v1971
        %v3186 = vunpack.c.l.b16 %v1972
        %v3187 = vunpack.c.h.b16 %v1972
        %v3188 = vunpack.c.l.b16 %v1973
        %v3189 = vunpack.c.h.b16 %v1973
        %v3190 = vunpack.c.l.b16 %v1974
        %v3191 = vunpack.c.h.b16 %v1974
        %v3192 = vunpack.c.l.b16 %v1975
        %v3193 = vunpack.c.h.b16 %v1975
        %v3194 = vunpack.c.l.b16 %v1976
        %v3195 = vunpack.c.h.b16 %v1976
        %v3196 = vunpack.c.l.b16 %v1977
        %v3197 = vunpack.c.h.b16 %v1977
        %v3198 = vunpack.c.l.b16 %v1978
        %v3199 = vunpack.c.h.b16 %v1978
        %v3200 = vunpack.c.l.b16 %v1979
        %v3201 = vunpack.c.h.b16 %v1979
        %v3202 = vunpack.c.l.b16 %v1980
        %v3203 = vunpack.c.h.b16 %v1980
        %v3204 = vunpack.c.l.b16 %v1981
        %v3205 = vunpack.c.h.b16 %v1981
        %v3206 = vunpack.c.l.b16 %v1982
        %v3207 = vunpack.c.h.b16 %v1982
        %v3208 = vunpack.c.l.b16 %v1983
        %v3209 = vunpack.c.h.b16 %v1983
        %v3210 = vunpack.c.l.b16 %v1984
        %v3211 = vunpack.c.h.b16 %v1984
        %v3212 = vunpack.c.l.b16 %v1985
        %v3213 = vunpack.c.h.b16 %v1985
        %v3214 = vunpack.c.l.b16 %v1986
        %v3215 = vunpack.c.h.b16 %v1986
        %v3216 = vunpack.c.l.b16 %v1987
        %v3217 = vunpack.c.h.b16 %v1987
        %v3218 = vunpack.c.l.b16 %v1988
        %v3219 = vunpack.c.h.b16 %v1988
        %v3220 = vunpack.c.l.b16 %v1989
        %v3221 = vunpack.c.h.b16 %v1989
        %v3222 = vunpack.c.l.b16 %v1990
        %v3223 = vunpack.c.h.b16 %v1990
        %v3224 = vunpack.c.l.b16 %v1991
        %v3225 = vunpack.c.h.b16 %v1991
        %v3226 = vunpack.c.l.b16 %v1992
        %v3227 = vunpack.c.h.b16 %v1992
        %v3228 = vunpack.c.l.b16 %v1993
        %v3229 = vunpack.c.h.b16 %v1993
        %v3230 = vunpack.c.l.b16 %v1994
        %v3231 = vunpack.c.h.b16 %v1994
        %v3232 = vunpack.c.l.b16 %v1995
        %v3233 = vunpack.c.h.b16 %v1995
        %v3234 = vunpack.c.l.b16 %v1996
        %v3235 = vunpack.c.h.b16 %v1996
        %v3236 = vunpack.c.l.b16 %v1997
        %v3237 = vunpack.c.h.b16 %v1997
        %v3238 = vunpack.c.l.b16 %v1998
        %v3239 = vunpack.c.h.b16 %v1998
        %v3240 = vunpack.c.l.b16 %v1999
        %v3241 = vunpack.c.h.b16 %v1999
        %v3242 = vunpack.c.l.b16 %v2000
        %v3243 = vunpack.c.h.b16 %v2000
        %v3244 = vunpack.c.l.b16 %v2001
        %v3245 = vunpack.c.h.b16 %v2001
        %v3246 = vunpack.c.l.b16 %v2002
        %v3247 = vunpack.c.h.b16 %v2002
        %v3248 = vunpack.c.l.b16 %v2003
        %v3249 = vunpack.c.h.b16 %v2003
        %v3250 = vunpack.c.l.b16 %v2004
        %v3251 = vunpack.c.h.b16 %v2004
        %v3252 = vunpack.c.l.b16 %v2005
        %v3253 = vunpack.c.h.b16 %v2005
        %v3254 = vpack.c.b16 %v2424, %v2422
        %v3255 = vpack.c.b16 %v2425, %v2423
        %v3256 = vpack.c.b16 %v2428, %v2426
        %v3257 = vpack.c.b16 %v2429, %v2427
        %v3258 = vpack.c.b16 %v2432, %v2430
        %v3259 = vpack.c.b16 %v2433, %v2431
        %v3260 = vpack.c.b16 %v2436, %v2434
        %v3261 = vpack.c.b16 %v2437, %v2435
        %v3262 = vpack.c.b16 %v2440, %v2438
        %v3263 = vpack.c.b16 %v2441, %v2439
        %v3264 = vpack.c.b16 %v2444, %v2442
        %v3265 = vpack.c.b16 %v2445, %v2443
        %v3266 = vpack.c.b16 %v2448, %v2446
        %v3267 = vpack.c.b16 %v2449, %v2447
        %v3268 = vpack.c.b16 %v2452, %v2450
        %v3269 = vpack.c.b16 %v2453, %v2451
        %v3270 = vpack.c.b16 %v2456, %v2454
        %v3271 = vpack.c.b16 %v2457, %v2455
        %v3272 = vpack.c.b16 %v2460, %v2458
        %v3273 = vpack.c.b16 %v2461, %v2459
        %v3274 = vpack.c.b16 %v2464, %v2462
        %v3275 = vpack.c.b16 %v2465, %v2463
        %v3276 = vpack.c.b16 %v2468, %v2466
        %v3277 = vpack.c.b16 %v2469, %v2467
        %v3278 = vpack.c.b16 %v2472, %v2470
        %v3279 = vpack.c.b16 %v2473, %v2471
        %v3280 = vpack.c.b16 %v2476, %v2474
        %v3281 = vpack.c.b16 %v2477, %v2475
        %v3282 = vpack.c.b16 %v2480, %v2478
        %v3283 = vpack.c.b16 %v2481, %v2479
        %v3284 = vpack.c.b16 %v2484, %v2482
        %v3285 = vpack.c.b16 %v2485, %v2483
        %v3286 = vpack.c.b16 %v2488, %v2486
        %v3287 = vpack.c.b16 %v2489, %v2487
        %v3288 = vpack.c.b16 %v2492, %v2490
        %v3289 = vpack.c.b16 %v2493, %v2491
        %v3290 = vpack.c.b16 %v2496, %v2494
        %v3291 = vpack.c.b16 %v2497, %v2495
        %v3292 = vpack.c.b16 %v2500, %v2498
        %v3293 = vpack.c.b16 %v2501, %v2499
        %v3294 = vpack.c.b16 %v2504, %v2502
        %v3295 = vpack.c.b16 %v2505, %v2503
        %v3296 = vpack.c.b16 %v2508, %v2506
        %v3297 = vpack.c.b16 %v2509, %v2507
        %v3298 = vpack.c.b16 %v2512, %v2510
        %v3299 = vpack.c.b16 %v2513, %v2511
        %v3300 = vpack.c.b16 %v2516, %v2514
        %v3301 = vpack.c.b16 %v2517, %v2515
        %v3302 = vpack.c.b16 %v2520, %v2518
        %v3303 = vpack.c.b16 %v2521, %v2519
        %v3304 = vpack.c.b16 %v2524, %v2522
        %v3305 = vpack.c.b16 %v2525, %v2523
        %v3306 = vpack.c.b16 %v2528, %v2526
        %v3307 = vpack.c.b16 %v2529, %v2527
        %v3308 = vpack.c.b16 %v2532, %v2530
        %v3309 = vpack.c.b16 %v2533, %v2531
        %v3310 = vpack.c.b16 %v2536, %v2534
        %v3311 = vpack.c.b16 %v2537, %v2535
        %v3312 = vpack.c.b16 %v2540, %v2538
        %v3313 = vpack.c.b16 %v2541, %v2539
        %v3314 = vpack.c.b16 %v2544, %v2542
        %v3315 = vpack.c.b16 %v2545, %v2543
        %v3316 = vpack.c.b16 %v2548, %v2546
        %v3317 = vpack.c.b16 %v2549, %v2547
        %v3318 = vpack.c.b16 %v2552, %v2550
        %v3319 = vpack.c.b16 %v2553, %v2551
        %v3320 = vpack.c.b16 %v2556, %v2554
        %v3321 = vpack.c.b16 %v2557, %v2555
        %v3322 = vpack.c.b16 %v2560, %v2558
        %v3323 = vpack.c.b16 %v2561, %v2559
        %v3324 = vpack.c.b16 %v2564, %v2562
        %v3325 = vpack.c.b16 %v2565, %v2563
        %v3326 = vpack.c.b16 %v2568, %v2566
        %v3327 = vpack.c.b16 %v2569, %v2567
        %v3328 = vpack.c.b16 %v2572, %v2570
        %v3329 = vpack.c.b16 %v2573, %v2571
        %v3330 = vpack.c.b16 %v2576, %v2574
        %v3331 = vpack.c.b16 %v2577, %v2575
        %v3332 = vpack.c.b16 %v2580, %v2578
        %v3333 = vpack.c.b16 %v2581, %v2579
        %v3334 = vpack.c.b16 %v2584, %v2582
        %v3335 = vpack.c.b16 %v2585, %v2583
        %v3336 = vpack.c.b16 %v2588, %v2586
        %v3337 = vpack.c.b16 %v2589, %v2587
        %v3338 = vpack.c.b16 %v2592, %v2590
        %v3339 = vpack.c.b16 %v2593, %v2591
        %v3340 = vpack.c.b16 %v2596, %v2594
        %v3341 = vpack.c.b16 %v2597, %v2595
        %v3342 = vpack.c.b16 %v2600, %v2598
        %v3343 = vpack.c.b16 %v2601, %v2599
        %v3344 = vpack.c.b16 %v2604, %v2602
        %v3345 = vpack.c.b16 %v2605, %v2603
        %v3346 = vpack.c.b16 %v2608, %v2606
        %v3347 = vpack.c.b16 %v2609, %v2607
        %v3348 = vpack.c.b16 %v2612, %v2610
        %v3349 = vpack.c.b16 %v2613, %v2611
        %v3350 = vpack.c.b16 %v2616, %v2614
        %v3351 = vpack.c.b16 %v2617, %v2615
        %v3352 = vpack.c.b16 %v2620, %v2618
        %v3353 = vpack.c.b16 %v2621, %v2619
        %v3354 = vpack.c.b16 %v2624, %v2622
        %v3355 = vpack.c.b16 %v2625, %v2623
        %v3356 = vpack.c.b16 %v2628, %v2626
        %v3357 = vpack.c.b16 %v2629, %v2627
        %v3358 = vpack.c.b16 %v2632, %v2630
        %v3359 = vpack.c.b16 %v2633, %v2631
        %v3360 = vpack.c.b16 %v2636, %v2634
        %v3361 = vpack.c.b16 %v2637, %v2635
        %v3362 = vpack.c.b16 %v2640, %v2638
        %v3363 = vpack.c.b16 %v2641, %v2639
        %v3364 = vpack.c.b16 %v2644, %v2642
        %v3365 = vpack.c.b16 %v2645, %v2643
        %v3366 = vpack.c.b16 %v2648, %v2646
        %v3367 = vpack.c.b16 %v2649, %v2647
        %v3368 = vpack.c.b16 %v2652, %v2650
        %v3369 = vpack.c.b16 %v2653, %v2651
        %v3370 = vpack.c.b16 %v2656, %v2654
        %v3371 = vpack.c.b16 %v2657, %v2655
        %v3372 = vpack.c.b16 %v2660, %v2658
        %v3373 = vpack.c.b16 %v2661, %v2659
        %v3374 = vpack.c.b16 %v2664, %v2662
        %v3375 = vpack.c.b16 %v2665, %v2663
        %v3376 = vpack.c.b16 %v2668, %v2666
        %v3377 = vpack.c.b16 %v2669, %v2667
        %v3378 = vpack.c.b16 %v2672, %v2670
        %v3379 = vpack.c.b16 %v2673, %v2671
        %v3380 = vpack.c.b16 %v2676, %v2674
        %v3381 = vpack.c.b16 %v2677, %v2675
        %v3382 = vpack.c.b16 %v2680, %v2678
        %v3383 = vpack.c.b16 %v2681, %v2679
        %v3384 = vpack.c.b16 %v2684, %v2682
        %v3385 = vpack.c.b16 %v2685, %v2683
        %v3386 = vpack.c.b16 %v2688, %v2686
        %v3387 = vpack.c.b16 %v2689, %v2687
        %v3388 = vpack.c.b16 %v2692, %v2690
        %v3389 = vpack.c.b16 %v2693, %v2691
        %v3390 = vpack.c.b16 %v2696, %v2694
        %v3391 = vpack.c.b16 %v2697, %v2695
        %v3392 = vpack.c.b16 %v2700, %v2698
        %v3393 = vpack.c.b16 %v2701, %v2699
        %v3394 = vpack.c.b16 %v2704, %v2702
        %v3395 = vpack.c.b16 %v2705, %v2703
        %v3396 = vpack.c.b16 %v2708, %v2706
        %v3397 = vpack.c.b16 %v2709, %v2707
        %v3398 = vpack.c.b16 %v2712, %v2710
        %v3399 = vpack.c.b16 %v2713, %v2711
        %v3400 = vpack.c.b16 %v2716, %v2714
        %v3401 = vpack.c.b16 %v2717, %v2715
        %v3402 = vpack.c.b16 %v2720, %v2718
        %v3403 = vpack.c.b16 %v2721, %v2719
        %v3404 = vpack.c.b16 %v2724, %v2722
        %v3405 = vpack.c.b16 %v2725, %v2723
        %v3406 = vpack.c.b16 %v2728, %v2726
        %v3407 = vpack.c.b16 %v2729, %v2727
        %v3408 = vpack.c.b16 %v2732, %v2730
        %v3409 = vpack.c.b16 %v2733, %v2731
        %v3410 = vpack.c.b16 %v2736, %v2734
        %v3411 = vpack.c.b16 %v2737, %v2735
        %v3412 = vpack.c.b16 %v2740, %v2738
        %v3413 = vpack.c.b16 %v2741, %v2739
        %v3414 = vpack.c.b16 %v2744, %v2742
        %v3415 = vpack.c.b16 %v2745, %v2743
        %v3416 = vpack.c.b16 %v2748, %v2746
        %v3417 = vpack.c.b16 %v2749, %v2747
        %v3418 = vpack.c.b16 %v2752, %v2750
        %v3419 = vpack.c.b16 %v2753, %v2751
        %v3420 = vpack.c.b16 %v2756, %v2754
        %v3421 = vpack.c.b16 %v2757, %v2755
        %v3422 = vpack.c.b16 %v2760, %v2758
        %v3423 = vpack.c.b16 %v2761, %v2759
        %v3424 = vpack.c.b16 %v2764, %v2762
        %v3425 = vpack.c.b16 %v2765, %v2763
        %v3426 = vpack.c.b16 %v2768, %v2766
        %v3427 = vpack.c.b16 %v2769, %v2767
        %v3428 = vpack.c.b16 %v2772, %v2770
        %v3429 = vpack.c.b16 %v2773, %v2771
        %v3430 = vpack.c.b16 %v2776, %v2774
        %v3431 = vpack.c.b16 %v2777, %v2775
        %v3432 = vpack.c.b16 %v2780, %v2778
        %v3433 = vpack.c.b16 %v2781, %v2779
        %v3434 = vpack.c.b16 %v2784, %v2782
        %v3435 = vpack.c.b16 %v2785, %v2783
        %v3436 = vpack.c.b16 %v2788, %v2786
        %v3437 = vpack.c.b16 %v2789, %v2787
        %v3438 = vpack.c.b16 %v2792, %v2790
        %v3439 = vpack.c.b16 %v2793, %v2791
        %v3440 = vpack.c.b16 %v2796, %v2794
        %v3441 = vpack.c.b16 %v2797, %v2795
        %v3442 = vpack.c.b16 %v2800, %v2798
        %v3443 = vpack.c.b16 %v2801, %v2799
        %v3444 = vpack.c.b16 %v2804, %v2802
        %v3445 = vpack.c.b16 %v2805, %v2803
        %v3446 = vpack.c.b16 %v2808, %v2806
        %v3447 = vpack.c.b16 %v2809, %v2807
        %v3448 = vpack.c.b16 %v2812, %v2810
        %v3449 = vpack.c.b16 %v2813, %v2811
        %v3450 = vpack.c.b16 %v2816, %v2814
        %v3451 = vpack.c.b16 %v2817, %v2815
        %v3452 = vpack.c.b16 %v2820, %v2818
        %v3453 = vpack.c.b16 %v2821, %v2819
        %v3454 = vpack.c.b16 %v2824, %v2822
        %v3455 = vpack.c.b16 %v2825, %v2823
        %v3456 = vpack.c.b16 %v2828, %v2826
        %v3457 = vpack.c.b16 %v2829, %v2827
        %v3458 = vpack.c.b16 %v2832, %v2830
        %v3459 = vpack.c.b16 %v2833, %v2831
        %v3460 = vpack.c.b16 %v2836, %v2834
        %v3461 = vpack.c.b16 %v2837, %v2835
        %v3462 = vpack.c.b16 %v2840, %v2838
        %v3463 = vpack.c.b16 %v2841, %v2839
        %v3464 = vpack.c.b16 %v2844, %v2842
        %v3465 = vpack.c.b16 %v2845, %v2843
        %v3466 = vpack.c.b16 %v2848, %v2846
        %v3467 = vpack.c.b16 %v2849, %v2847
        %v3468 = vpack.c.b16 %v2852, %v2850
        %v3469 = vpack.c.b16 %v2853, %v2851
        %v3470 = vpack.c.b16 %v2856, %v2854
        %v3471 = vpack.c.b16 %v2857, %v2855
        %v3472 = vpack.c.b16 %v2860, %v2858
        %v3473 = vpack.c.b16 %v2861, %v2859
        %v3474 = vpack.c.b16 %v2864, %v2862
        %v3475 = vpack.c.b16 %v2865, %v2863
        %v3476 = vpack.c.b16 %v2868, %v2866
        %v3477 = vpack.c.b16 %v2869, %v2867
        %v3478 = vpack.c.b16 %v2872, %v2870
        %v3479 = vpack.c.b16 %v2873, %v2871
        %v3480 = vpack.c.b16 %v2876, %v2874
        %v3481 = vpack.c.b16 %v2877, %v2875
        %v3482 = vpack.c.b16 %v2880, %v2878
        %v3483 = vpack.c.b16 %v2881, %v2879
        %v3484 = vpack.c.b16 %v2884, %v2882
        %v3485 = vpack.c.b16 %v2885, %v2883
        %v3486 = vpack.c.b16 %v2888, %v2886
        %v3487 = vpack.c.b16 %v2889, %v2887
        %v3488 = vpack.c.b16 %v2892, %v2890
        %v3489 = vpack.c.b16 %v2893, %v2891
        %v3490 = vpack.c.b16 %v2896, %v2894
        %v3491 = vpack.c.b16 %v2897, %v2895
        %v3492 = vpack.c.b16 %v2900, %v2898
        %v3493 = vpack.c.b16 %v2901, %v2899
        %v3494 = vpack.c.b16 %v2904, %v2902
        %v3495 = vpack.c.b16 %v2905, %v2903
        %v3496 = vpack.c.b16 %v2908, %v2906
        %v3497 = vpack.c.b16 %v2909, %v2907
        %v3498 = vpack.c.b16 %v2912, %v2910
        %v3499 = vpack.c.b16 %v2913, %v2911
        %v3500 = vpack.c.b16 %v2916, %v2914
        %v3501 = vpack.c.b16 %v2917, %v2915
        %v3502 = vpack.c.b16 %v2920, %v2918
        %v3503 = vpack.c.b16 %v2921, %v2919
        %v3504 = vpack.c.b16 %v2924, %v2922
        %v3505 = vpack.c.b16 %v2925, %v2923
        %v3506 = vpack.c.b16 %v2928, %v2926
        %v3507 = vpack.c.b16 %v2929, %v2927
        %v3508 = vpack.c.b16 %v2932, %v2930
        %v3509 = vpack.c.b16 %v2933, %v2931
        %v3510 = vpack.c.b16 %v2936, %v2934
        %v3511 = vpack.c.b16 %v2937, %v2935
        %v3512 = vpack.c.b16 %v2940, %v2938
        %v3513 = vpack.c.b16 %v2941, %v2939
        %v3514 = vpack.c.b16 %v2944, %v2942
        %v3515 = vpack.c.b16 %v2945, %v2943
        %v3516 = vpack.c.b16 %v2948, %v2946
        %v3517 = vpack.c.b16 %v2949, %v2947
        %v3518 = vpack.c.b16 %v2952, %v2950
        %v3519 = vpack.c.b16 %v2953, %v2951
        %v3520 = vpack.c.b16 %v2956, %v2954
        %v3521 = vpack.c.b16 %v2957, %v2955
        %v3522 = vpack.c.b16 %v2960, %v2958
        %v3523 = vpack.c.b16 %v2961, %v2959
        %v3524 = vpack.c.b16 %v2964, %v2962
        %v3525 = vpack.c.b16 %v2965, %v2963
        %v3526 = vpack.c.b16 %v2968, %v2966
        %v3527 = vpack.c.b16 %v2969, %v2967
        %v3528 = vpack.c.b16 %v2972, %v2970
        %v3529 = vpack.c.b16 %v2973, %v2971
        %v3530 = vpack.c.b16 %v2976, %v2974
        %v3531 = vpack.c.b16 %v2977, %v2975
        %v3532 = vpack.c.b16 %v2980, %v2978
        %v3533 = vpack.c.b16 %v2981, %v2979
        %v3534 = vpack.c.b16 %v2984, %v2982
        %v3535 = vpack.c.b16 %v2985, %v2983
        %v3536 = vpack.c.b16 %v2988, %v2986
        %v3537 = vpack.c.b16 %v2989, %v2987
        %v3538 = vpack.c.b16 %v2992, %v2990
        %v3539 = vpack.c.b16 %v2993, %v2991
        %v3540 = vpack.c.b16 %v2996, %v2994
        %v3541 = vpack.c.b16 %v2997, %v2995
        %v3542 = vpack.c.b16 %v3000, %v2998
        %v3543 = vpack.c.b16 %v3001, %v2999
        %v3544 = vpack.c.b16 %v3004, %v3002
        %v3545 = vpack.c.b16 %v3005, %v3003
        %v3546 = vpack.c.b16 %v3008, %v3006
        %v3547 = vpack.c.b16 %v3009, %v3007
        %v3548 = vpack.c.b16 %v3012, %v3010
        %v3549 = vpack.c.b16 %v3013, %v3011
        %v3550 = vpack.c.b16 %v3016, %v3014
        %v3551 = vpack.c.b16 %v3017, %v3015
        %v3552 = vpack.c.b16 %v3020, %v3018
        %v3553 = vpack.c.b16 %v3021, %v3019
        %v3554 = vpack.c.b16 %v3024, %v3022
        %v3555 = vpack.c.b16 %v3025, %v3023
        %v3556 = vpack.c.b16 %v3028, %v3026
        %v3557 = vpack.c.b16 %v3029, %v3027
        %v3558 = vpack.c.b16 %v3032, %v3030
        %v3559 = vpack.c.b16 %v3033, %v3031
        %v3560 = vpack.c.b16 %v3036, %v3034
        %v3561 = vpack.c.b16 %v3037, %v3035
        %v3562 = vpack.c.b16 %v3040, %v3038
        %v3563 = vpack.c.b16 %v3041, %v3039
        %v3564 = vpack.c.b16 %v3044, %v3042
        %v3565 = vpack.c.b16 %v3045, %v3043
        %v3566 = vpack.c.b16 %v3048, %v3046
        %v3567 = vpack.c.b16 %v3049, %v3047
        %v3568 = vpack.c.b16 %v3052, %v3050
        %v3569 = vpack.c.b16 %v3053, %v3051
        %v3570 = vpack.c.b16 %v3056, %v3054
        %v3571 = vpack.c.b16 %v3057, %v3055
        %v3572 = vpack.c.b16 %v3060, %v3058
        %v3573 = vpack.c.b16 %v3061, %v3059
        %v3574 = vpack.c.b16 %v3064, %v3062
        %v3575 = vpack.c.b16 %v3065, %v3063
        %v3576 = vpack.c.b16 %v3068, %v3066
        %v3577 = vpack.c.b16 %v3069, %v3067
        %v3578 = vpack.c.b16 %v3072, %v3070
        %v3579 = vpack.c.b16 %v3073, %v3071
        %v3580 = vpack.c.b16 %v3076, %v3074
        %v3581 = vpack.c.b16 %v3077, %v3075
        %v3582 = vpack.c.b16 %v3080, %v3078
        %v3583 = vpack.c.b16 %v3081, %v3079
        %v3584 = vpack.c.b16 %v3084, %v3082
        %v3585 = vpack.c.b16 %v3085, %v3083
        %v3586 = vpack.c.b16 %v3088, %v3086
        %v3587 = vpack.c.b16 %v3089, %v3087
        %v3588 = vpack.c.b16 %v3092, %v3090
        %v3589 = vpack.c.b16 %v3093, %v3091
        %v3590 = vpack.c.b16 %v3096, %v3094
        %v3591 = vpack.c.b16 %v3097, %v3095
        %v3592 = vpack.c.b16 %v3100, %v3098
        %v3593 = vpack.c.b16 %v3101, %v3099
        %v3594 = vpack.c.b16 %v3104, %v3102
        %v3595 = vpack.c.b16 %v3105, %v3103
        %v3596 = vpack.c.b16 %v3108, %v3106
        %v3597 = vpack.c.b16 %v3109, %v3107
        %v3598 = vpack.c.b16 %v3112, %v3110
        %v3599 = vpack.c.b16 %v3113, %v3111
        %v3600 = vpack.c.b16 %v3116, %v3114
        %v3601 = vpack.c.b16 %v3117, %v3115
        %v3602 = vpack.c.b16 %v3120, %v3118
        %v3603 = vpack.c.b16 %v3121, %v3119
        %v3604 = vpack.c.b16 %v3124, %v3122
        %v3605 = vpack.c.b16 %v3125, %v3123
        %v3606 = vpack.c.b16 %v3128, %v3126
        %v3607 = vpack.c.b16 %v3129, %v3127
        %v3608 = vpack.c.b16 %v3132, %v3130
        %v3609 = vpack.c.b16 %v3133, %v3131
        %v3610 = vpack.c.b16 %v3136, %v3134
        %v3611 = vpack.c.b16 %v3137, %v3135
        %v3612 = vpack.c.b16 %v3140, %v3138
        %v3613 = vpack.c.b16 %v3141, %v3139
        %v3614 = vpack.c.b16 %v3144, %v3142
        %v3615 = vpack.c.b16 %v3145, %v3143
        %v3616 = vpack.c.b16 %v3148, %v3146
        %v3617 = vpack.c.b16 %v3149, %v3147
        %v3618 = vpack.c.b16 %v3152, %v3150
        %v3619 = vpack.c.b16 %v3153, %v3151
        %v3620 = vpack.c.b16 %v3156, %v3154
        %v3621 = vpack.c.b16 %v3157, %v3155
        %v3622 = vpack.c.b16 %v3160, %v3158
        %v3623 = vpack.c.b16 %v3161, %v3159
        %v3624 = vpack.c.b16 %v3164, %v3162
        %v3625 = vpack.c.b16 %v3165, %v3163
        %v3626 = vpack.c.b16 %v3168, %v3166
        %v3627 = vpack.c.b16 %v3169, %v3167
        %v3628 = vpack.c.b16 %v3172, %v3170
        %v3629 = vpack.c.b16 %v3173, %v3171
        %v3630 = vpack.c.b16 %v3176, %v3174
        %v3631 = vpack.c.b16 %v3177, %v3175
        %v3632 = vpack.c.b16 %v3180, %v3178
        %v3633 = vpack.c.b16 %v3181, %v3179
        %v3634 = vpack.c.b16 %v3184, %v3182
        %v3635 = vpack.c.b16 %v3185, %v3183
        %v3636 = vpack.c.b16 %v3188, %v3186
        %v3637 = vpack.c.b16 %v3189, %v3187
        %v3638 = vpack.c.b16 %v3192, %v3190
        %v3639 = vpack.c.b16 %v3193, %v3191
        %v3640 = vpack.c.b16 %v3196, %v3194
        %v3641 = vpack.c.b16 %v3197, %v3195
        %v3642 = vpack.c.b16 %v3200, %v3198
        %v3643 = vpack.c.b16 %v3201, %v3199
        %v3644 = vpack.c.b16 %v3204, %v3202
        %v3645 = vpack.c.b16 %v3205, %v3203
        %v3646 = vpack.c.b16 %v3208, %v3206
        %v3647 = vpack.c.b16 %v3209, %v3207
        %v3648 = vpack.c.b16 %v3212, %v3210
        %v3649 = vpack.c.b16 %v3213, %v3211
        %v3650 = vpack.c.b16 %v3216, %v3214
        %v3651 = vpack.c.b16 %v3217, %v3215
        %v3652 = vpack.c.b16 %v3220, %v3218
        %v3653 = vpack.c.b16 %v3221, %v3219
        %v3654 = vpack.c.b16 %v3224, %v3222
        %v3655 = vpack.c.b16 %v3225, %v3223
        %v3656 = vpack.c.b16 %v3228, %v3226
        %v3657 = vpack.c.b16 %v3229, %v3227
        %v3658 = vpack.c.b16 %v3232, %v3230
        %v3659 = vpack.c.b16 %v3233, %v3231
        %v3660 = vpack.c.b16 %v3236, %v3234
        %v3661 = vpack.c.b16 %v3237, %v3235
        %v3662 = vpack.c.b16 %v3240, %v3238
        %v3663 = vpack.c.b16 %v3241, %v3239
        %v3664 = vpack.c.b16 %v3244, %v3242
        %v3665 = vpack.c.b16 %v3245, %v3243
        %v3666 = vpack.c.b16 %v3248, %v3246
        %v3667 = vpack.c.b16 %v3249, %v3247
        %v3668 = vpack.c.b16 %v3252, %v3250
        %v3669 = vpack.c.b16 %v3253, %v3251
        %4086 = vmatpush.bf16.msra.mxu0 %v3268
        %4087 = vmatpush.bf16.msra.mxu0 %v3266
        %4088 = vmatpush.bf16.msra.mxu0 %v3264
        %4089 = vmatpush.bf16.msra.mxu0 %v3262
        %4090 = vmatpush.bf16.msra.mxu0 %v3260
        %4091 = vmatpush.bf16.msra.mxu0 %v3258
        %4092 = vmatpush.bf16.msra.mxu0 %v3256
        %4093 = vmatpush.bf16.msra.mxu0 %v3254
        %4094 = vmatmul.bf16.gmra.mxu0 %v1522
        %v4095 = vpop.f32.mrf.mxu0
        %v4096 = vadd.f32 0.0, %v4095
        %v4097 = vpop.f32.mrf.mxu0
        %4098 = vdwg.mxu0
        %4099 = vmatpush.bf16.msra.mxu0 %v3284
        %4100 = vmatpush.bf16.msra.mxu0 %v3282
        %4101 = vmatpush.bf16.msra.mxu0 %v3280
        %4102 = vmatpush.bf16.msra.mxu0 %v3278
        %4103 = vmatpush.bf16.msra.mxu0 %v3276
        %4104 = vmatpush.bf16.msra.mxu0 %v3274
        %4105 = vmatpush.bf16.msra.mxu0 %v3272
        %4106 = vmatpush.bf16.msra.mxu0 %v3270
        %4107 = vmatmul.bf16.gmra.mxu0 %v1530
        %v4108 = vpop.f32.mrf.mxu0
        %v4109 = vadd.f32 %v4096, %v4108
        %v4110 = vpop.f32.mrf.mxu0
        %4111 = vdwg.mxu0
        %4112 = vmatpush.bf16.msra.mxu0 %v3300
        %4113 = vmatpush.bf16.msra.mxu0 %v3298
        %4114 = vmatpush.bf16.msra.mxu0 %v3296
        %4115 = vmatpush.bf16.msra.mxu0 %v3294
        %4116 = vmatpush.bf16.msra.mxu0 %v3292
        %4117 = vmatpush.bf16.msra.mxu0 %v3290
        %4118 = vmatpush.bf16.msra.mxu0 %v3288
        %4119 = vmatpush.bf16.msra.mxu0 %v3286
        %4120 = vmatmul.bf16.gmra.mxu0 %v1533
        %v4121 = vpop.f32.mrf.mxu0
        %v4122 = vadd.f32 %v4109, %v4121
        %v4123 = vpop.f32.mrf.mxu0
        %4124 = vdwg.mxu0
        %4125 = vmatpush.bf16.msra.mxu0 %v3316
        %4126 = vmatpush.bf16.msra.mxu0 %v3314
        %4127 = vmatpush.bf16.msra.mxu0 %v3312
        %4128 = vmatpush.bf16.msra.mxu0 %v3310
        %4129 = vmatpush.bf16.msra.mxu0 %v3308
        %4130 = vmatpush.bf16.msra.mxu0 %v3306
        %4131 = vmatpush.bf16.msra.mxu0 %v3304
        %4132 = vmatpush.bf16.msra.mxu0 %v3302
        %4133 = vmatmul.bf16.gmra.mxu0 %v1535
        %v4134 = vpop.f32.mrf.mxu0
        %v4135 = vadd.f32 %v4122, %v4134
        %v4136 = vpop.f32.mrf.mxu0
        %4137 = vdwg.mxu0
        %4138 = vmatpush.bf16.msra.mxu0 %v3332
        %4139 = vmatpush.bf16.msra.mxu0 %v3330
        %4140 = vmatpush.bf16.msra.mxu0 %v3328
        %4141 = vmatpush.bf16.msra.mxu0 %v3326
        %4142 = vmatpush.bf16.msra.mxu0 %v3324
        %4143 = vmatpush.bf16.msra.mxu0 %v3322
        %4144 = vmatpush.bf16.msra.mxu0 %v3320
        %4145 = vmatpush.bf16.msra.mxu0 %v3318
        %4146 = vmatmul.bf16.gmra.mxu0 %v1537
        %v4147 = vpop.f32.mrf.mxu0
        %v4148 = vadd.f32 %v4135, %v4147
        %v4149 = vpop.f32.mrf.mxu0
        %4150 = vdwg.mxu0
        %4151 = vmatpush.bf16.msra.mxu0 %v3348
        %4152 = vmatpush.bf16.msra.mxu0 %v3346
        %4153 = vmatpush.bf16.msra.mxu0 %v3344
        %4154 = vmatpush.bf16.msra.mxu0 %v3342
        %4155 = vmatpush.bf16.msra.mxu0 %v3340
        %4156 = vmatpush.bf16.msra.mxu0 %v3338
        %4157 = vmatpush.bf16.msra.mxu0 %v3336
        %4158 = vmatpush.bf16.msra.mxu0 %v3334
        %4159 = vmatmul.bf16.gmra.mxu0 %v1539
        %v4160 = vpop.f32.mrf.mxu0
        %v4161 = vadd.f32 %v4148, %v4160
        %v4162 = vpop.f32.mrf.mxu0
        %4163 = vdwg.mxu0
        %4164 = vmatpush.bf16.msra.mxu0 %v3364
        %4165 = vmatpush.bf16.msra.mxu0 %v3362
        %4166 = vmatpush.bf16.msra.mxu0 %v3360
        %4167 = vmatpush.bf16.msra.mxu0 %v3358
        %4168 = vmatpush.bf16.msra.mxu0 %v3356
        %4169 = vmatpush.bf16.msra.mxu0 %v3354
        %4170 = vmatpush.bf16.msra.mxu0 %v3352
        %4171 = vmatpush.bf16.msra.mxu0 %v3350
        %4172 = vmatmul.bf16.gmra.mxu0 %v1541
        %v4173 = vpop.f32.mrf.mxu0
        %v4174 = vadd.f32 %v4161, %v4173
        %v4175 = vpop.f32.mrf.mxu0
        %4176 = vdwg.mxu0
        %4177 = vmatpush.bf16.msra.mxu0 %v3380
        %4178 = vmatpush.bf16.msra.mxu0 %v3378
        %4179 = vmatpush.bf16.msra.mxu0 %v3376
        %4180 = vmatpush.bf16.msra.mxu0 %v3374
        %4181 = vmatpush.bf16.msra.mxu0 %v3372
        %4182 = vmatpush.bf16.msra.mxu0 %v3370
        %4183 = vmatpush.bf16.msra.mxu0 %v3368
        %4184 = vmatpush.bf16.msra.mxu0 %v3366
        %4185 = vmatmul.bf16.gmra.mxu0 %v1543
        %v4186 = vpop.f32.mrf.mxu0
        %v4187 = vadd.f32 %v4174, %v4186
        %v4188 = vpop.f32.mrf.mxu0
        %4189 = vdwg.mxu0
        %4190 = vmatpush.bf16.msra.mxu0 %v3396
        %4191 = vmatpush.bf16.msra.mxu0 %v3394
        %4192 = vmatpush.bf16.msra.mxu0 %v3392
        %4193 = vmatpush.bf16.msra.mxu0 %v3390
        %4194 = vmatpush.bf16.msra.mxu0 %v3388
        %4195 = vmatpush.bf16.msra.mxu0 %v3386
        %4196 = vmatpush.bf16.msra.mxu0 %v3384
        %4197 = vmatpush.bf16.msra.mxu0 %v3382
        %4198 = vmatmul.bf16.gmra.mxu0 %v1523
        %v4199 = vpop.f32.mrf.mxu0
        %v4200 = vadd.f32 %v4187, %v4199
        %v4201 = vpop.f32.mrf.mxu0
        %4202 = vdwg.mxu0
        %4203 = vmatpush.bf16.msra.mxu0 %v3412
        %4204 = vmatpush.bf16.msra.mxu0 %v3410
        %4205 = vmatpush.bf16.msra.mxu0 %v3408
        %4206 = vmatpush.bf16.msra.mxu0 %v3406
        %4207 = vmatpush.bf16.msra.mxu0 %v3404
        %4208 = vmatpush.bf16.msra.mxu0 %v3402
        %4209 = vmatpush.bf16.msra.mxu0 %v3400
        %4210 = vmatpush.bf16.msra.mxu0 %v3398
        %4211 = vmatmul.bf16.gmra.mxu0 %v1549
        %v4212 = vpop.f32.mrf.mxu0
        %v4213 = vadd.f32 %v4200, %v4212
        %v4214 = vpop.f32.mrf.mxu0
        %4215 = vdwg.mxu0
        %4216 = vmatpush.bf16.msra.mxu0 %v3428
        %4217 = vmatpush.bf16.msra.mxu0 %v3426
        %4218 = vmatpush.bf16.msra.mxu0 %v3424
        %4219 = vmatpush.bf16.msra.mxu0 %v3422
        %4220 = vmatpush.bf16.msra.mxu0 %v3420
        %4221 = vmatpush.bf16.msra.mxu0 %v3418
        %4222 = vmatpush.bf16.msra.mxu0 %v3416
        %4223 = vmatpush.bf16.msra.mxu0 %v3414
        %4224 = vmatmul.bf16.gmra.mxu0 %v1552
        %v4225 = vpop.f32.mrf.mxu0
        %v4226 = vadd.f32 %v4213, %v4225
        %v4227 = vpop.f32.mrf.mxu0
        %4228 = vdwg.mxu0
        %4229 = vmatpush.bf16.msra.mxu0 %v3444
        %4230 = vmatpush.bf16.msra.mxu0 %v3442
        %4231 = vmatpush.bf16.msra.mxu0 %v3440
        %4232 = vmatpush.bf16.msra.mxu0 %v3438
        %4233 = vmatpush.bf16.msra.mxu0 %v3436
        %4234 = vmatpush.bf16.msra.mxu0 %v3434
        %4235 = vmatpush.bf16.msra.mxu0 %v3432
        %4236 = vmatpush.bf16.msra.mxu0 %v3430
        %4237 = vmatmul.bf16.gmra.mxu0 %v1554
        %v4238 = vpop.f32.mrf.mxu0
        %v4239 = vadd.f32 %v4226, %v4238
        %v4240 = vpop.f32.mrf.mxu0
        %4241 = vdwg.mxu0
        %4242 = vmatpush.bf16.msra.mxu0 %v3460
        %4243 = vmatpush.bf16.msra.mxu0 %v3458
        %4244 = vmatpush.bf16.msra.mxu0 %v3456
        %4245 = vmatpush.bf16.msra.mxu0 %v3454
        %4246 = vmatpush.bf16.msra.mxu0 %v3452
        %4247 = vmatpush.bf16.msra.mxu0 %v3450
        %4248 = vmatpush.bf16.msra.mxu0 %v3448
        %4249 = vmatpush.bf16.msra.mxu0 %v3446
        %4250 = vmatmul.bf16.gmra.mxu0 %v1556
        %v4251 = vpop.f32.mrf.mxu0
        %v4252 = vadd.f32 %v4239, %v4251
        %v4253 = vpop.f32.mrf.mxu0
        %4254 = vdwg.mxu0
        %4255 = vmatpush.bf16.msra.mxu0 %v3476
        %4256 = vmatpush.bf16.msra.mxu0 %v3474
        %4257 = vmatpush.bf16.msra.mxu0 %v3472
        %4258 = vmatpush.bf16.msra.mxu0 %v3470
        %4259 = vmatpush.bf16.msra.mxu0 %v3468
        %4260 = vmatpush.bf16.msra.mxu0 %v3466
        %4261 = vmatpush.bf16.msra.mxu0 %v3464
        %4262 = vmatpush.bf16.msra.mxu0 %v3462
        %4263 = vmatmul.bf16.gmra.mxu0 %v1558
        %v4264 = vpop.f32.mrf.mxu0
        %v4265 = vadd.f32 %v4252, %v4264
        %v4266 = vpop.f32.mrf.mxu0
        %4267 = vdwg.mxu0
        %4268 = vmatpush.bf16.msra.mxu0 %v3492
        %4269 = vmatpush.bf16.msra.mxu0 %v3490
        %4270 = vmatpush.bf16.msra.mxu0 %v3488
        %4271 = vmatpush.bf16.msra.mxu0 %v3486
        %4272 = vmatpush.bf16.msra.mxu0 %v3484
        %4273 = vmatpush.bf16.msra.mxu0 %v3482
        %4274 = vmatpush.bf16.msra.mxu0 %v3480
        %4275 = vmatpush.bf16.msra.mxu0 %v3478
        %4276 = vmatmul.bf16.gmra.mxu0 %v1560
        %v4277 = vpop.f32.mrf.mxu0
        %v4278 = vadd.f32 %v4265, %v4277
        %v4279 = vpop.f32.mrf.mxu0
        %4280 = vdwg.mxu0
        %4281 = vmatpush.bf16.msra.mxu0 %v3508
        %4282 = vmatpush.bf16.msra.mxu0 %v3506
        %4283 = vmatpush.bf16.msra.mxu0 %v3504
        %4284 = vmatpush.bf16.msra.mxu0 %v3502
        %4285 = vmatpush.bf16.msra.mxu0 %v3500
        %4286 = vmatpush.bf16.msra.mxu0 %v3498
        %4287 = vmatpush.bf16.msra.mxu0 %v3496
        %4288 = vmatpush.bf16.msra.mxu0 %v3494
        %4289 = vmatmul.bf16.gmra.mxu0 %v1562
        %v4290 = vpop.f32.mrf.mxu0
        %v4291 = vadd.f32 %v4278, %v4290
        %v4292 = vpop.f32.mrf.mxu0
        %4293 = vdwg.mxu0
        %4294 = vmatpush.bf16.msra.mxu0 %v3524
        %4295 = vmatpush.bf16.msra.mxu0 %v3522
        %4296 = vmatpush.bf16.msra.mxu0 %v3520
        %4297 = vmatpush.bf16.msra.mxu0 %v3518
        %4298 = vmatpush.bf16.msra.mxu0 %v3516
        %4299 = vmatpush.bf16.msra.mxu0 %v3514
        %4300 = vmatpush.bf16.msra.mxu0 %v3512
        %4301 = vmatpush.bf16.msra.mxu0 %v3510
        %4302 = vmatmul.bf16.gmra.mxu0 %v1524
        %v4303 = vpop.f32.mrf.mxu0
        %v4304 = vadd.f32 %v4291, %v4303
        %v4305 = vpop.f32.mrf.mxu0
        %4306 = vdwg.mxu0
        %4307 = vmatpush.bf16.msra.mxu0 %v3540
        %4308 = vmatpush.bf16.msra.mxu0 %v3538
        %4309 = vmatpush.bf16.msra.mxu0 %v3536
        %4310 = vmatpush.bf16.msra.mxu0 %v3534
        %4311 = vmatpush.bf16.msra.mxu0 %v3532
        %4312 = vmatpush.bf16.msra.mxu0 %v3530
        %4313 = vmatpush.bf16.msra.mxu0 %v3528
        %4314 = vmatpush.bf16.msra.mxu0 %v3526
        %4315 = vmatmul.bf16.gmra.mxu0 %v1568
        %v4316 = vpop.f32.mrf.mxu0
        %v4317 = vadd.f32 %v4304, %v4316
        %v4318 = vpop.f32.mrf.mxu0
        %4319 = vdwg.mxu0
        %4320 = vmatpush.bf16.msra.mxu0 %v3556
        %4321 = vmatpush.bf16.msra.mxu0 %v3554
        %4322 = vmatpush.bf16.msra.mxu0 %v3552
        %4323 = vmatpush.bf16.msra.mxu0 %v3550
        %4324 = vmatpush.bf16.msra.mxu0 %v3548
        %4325 = vmatpush.bf16.msra.mxu0 %v3546
        %4326 = vmatpush.bf16.msra.mxu0 %v3544
        %4327 = vmatpush.bf16.msra.mxu0 %v3542
        %4328 = vmatmul.bf16.gmra.mxu0 %v1571
        %v4329 = vpop.f32.mrf.mxu0
        %v4330 = vadd.f32 %v4317, %v4329
        %v4331 = vpop.f32.mrf.mxu0
        %4332 = vdwg.mxu0
        %4333 = vmatpush.bf16.msra.mxu0 %v3572
        %4334 = vmatpush.bf16.msra.mxu0 %v3570
        %4335 = vmatpush.bf16.msra.mxu0 %v3568
        %4336 = vmatpush.bf16.msra.mxu0 %v3566
        %4337 = vmatpush.bf16.msra.mxu0 %v3564
        %4338 = vmatpush.bf16.msra.mxu0 %v3562
        %4339 = vmatpush.bf16.msra.mxu0 %v3560
        %4340 = vmatpush.bf16.msra.mxu0 %v3558
        %4341 = vmatmul.bf16.gmra.mxu0 %v1573
        %v4342 = vpop.f32.mrf.mxu0
        %v4343 = vadd.f32 %v4330, %v4342
        %v4344 = vpop.f32.mrf.mxu0
        %4345 = vdwg.mxu0
        %4346 = vmatpush.bf16.msra.mxu0 %v3588
        %4347 = vmatpush.bf16.msra.mxu0 %v3586
        %4348 = vmatpush.bf16.msra.mxu0 %v3584
        %4349 = vmatpush.bf16.msra.mxu0 %v3582
        %4350 = vmatpush.bf16.msra.mxu0 %v3580
        %4351 = vmatpush.bf16.msra.mxu0 %v3578
        %4352 = vmatpush.bf16.msra.mxu0 %v3576
        %4353 = vmatpush.bf16.msra.mxu0 %v3574
        %4354 = vmatmul.bf16.gmra.mxu0 %v1575
        %v4355 = vpop.f32.mrf.mxu0
        %v4356 = vadd.f32 %v4343, %v4355
        %v4357 = vpop.f32.mrf.mxu0
        %4358 = vdwg.mxu0
        %4359 = vmatpush.bf16.msra.mxu0 %v3604
        %4360 = vmatpush.bf16.msra.mxu0 %v3602
        %4361 = vmatpush.bf16.msra.mxu0 %v3600
        %4362 = vmatpush.bf16.msra.mxu0 %v3598
        %4363 = vmatpush.bf16.msra.mxu0 %v3596
        %4364 = vmatpush.bf16.msra.mxu0 %v3594
        %4365 = vmatpush.bf16.msra.mxu0 %v3592
        %4366 = vmatpush.bf16.msra.mxu0 %v3590
        %4367 = vmatmul.bf16.gmra.mxu0 %v1577
        %v4368 = vpop.f32.mrf.mxu0
        %v4369 = vadd.f32 %v4356, %v4368
        %v4370 = vpop.f32.mrf.mxu0
        %4371 = vdwg.mxu0
        %4372 = vmatpush.bf16.msra.mxu0 %v3620
        %4373 = vmatpush.bf16.msra.mxu0 %v3618
        %4374 = vmatpush.bf16.msra.mxu0 %v3616
        %4375 = vmatpush.bf16.msra.mxu0 %v3614
        %4376 = vmatpush.bf16.msra.mxu0 %v3612
        %4377 = vmatpush.bf16.msra.mxu0 %v3610
        %4378 = vmatpush.bf16.msra.mxu0 %v3608
        %4379 = vmatpush.bf16.msra.mxu0 %v3606
        %4380 = vmatmul.bf16.gmra.mxu0 %v1579
        %v4381 = vpop.f32.mrf.mxu0
        %v4382 = vadd.f32 %v4369, %v4381
        %v4383 = vpop.f32.mrf.mxu0
        %4384 = vdwg.mxu0
        %4385 = vmatpush.bf16.msra.mxu0 %v3636
        %4386 = vmatpush.bf16.msra.mxu0 %v3634
        %4387 = vmatpush.bf16.msra.mxu0 %v3632
        %4388 = vmatpush.bf16.msra.mxu0 %v3630
        %4389 = vmatpush.bf16.msra.mxu0 %v3628
        %4390 = vmatpush.bf16.msra.mxu0 %v3626
        %4391 = vmatpush.bf16.msra.mxu0 %v3624
        %4392 = vmatpush.bf16.msra.mxu0 %v3622
        %4393 = vmatmul.bf16.gmra.mxu0 %v1581
        %v4394 = vpop.f32.mrf.mxu0
        %v4395 = vadd.f32 %v4382, %v4394
        %v4396 = vpop.f32.mrf.mxu0
        %4397 = vdwg.mxu0
        %4398 = vmatpush.bf16.msra.mxu0 %v3652
        %4399 = vmatpush.bf16.msra.mxu0 %v3650
        %4400 = vmatpush.bf16.msra.mxu0 %v3648
        %4401 = vmatpush.bf16.msra.mxu0 %v3646
        %4402 = vmatpush.bf16.msra.mxu0 %v3644
        %4403 = vmatpush.bf16.msra.mxu0 %v3642
        %4404 = vmatpush.bf16.msra.mxu0 %v3640
        %4405 = vmatpush.bf16.msra.mxu0 %v3638
        %4406 = vmatmul.bf16.gmra.mxu0 %v1525
        %v4407 = vpop.f32.mrf.mxu0
        %v4408 = vadd.f32 %v4395, %v4407
        %v4409 = vpop.f32.mrf.mxu0
        %4410 = vdwg.mxu0
        %4411 = vmatpush.bf16.msra.mxu0 %v3668
        %4412 = vmatpush.bf16.msra.mxu0 %v3666
        %4413 = vmatpush.bf16.msra.mxu0 %v3664
        %4414 = vmatpush.bf16.msra.mxu0 %v3662
        %4415 = vmatpush.bf16.msra.mxu0 %v3660
        %4416 = vmatpush.bf16.msra.mxu0 %v3658
        %4417 = vmatpush.bf16.msra.mxu0 %v3656
        %4418 = vmatpush.bf16.msra.mxu0 %v3654
        %4419 = vmatmul.bf16.gmra.mxu0 %v1587
        %v4420 = vpop.f32.mrf.mxu0
        %v4421 = vadd.f32 %v4408, %v4420
        %v4422 = vpop.f32.mrf.mxu0
        %4423 = vdwg.mxu0
        %4424 = vmatpush.bf16.msra.mxu0 %v3269
        %4425 = vmatpush.bf16.msra.mxu0 %v3267
        %4426 = vmatpush.bf16.msra.mxu0 %v3265
        %4427 = vmatpush.bf16.msra.mxu0 %v3263
        %4428 = vmatpush.bf16.msra.mxu0 %v3261
        %4429 = vmatpush.bf16.msra.mxu0 %v3259
        %4430 = vmatpush.bf16.msra.mxu0 %v3257
        %4431 = vmatpush.bf16.msra.mxu0 %v3255
        %4432 = vmatmul.bf16.gmra.mxu0 %v1522
        %v4433 = vpop.f32.mrf.mxu0
        %v4434 = vadd.f32 0.0, %v4433
        %v4435 = vpop.f32.mrf.mxu0
        %4436 = vdwg.mxu0
        %4437 = vmatpush.bf16.msra.mxu0 %v3285
        %4438 = vmatpush.bf16.msra.mxu0 %v3283
        %4439 = vmatpush.bf16.msra.mxu0 %v3281
        %4440 = vmatpush.bf16.msra.mxu0 %v3279
        %4441 = vmatpush.bf16.msra.mxu0 %v3277
        %4442 = vmatpush.bf16.msra.mxu0 %v3275
        %4443 = vmatpush.bf16.msra.mxu0 %v3273
        %4444 = vmatpush.bf16.msra.mxu0 %v3271
        %4445 = vmatmul.bf16.gmra.mxu0 %v1530
        %v4446 = vpop.f32.mrf.mxu0
        %v4447 = vadd.f32 %v4434, %v4446
        %v4448 = vpop.f32.mrf.mxu0
        %4449 = vdwg.mxu0
        %4450 = vmatpush.bf16.msra.mxu0 %v3301
        %4451 = vmatpush.bf16.msra.mxu0 %v3299
        %4452 = vmatpush.bf16.msra.mxu0 %v3297
        %4453 = vmatpush.bf16.msra.mxu0 %v3295
        %4454 = vmatpush.bf16.msra.mxu0 %v3293
        %4455 = vmatpush.bf16.msra.mxu0 %v3291
        %4456 = vmatpush.bf16.msra.mxu0 %v3289
        %4457 = vmatpush.bf16.msra.mxu0 %v3287
        %4458 = vmatmul.bf16.gmra.mxu0 %v1533
        %v4459 = vpop.f32.mrf.mxu0
        %v4460 = vadd.f32 %v4447, %v4459
        %v4461 = vpop.f32.mrf.mxu0
        %4462 = vdwg.mxu0
        %4463 = vmatpush.bf16.msra.mxu0 %v3317
        %4464 = vmatpush.bf16.msra.mxu0 %v3315
        %4465 = vmatpush.bf16.msra.mxu0 %v3313
        %4466 = vmatpush.bf16.msra.mxu0 %v3311
        %4467 = vmatpush.bf16.msra.mxu0 %v3309
        %4468 = vmatpush.bf16.msra.mxu0 %v3307
        %4469 = vmatpush.bf16.msra.mxu0 %v3305
        %4470 = vmatpush.bf16.msra.mxu0 %v3303
        %4471 = vmatmul.bf16.gmra.mxu0 %v1535
        %v4472 = vpop.f32.mrf.mxu0
        %v4473 = vadd.f32 %v4460, %v4472
        %v4474 = vpop.f32.mrf.mxu0
        %4475 = vdwg.mxu0
        %4476 = vmatpush.bf16.msra.mxu0 %v3333
        %4477 = vmatpush.bf16.msra.mxu0 %v3331
        %4478 = vmatpush.bf16.msra.mxu0 %v3329
        %4479 = vmatpush.bf16.msra.mxu0 %v3327
        %4480 = vmatpush.bf16.msra.mxu0 %v3325
        %4481 = vmatpush.bf16.msra.mxu0 %v3323
        %4482 = vmatpush.bf16.msra.mxu0 %v3321
        %4483 = vmatpush.bf16.msra.mxu0 %v3319
        %4484 = vmatmul.bf16.gmra.mxu0 %v1537
        %v4485 = vpop.f32.mrf.mxu0
        %v4486 = vadd.f32 %v4473, %v4485
        %v4487 = vpop.f32.mrf.mxu0
        %4488 = vdwg.mxu0
        %4489 = vmatpush.bf16.msra.mxu0 %v3349
        %4490 = vmatpush.bf16.msra.mxu0 %v3347
        %4491 = vmatpush.bf16.msra.mxu0 %v3345
        %4492 = vmatpush.bf16.msra.mxu0 %v3343
        %4493 = vmatpush.bf16.msra.mxu0 %v3341
        %4494 = vmatpush.bf16.msra.mxu0 %v3339
        %4495 = vmatpush.bf16.msra.mxu0 %v3337
        %4496 = vmatpush.bf16.msra.mxu0 %v3335
        %4497 = vmatmul.bf16.gmra.mxu0 %v1539
        %v4498 = vpop.f32.mrf.mxu0
        %v4499 = vadd.f32 %v4486, %v4498
        %v4500 = vpop.f32.mrf.mxu0
        %4501 = vdwg.mxu0
        %4502 = vmatpush.bf16.msra.mxu0 %v3365
        %4503 = vmatpush.bf16.msra.mxu0 %v3363
        %4504 = vmatpush.bf16.msra.mxu0 %v3361
        %4505 = vmatpush.bf16.msra.mxu0 %v3359
        %4506 = vmatpush.bf16.msra.mxu0 %v3357
        %4507 = vmatpush.bf16.msra.mxu0 %v3355
        %4508 = vmatpush.bf16.msra.mxu0 %v3353
        %4509 = vmatpush.bf16.msra.mxu0 %v3351
        %4510 = vmatmul.bf16.gmra.mxu0 %v1541
        %v4511 = vpop.f32.mrf.mxu0
        %v4512 = vadd.f32 %v4499, %v4511
        %v4513 = vpop.f32.mrf.mxu0
        %4514 = vdwg.mxu0
        %4515 = vmatpush.bf16.msra.mxu0 %v3381
        %4516 = vmatpush.bf16.msra.mxu0 %v3379
        %4517 = vmatpush.bf16.msra.mxu0 %v3377
        %4518 = vmatpush.bf16.msra.mxu0 %v3375
        %4519 = vmatpush.bf16.msra.mxu0 %v3373
        %4520 = vmatpush.bf16.msra.mxu0 %v3371
        %4521 = vmatpush.bf16.msra.mxu0 %v3369
        %4522 = vmatpush.bf16.msra.mxu0 %v3367
        %4523 = vmatmul.bf16.gmra.mxu0 %v1543
        %v4524 = vpop.f32.mrf.mxu0
        %v4525 = vadd.f32 %v4512, %v4524
        %v4526 = vpop.f32.mrf.mxu0
        %4527 = vdwg.mxu0
        %4528 = vmatpush.bf16.msra.mxu0 %v3397
        %4529 = vmatpush.bf16.msra.mxu0 %v3395
        %4530 = vmatpush.bf16.msra.mxu0 %v3393
        %4531 = vmatpush.bf16.msra.mxu0 %v3391
        %4532 = vmatpush.bf16.msra.mxu0 %v3389
        %4533 = vmatpush.bf16.msra.mxu0 %v3387
        %4534 = vmatpush.bf16.msra.mxu0 %v3385
        %4535 = vmatpush.bf16.msra.mxu0 %v3383
        %4536 = vmatmul.bf16.gmra.mxu0 %v1523
        %v4537 = vpop.f32.mrf.mxu0
        %v4538 = vadd.f32 %v4525, %v4537
        %v4539 = vpop.f32.mrf.mxu0
        %4540 = vdwg.mxu0
        %4541 = vmatpush.bf16.msra.mxu0 %v3413
        %4542 = vmatpush.bf16.msra.mxu0 %v3411
        %4543 = vmatpush.bf16.msra.mxu0 %v3409
        %4544 = vmatpush.bf16.msra.mxu0 %v3407
        %4545 = vmatpush.bf16.msra.mxu0 %v3405
        %4546 = vmatpush.bf16.msra.mxu0 %v3403
        %4547 = vmatpush.bf16.msra.mxu0 %v3401
        %4548 = vmatpush.bf16.msra.mxu0 %v3399
        %4549 = vmatmul.bf16.gmra.mxu0 %v1549
        %v4550 = vpop.f32.mrf.mxu0
        %v4551 = vadd.f32 %v4538, %v4550
        %v4552 = vpop.f32.mrf.mxu0
        %4553 = vdwg.mxu0
        %4554 = vmatpush.bf16.msra.mxu0 %v3429
        %4555 = vmatpush.bf16.msra.mxu0 %v3427
        %4556 = vmatpush.bf16.msra.mxu0 %v3425
        %4557 = vmatpush.bf16.msra.mxu0 %v3423
        %4558 = vmatpush.bf16.msra.mxu0 %v3421
        %4559 = vmatpush.bf16.msra.mxu0 %v3419
        %4560 = vmatpush.bf16.msra.mxu0 %v3417
        %4561 = vmatpush.bf16.msra.mxu0 %v3415
        %4562 = vmatmul.bf16.gmra.mxu0 %v1552
        %v4563 = vpop.f32.mrf.mxu0
        %v4564 = vadd.f32 %v4551, %v4563
        %v4565 = vpop.f32.mrf.mxu0
        %4566 = vdwg.mxu0
        %4567 = vmatpush.bf16.msra.mxu0 %v3445
        %4568 = vmatpush.bf16.msra.mxu0 %v3443
        %4569 = vmatpush.bf16.msra.mxu0 %v3441
        %4570 = vmatpush.bf16.msra.mxu0 %v3439
        %4571 = vmatpush.bf16.msra.mxu0 %v3437
        %4572 = vmatpush.bf16.msra.mxu0 %v3435
        %4573 = vmatpush.bf16.msra.mxu0 %v3433
        %4574 = vmatpush.bf16.msra.mxu0 %v3431
        %4575 = vmatmul.bf16.gmra.mxu0 %v1554
        %v4576 = vpop.f32.mrf.mxu0
        %v4577 = vadd.f32 %v4564, %v4576
        %v4578 = vpop.f32.mrf.mxu0
        %4579 = vdwg.mxu0
        %4580 = vmatpush.bf16.msra.mxu0 %v3461
        %4581 = vmatpush.bf16.msra.mxu0 %v3459
        %4582 = vmatpush.bf16.msra.mxu0 %v3457
        %4583 = vmatpush.bf16.msra.mxu0 %v3455
        %4584 = vmatpush.bf16.msra.mxu0 %v3453
        %4585 = vmatpush.bf16.msra.mxu0 %v3451
        %4586 = vmatpush.bf16.msra.mxu0 %v3449
        %4587 = vmatpush.bf16.msra.mxu0 %v3447
        %4588 = vmatmul.bf16.gmra.mxu0 %v1556
        %v4589 = vpop.f32.mrf.mxu0
        %v4590 = vadd.f32 %v4577, %v4589
        %v4591 = vpop.f32.mrf.mxu0
        %4592 = vdwg.mxu0
        %4593 = vmatpush.bf16.msra.mxu0 %v3477
        %4594 = vmatpush.bf16.msra.mxu0 %v3475
        %4595 = vmatpush.bf16.msra.mxu0 %v3473
        %4596 = vmatpush.bf16.msra.mxu0 %v3471
        %4597 = vmatpush.bf16.msra.mxu0 %v3469
        %4598 = vmatpush.bf16.msra.mxu0 %v3467
        %4599 = vmatpush.bf16.msra.mxu0 %v3465
        %4600 = vmatpush.bf16.msra.mxu0 %v3463
        %4601 = vmatmul.bf16.gmra.mxu0 %v1558
        %v4602 = vpop.f32.mrf.mxu0
        %v4603 = vadd.f32 %v4590, %v4602
        %v4604 = vpop.f32.mrf.mxu0
        %4605 = vdwg.mxu0
        %4606 = vmatpush.bf16.msra.mxu0 %v3493
        %4607 = vmatpush.bf16.msra.mxu0 %v3491
        %4608 = vmatpush.bf16.msra.mxu0 %v3489
        %4609 = vmatpush.bf16.msra.mxu0 %v3487
        %4610 = vmatpush.bf16.msra.mxu0 %v3485
        %4611 = vmatpush.bf16.msra.mxu0 %v3483
        %4612 = vmatpush.bf16.msra.mxu0 %v3481
        %4613 = vmatpush.bf16.msra.mxu0 %v3479
        %4614 = vmatmul.bf16.gmra.mxu0 %v1560
        %v4615 = vpop.f32.mrf.mxu0
        %v4616 = vadd.f32 %v4603, %v4615
        %v4617 = vpop.f32.mrf.mxu0
        %4618 = vdwg.mxu0
        %4619 = vmatpush.bf16.msra.mxu0 %v3509
        %4620 = vmatpush.bf16.msra.mxu0 %v3507
        %4621 = vmatpush.bf16.msra.mxu0 %v3505
        %4622 = vmatpush.bf16.msra.mxu0 %v3503
        %4623 = vmatpush.bf16.msra.mxu0 %v3501
        %4624 = vmatpush.bf16.msra.mxu0 %v3499
        %4625 = vmatpush.bf16.msra.mxu0 %v3497
        %4626 = vmatpush.bf16.msra.mxu0 %v3495
        %4627 = vmatmul.bf16.gmra.mxu0 %v1562
        %v4628 = vpop.f32.mrf.mxu0
        %v4629 = vadd.f32 %v4616, %v4628
        %v4630 = vpop.f32.mrf.mxu0
        %4631 = vdwg.mxu0
        %4632 = vmatpush.bf16.msra.mxu0 %v3525
        %4633 = vmatpush.bf16.msra.mxu0 %v3523
        %4634 = vmatpush.bf16.msra.mxu0 %v3521
        %4635 = vmatpush.bf16.msra.mxu0 %v3519
        %4636 = vmatpush.bf16.msra.mxu0 %v3517
        %4637 = vmatpush.bf16.msra.mxu0 %v3515
        %4638 = vmatpush.bf16.msra.mxu0 %v3513
        %4639 = vmatpush.bf16.msra.mxu0 %v3511
        %4640 = vmatmul.bf16.gmra.mxu0 %v1524
        %v4641 = vpop.f32.mrf.mxu0
        %v4642 = vadd.f32 %v4629, %v4641
        %v4643 = vpop.f32.mrf.mxu0
        %4644 = vdwg.mxu0
        %4645 = vmatpush.bf16.msra.mxu0 %v3541
        %4646 = vmatpush.bf16.msra.mxu0 %v3539
        %4647 = vmatpush.bf16.msra.mxu0 %v3537
        %4648 = vmatpush.bf16.msra.mxu0 %v3535
        %4649 = vmatpush.bf16.msra.mxu0 %v3533
        %4650 = vmatpush.bf16.msra.mxu0 %v3531
        %4651 = vmatpush.bf16.msra.mxu0 %v3529
        %4652 = vmatpush.bf16.msra.mxu0 %v3527
        %4653 = vmatmul.bf16.gmra.mxu0 %v1568
        %v4654 = vpop.f32.mrf.mxu0
        %v4655 = vadd.f32 %v4642, %v4654
        %v4656 = vpop.f32.mrf.mxu0
        %4657 = vdwg.mxu0
        %4658 = vmatpush.bf16.msra.mxu0 %v3557
        %4659 = vmatpush.bf16.msra.mxu0 %v3555
        %4660 = vmatpush.bf16.msra.mxu0 %v3553
        %4661 = vmatpush.bf16.msra.mxu0 %v3551
        %4662 = vmatpush.bf16.msra.mxu0 %v3549
        %4663 = vmatpush.bf16.msra.mxu0 %v3547
        %4664 = vmatpush.bf16.msra.mxu0 %v3545
        %4665 = vmatpush.bf16.msra.mxu0 %v3543
        %4666 = vmatmul.bf16.gmra.mxu0 %v1571
        %v4667 = vpop.f32.mrf.mxu0
        %v4668 = vadd.f32 %v4655, %v4667
        %v4669 = vpop.f32.mrf.mxu0
        %4670 = vdwg.mxu0
        %4671 = vmatpush.bf16.msra.mxu0 %v3573
        %4672 = vmatpush.bf16.msra.mxu0 %v3571
        %4673 = vmatpush.bf16.msra.mxu0 %v3569
        %4674 = vmatpush.bf16.msra.mxu0 %v3567
        %4675 = vmatpush.bf16.msra.mxu0 %v3565
        %4676 = vmatpush.bf16.msra.mxu0 %v3563
        %4677 = vmatpush.bf16.msra.mxu0 %v3561
        %4678 = vmatpush.bf16.msra.mxu0 %v3559
        %4679 = vmatmul.bf16.gmra.mxu0 %v1573
        %v4680 = vpop.f32.mrf.mxu0
        %v4681 = vadd.f32 %v4668, %v4680
        %v4682 = vpop.f32.mrf.mxu0
        %4683 = vdwg.mxu0
        %4684 = vmatpush.bf16.msra.mxu0 %v3589
        %4685 = vmatpush.bf16.msra.mxu0 %v3587
        %4686 = vmatpush.bf16.msra.mxu0 %v3585
        %4687 = vmatpush.bf16.msra.mxu0 %v3583
        %4688 = vmatpush.bf16.msra.mxu0 %v3581
        %4689 = vmatpush.bf16.msra.mxu0 %v3579
        %4690 = vmatpush.bf16.msra.mxu0 %v3577
        %4691 = vmatpush.bf16.msra.mxu0 %v3575
        %4692 = vmatmul.bf16.gmra.mxu0 %v1575
        %v4693 = vpop.f32.mrf.mxu0
        %v4694 = vadd.f32 %v4681, %v4693
        %v4695 = vpop.f32.mrf.mxu0
        %4696 = vdwg.mxu0
        %4697 = vmatpush.bf16.msra.mxu0 %v3605
        %4698 = vmatpush.bf16.msra.mxu0 %v3603
        %4699 = vmatpush.bf16.msra.mxu0 %v3601
        %4700 = vmatpush.bf16.msra.mxu0 %v3599
        %4701 = vmatpush.bf16.msra.mxu0 %v3597
        %4702 = vmatpush.bf16.msra.mxu0 %v3595
        %4703 = vmatpush.bf16.msra.mxu0 %v3593
        %4704 = vmatpush.bf16.msra.mxu0 %v3591
        %4705 = vmatmul.bf16.gmra.mxu0 %v1577
        %v4706 = vpop.f32.mrf.mxu0
        %v4707 = vadd.f32 %v4694, %v4706
        %v4708 = vpop.f32.mrf.mxu0
        %4709 = vdwg.mxu0
        %4710 = vmatpush.bf16.msra.mxu0 %v3621
        %4711 = vmatpush.bf16.msra.mxu0 %v3619
        %4712 = vmatpush.bf16.msra.mxu0 %v3617
        %4713 = vmatpush.bf16.msra.mxu0 %v3615
        %4714 = vmatpush.bf16.msra.mxu0 %v3613
        %4715 = vmatpush.bf16.msra.mxu0 %v3611
        %4716 = vmatpush.bf16.msra.mxu0 %v3609
        %4717 = vmatpush.bf16.msra.mxu0 %v3607
        %4718 = vmatmul.bf16.gmra.mxu0 %v1579
        %v4719 = vpop.f32.mrf.mxu0
        %v4720 = vadd.f32 %v4707, %v4719
        %v4721 = vpop.f32.mrf.mxu0
        %4722 = vdwg.mxu0
        %4723 = vmatpush.bf16.msra.mxu0 %v3637
        %4724 = vmatpush.bf16.msra.mxu0 %v3635
        %4725 = vmatpush.bf16.msra.mxu0 %v3633
        %4726 = vmatpush.bf16.msra.mxu0 %v3631
        %4727 = vmatpush.bf16.msra.mxu0 %v3629
        %4728 = vmatpush.bf16.msra.mxu0 %v3627
        %4729 = vmatpush.bf16.msra.mxu0 %v3625
        %4730 = vmatpush.bf16.msra.mxu0 %v3623
        %4731 = vmatmul.bf16.gmra.mxu0 %v1581
        %v4732 = vpop.f32.mrf.mxu0
        %v4733 = vadd.f32 %v4720, %v4732
        %v4734 = vpop.f32.mrf.mxu0
        %4735 = vdwg.mxu0
        %4736 = vmatpush.bf16.msra.mxu0 %v3653
        %4737 = vmatpush.bf16.msra.mxu0 %v3651
        %4738 = vmatpush.bf16.msra.mxu0 %v3649
        %4739 = vmatpush.bf16.msra.mxu0 %v3647
        %4740 = vmatpush.bf16.msra.mxu0 %v3645
        %4741 = vmatpush.bf16.msra.mxu0 %v3643
        %4742 = vmatpush.bf16.msra.mxu0 %v3641
        %4743 = vmatpush.bf16.msra.mxu0 %v3639
        %4744 = vmatmul.bf16.gmra.mxu0 %v1525
        %v4745 = vpop.f32.mrf.mxu0
        %v4746 = vadd.f32 %v4733, %v4745
        %v4747 = vpop.f32.mrf.mxu0
        %4748 = vdwg.mxu0
        %4749 = vmatpush.bf16.msra.mxu0 %v3669
        %4750 = vmatpush.bf16.msra.mxu0 %v3667
        %4751 = vmatpush.bf16.msra.mxu0 %v3665
        %4752 = vmatpush.bf16.msra.mxu0 %v3663
        %4753 = vmatpush.bf16.msra.mxu0 %v3661
        %4754 = vmatpush.bf16.msra.mxu0 %v3659
        %4755 = vmatpush.bf16.msra.mxu0 %v3657
        %4756 = vmatpush.bf16.msra.mxu0 %v3655
        %4757 = vmatmul.bf16.gmra.mxu0 %v1587
        %v4758 = vpop.f32.mrf.mxu0
        %v4759 = vadd.f32 %v4746, %v4758
        %v4760 = vpop.f32.mrf.mxu0
        %4761 = vdwg.mxu0
        %v4762 = vld [vmem:[#allocation13] ss:$4 sm:$0x3]
        %v4764 = vperm.slane %v4762, 0
        %v4765 = vperm.slane %v4762, 1
        %v4768 = vmul.f32 %v4421, %v4764
        %v4769 = vmul.f32 %v4759, %v4765
        %s4770 = scalar_lea.vmem [#allocation13], 1
        %v4771 = vld [vmem:[%s4770] ss:$4 sm:$0x3]
        %v4773 = vperm.slane %v4771, 0
        %v4774 = vperm.slane %v4771, 1
        %v4777 = vadd.f32 %v4768, %v4773
        %v4778 = vadd.f32 %v4769, %v4774
        %v4779 = vpack.c.bf16 %v4777, %v4777
        %v4780 = vpack.c.bf16 %v4778, %v4778
        %v4781 = vld [vmem:[%s10] sm:$0xff]
        %v4782 = vld [vmem:[%s10 + $0x8] sm:$0xff]
        %v4783 = vld [vmem:[%s10 + $0x10] sm:$0xff]
        %v4784 = vld [vmem:[%s10 + $0x18] sm:$0xff]
        %v4785 = vld [vmem:[%s10 + $0x20] sm:$0xff]
        %v4786 = vld [vmem:[%s10 + $0x28] sm:$0xff]
        %v4787 = vld [vmem:[%s10 + $0x30] sm:$0xff]
        %v4788 = vld [vmem:[%s10 + $0x38] sm:$0xff]
        %v4789 = vld [vmem:[%s10 + $0x40] sm:$0xff]
        %v4790 = vld [vmem:[%s10 + $0x48] sm:$0xff]
        %v4791 = vld [vmem:[%s10 + $0x50] sm:$0xff]
        %v4792 = vld [vmem:[%s10 + $0x58] sm:$0xff]
        %v4793 = vld [vmem:[%s10 + $0x60] sm:$0xff]
        %v4794 = vld [vmem:[%s10 + $0x68] sm:$0xff]
        %v4795 = vld [vmem:[%s10 + $0x70] sm:$0xff]
        %v4796 = vld [vmem:[%s10 + $0x78] sm:$0xff]
        %v4797 = vld [vmem:[%s10 + $0x80] sm:$0xff]
        %v4798 = vld [vmem:[%s10 + $0x88] sm:$0xff]
        %v4799 = vld [vmem:[%s10 + $0x90] sm:$0xff]
        %v4800 = vld [vmem:[%s10 + $0x98] sm:$0xff]
        %v4801 = vld [vmem:[%s10 + $0xa0] sm:$0xff]
        %v4802 = vld [vmem:[%s10 + $0xa8] sm:$0xff]
        %v4803 = vld [vmem:[%s10 + $0xb0] sm:$0xff]
        %v4804 = vld [vmem:[%s10 + $0xb8] sm:$0xff]
        %v4805 = vld [vmem:[%s10 + $0xc0] sm:$0xff]
        %v4806 = vld [vmem:[%s10 + $0xc8] sm:$0xff]
        %v4807 = vld [vmem:[%s10 + $0xd0] sm:$0xff]
        %v4808 = vld [vmem:[%s10 + $0xd8] sm:$0xff]
        %v4809 = vld [vmem:[%s10 + $0xe0] sm:$0xff]
        %v4810 = vld [vmem:[%s10 + $0xe8] sm:$0xff]
        %v4811 = vld [vmem:[%s10 + $0xf0] sm:$0xff]
        %v4812 = vld [vmem:[%s10 + $0xf8] sm:$0xff]
        %v4813 = vld [vmem:[%s10 + $0x100] sm:$0xff]
        %v4814 = vld [vmem:[%s10 + $0x108] sm:$0xff]
        %v4815 = vld [vmem:[%s10 + $0x110] sm:$0xff]
        %v4816 = vld [vmem:[%s10 + $0x118] sm:$0xff]
        %v4817 = vld [vmem:[%s10 + $0x120] sm:$0xff]
        %v4818 = vld [vmem:[%s10 + $0x128] sm:$0xff]
        %v4819 = vld [vmem:[%s10 + $0x130] sm:$0xff]
        %v4820 = vld [vmem:[%s10 + $0x138] sm:$0xff]
        %v4821 = vld [vmem:[%s10 + $0x140] sm:$0xff]
        %v4822 = vld [vmem:[%s10 + $0x148] sm:$0xff]
        %v4823 = vld [vmem:[%s10 + $0x150] sm:$0xff]
        %v4824 = vld [vmem:[%s10 + $0x158] sm:$0xff]
        %v4825 = vld [vmem:[%s10 + $0x160] sm:$0xff]
        %v4826 = vld [vmem:[%s10 + $0x168] sm:$0xff]
        %v4827 = vld [vmem:[%s10 + $0x170] sm:$0xff]
        %v4828 = vld [vmem:[%s10 + $0x178] sm:$0xff]
        %v4829 = vld [vmem:[%s10 + $0x180] sm:$0xff]
        %v4830 = vld [vmem:[%s10 + $0x188] sm:$0xff]
        %v4831 = vld [vmem:[%s10 + $0x190] sm:$0xff]
        %v4832 = vld [vmem:[%s10 + $0x198] sm:$0xff]
        %v4833 = vld [vmem:[%s10 + $0x1a0] sm:$0xff]
        %v4834 = vld [vmem:[%s10 + $0x1a8] sm:$0xff]
        %v4835 = vld [vmem:[%s10 + $0x1b0] sm:$0xff]
        %v4836 = vld [vmem:[%s10 + $0x1b8] sm:$0xff]
        %v4837 = vld [vmem:[%s10 + $0x1c0] sm:$0xff]
        %v4838 = vld [vmem:[%s10 + $0x1c8] sm:$0xff]
        %v4839 = vld [vmem:[%s10 + $0x1d0] sm:$0xff]
        %v4840 = vld [vmem:[%s10 + $0x1d8] sm:$0xff]
        %v4841 = vld [vmem:[%s10 + $0x1e0] sm:$0xff]
        %v4842 = vld [vmem:[%s10 + $0x1e8] sm:$0xff]
        %v4843 = vld [vmem:[%s10 + $0x1f0] sm:$0xff]
        %v4844 = vld [vmem:[%s10 + $0x1f8] sm:$0xff]
        %s4845 = scalar_lea.vmem [#allocation13], 2
        %v4846 = vld [vmem:[%s4845] ss:$4 sm:$0xf]
        %v4911 = vunpack.c.l.b16 %v4781
        %v4912 = vunpack.c.h.b16 %v4781
        %v4913 = vunpack.c.l.b16 %v4782
        %v4914 = vunpack.c.h.b16 %v4782
        %v4915 = vunpack.c.l.b16 %v4783
        %v4916 = vunpack.c.h.b16 %v4783
        %v4917 = vunpack.c.l.b16 %v4784
        %v4918 = vunpack.c.h.b16 %v4784
        %v4919 = vunpack.c.l.b16 %v4785
        %v4920 = vunpack.c.h.b16 %v4785
        %v4921 = vunpack.c.l.b16 %v4786
        %v4922 = vunpack.c.h.b16 %v4786
        %v4923 = vunpack.c.l.b16 %v4787
        %v4924 = vunpack.c.h.b16 %v4787
        %v4925 = vunpack.c.l.b16 %v4788
        %v4926 = vunpack.c.h.b16 %v4788
        %v4927 = vunpack.c.l.b16 %v4789
        %v4928 = vunpack.c.h.b16 %v4789
        %v4929 = vunpack.c.l.b16 %v4790
        %v4930 = vunpack.c.h.b16 %v4790
        %v4931 = vunpack.c.l.b16 %v4791
        %v4932 = vunpack.c.h.b16 %v4791
        %v4933 = vunpack.c.l.b16 %v4792
        %v4934 = vunpack.c.h.b16 %v4792
        %v4935 = vunpack.c.l.b16 %v4793
        %v4936 = vunpack.c.h.b16 %v4793
        %v4937 = vunpack.c.l.b16 %v4794
        %v4938 = vunpack.c.h.b16 %v4794
        %v4939 = vunpack.c.l.b16 %v4795
        %v4940 = vunpack.c.h.b16 %v4795
        %v4941 = vunpack.c.l.b16 %v4796
        %v4942 = vunpack.c.h.b16 %v4796
        %v4943 = vunpack.c.l.b16 %v4797
        %v4944 = vunpack.c.h.b16 %v4797
        %v4945 = vunpack.c.l.b16 %v4798
        %v4946 = vunpack.c.h.b16 %v4798
        %v4947 = vunpack.c.l.b16 %v4799
        %v4948 = vunpack.c.h.b16 %v4799
        %v4949 = vunpack.c.l.b16 %v4800
        %v4950 = vunpack.c.h.b16 %v4800
        %v4951 = vunpack.c.l.b16 %v4801
        %v4952 = vunpack.c.h.b16 %v4801
        %v4953 = vunpack.c.l.b16 %v4802
        %v4954 = vunpack.c.h.b16 %v4802
        %v4955 = vunpack.c.l.b16 %v4803
        %v4956 = vunpack.c.h.b16 %v4803
        %v4957 = vunpack.c.l.b16 %v4804
        %v4958 = vunpack.c.h.b16 %v4804
        %v4959 = vunpack.c.l.b16 %v4805
        %v4960 = vunpack.c.h.b16 %v4805
        %v4961 = vunpack.c.l.b16 %v4806
        %v4962 = vunpack.c.h.b16 %v4806
        %v4963 = vunpack.c.l.b16 %v4807
        %v4964 = vunpack.c.h.b16 %v4807
        %v4965 = vunpack.c.l.b16 %v4808
        %v4966 = vunpack.c.h.b16 %v4808
        %v4967 = vunpack.c.l.b16 %v4809
        %v4968 = vunpack.c.h.b16 %v4809
        %v4969 = vunpack.c.l.b16 %v4810
        %v4970 = vunpack.c.h.b16 %v4810
        %v4971 = vunpack.c.l.b16 %v4811
        %v4972 = vunpack.c.h.b16 %v4811
        %v4973 = vunpack.c.l.b16 %v4812
        %v4974 = vunpack.c.h.b16 %v4812
        %v4975 = vunpack.c.l.b16 %v4813
        %v4976 = vunpack.c.h.b16 %v4813
        %v4977 = vunpack.c.l.b16 %v4814
        %v4978 = vunpack.c.h.b16 %v4814
        %v4979 = vunpack.c.l.b16 %v4815
        %v4980 = vunpack.c.h.b16 %v4815
        %v4981 = vunpack.c.l.b16 %v4816
        %v4982 = vunpack.c.h.b16 %v4816
        %v4983 = vunpack.c.l.b16 %v4817
        %v4984 = vunpack.c.h.b16 %v4817
        %v4985 = vunpack.c.l.b16 %v4818
        %v4986 = vunpack.c.h.b16 %v4818
        %v4987 = vunpack.c.l.b16 %v4819
        %v4988 = vunpack.c.h.b16 %v4819
        %v4989 = vunpack.c.l.b16 %v4820
        %v4990 = vunpack.c.h.b16 %v4820
        %v4991 = vunpack.c.l.b16 %v4821
        %v4992 = vunpack.c.h.b16 %v4821
        %v4993 = vunpack.c.l.b16 %v4822
        %v4994 = vunpack.c.h.b16 %v4822
        %v4995 = vunpack.c.l.b16 %v4823
        %v4996 = vunpack.c.h.b16 %v4823
        %v4997 = vunpack.c.l.b16 %v4824
        %v4998 = vunpack.c.h.b16 %v4824
        %v4999 = vunpack.c.l.b16 %v4825
        %v5000 = vunpack.c.h.b16 %v4825
        %v5001 = vunpack.c.l.b16 %v4826
        %v5002 = vunpack.c.h.b16 %v4826
        %v5003 = vunpack.c.l.b16 %v4827
        %v5004 = vunpack.c.h.b16 %v4827
        %v5005 = vunpack.c.l.b16 %v4828
        %v5006 = vunpack.c.h.b16 %v4828
        %v5007 = vunpack.c.l.b16 %v4829
        %v5008 = vunpack.c.h.b16 %v4829
        %v5009 = vunpack.c.l.b16 %v4830
        %v5010 = vunpack.c.h.b16 %v4830
        %v5011 = vunpack.c.l.b16 %v4831
        %v5012 = vunpack.c.h.b16 %v4831
        %v5013 = vunpack.c.l.b16 %v4832
        %v5014 = vunpack.c.h.b16 %v4832
        %v5015 = vunpack.c.l.b16 %v4833
        %v5016 = vunpack.c.h.b16 %v4833
        %v5017 = vunpack.c.l.b16 %v4834
        %v5018 = vunpack.c.h.b16 %v4834
        %v5019 = vunpack.c.l.b16 %v4835
        %v5020 = vunpack.c.h.b16 %v4835
        %v5021 = vunpack.c.l.b16 %v4836
        %v5022 = vunpack.c.h.b16 %v4836
        %v5023 = vunpack.c.l.b16 %v4837
        %v5024 = vunpack.c.h.b16 %v4837
        %v5025 = vunpack.c.l.b16 %v4838
        %v5026 = vunpack.c.h.b16 %v4838
        %v5027 = vunpack.c.l.b16 %v4839
        %v5028 = vunpack.c.h.b16 %v4839
        %v5029 = vunpack.c.l.b16 %v4840
        %v5030 = vunpack.c.h.b16 %v4840
        %v5031 = vunpack.c.l.b16 %v4841
        %v5032 = vunpack.c.h.b16 %v4841
        %v5033 = vunpack.c.l.b16 %v4842
        %v5034 = vunpack.c.h.b16 %v4842
        %v5035 = vunpack.c.l.b16 %v4843
        %v5036 = vunpack.c.h.b16 %v4843
        %v5037 = vunpack.c.l.b16 %v4844
        %v5038 = vunpack.c.h.b16 %v4844
        %v5039 = vpack.c.b16 %v4915, %v4911
        %v5040 = vpack.c.b16 %v4916, %v4912
        %v5041 = vpack.c.b16 %v4917, %v4913
        %v5042 = vpack.c.b16 %v4918, %v4914
        %v5043 = vpack.c.b16 %v4923, %v4919
        %v5044 = vpack.c.b16 %v4924, %v4920
        %v5045 = vpack.c.b16 %v4925, %v4921
        %v5046 = vpack.c.b16 %v4926, %v4922
        %v5047 = vpack.c.b16 %v4931, %v4927
        %v5048 = vpack.c.b16 %v4932, %v4928
        %v5049 = vpack.c.b16 %v4933, %v4929
        %v5050 = vpack.c.b16 %v4934, %v4930
        %v5051 = vpack.c.b16 %v4939, %v4935
        %v5052 = vpack.c.b16 %v4940, %v4936
        %v5053 = vpack.c.b16 %v4941, %v4937
        %v5054 = vpack.c.b16 %v4942, %v4938
        %v5055 = vpack.c.b16 %v4947, %v4943
        %v5056 = vpack.c.b16 %v4948, %v4944
        %v5057 = vpack.c.b16 %v4949, %v4945
        %v5058 = vpack.c.b16 %v4950, %v4946
        %v5059 = vpack.c.b16 %v4955, %v4951
        %v5060 = vpack.c.b16 %v4956, %v4952
        %v5061 = vpack.c.b16 %v4957, %v4953
        %v5062 = vpack.c.b16 %v4958, %v4954
        %v5063 = vpack.c.b16 %v4963, %v4959
        %v5064 = vpack.c.b16 %v4964, %v4960
        %v5065 = vpack.c.b16 %v4965, %v4961
        %v5066 = vpack.c.b16 %v4966, %v4962
        %v5067 = vpack.c.b16 %v4971, %v4967
        %v5068 = vpack.c.b16 %v4972, %v4968
        %v5069 = vpack.c.b16 %v4973, %v4969
        %v5070 = vpack.c.b16 %v4974, %v4970
        %v5071 = vpack.c.b16 %v4979, %v4975
        %v5072 = vpack.c.b16 %v4980, %v4976
        %v5073 = vpack.c.b16 %v4981, %v4977
        %v5074 = vpack.c.b16 %v4982, %v4978
        %v5075 = vpack.c.b16 %v4987, %v4983
        %v5076 = vpack.c.b16 %v4988, %v4984
        %v5077 = vpack.c.b16 %v4989, %v4985
        %v5078 = vpack.c.b16 %v4990, %v4986
        %v5079 = vpack.c.b16 %v4995, %v4991
        %v5080 = vpack.c.b16 %v4996, %v4992
        %v5081 = vpack.c.b16 %v4997, %v4993
        %v5082 = vpack.c.b16 %v4998, %v4994
        %v5083 = vpack.c.b16 %v5003, %v4999
        %v5084 = vpack.c.b16 %v5004, %v5000
        %v5085 = vpack.c.b16 %v5005, %v5001
        %v5086 = vpack.c.b16 %v5006, %v5002
        %v5087 = vpack.c.b16 %v5011, %v5007
        %v5088 = vpack.c.b16 %v5012, %v5008
        %v5089 = vpack.c.b16 %v5013, %v5009
        %v5090 = vpack.c.b16 %v5014, %v5010
        %v5091 = vpack.c.b16 %v5019, %v5015
        %v5092 = vpack.c.b16 %v5020, %v5016
        %v5093 = vpack.c.b16 %v5021, %v5017
        %v5094 = vpack.c.b16 %v5022, %v5018
        %v5095 = vpack.c.b16 %v5027, %v5023
        %v5096 = vpack.c.b16 %v5028, %v5024
        %v5097 = vpack.c.b16 %v5029, %v5025
        %v5098 = vpack.c.b16 %v5030, %v5026
        %v5099 = vpack.c.b16 %v5035, %v5031
        %v5100 = vpack.c.b16 %v5036, %v5032
        %v5101 = vpack.c.b16 %v5037, %v5033
        %v5102 = vpack.c.b16 %v5038, %v5034
        %v5168 = vperm.slane %v4846, 0
        %v5169 = vperm.slane %v4846, 1
        %v5170 = vperm.slane %v4846, 2
        %v5171 = vperm.slane %v4846, 3
        %5176 = vmatpush.bf16.msra.mxu0 %v5067
        %5177 = vmatpush.bf16.msra.mxu0 %v5063
        %5178 = vmatpush.bf16.msra.mxu0 %v5059
        %5179 = vmatpush.bf16.msra.mxu0 %v5055
        %5180 = vmatpush.bf16.msra.mxu0 %v5051
        %5181 = vmatpush.bf16.msra.mxu0 %v5047
        %5182 = vmatpush.bf16.msra.mxu0 %v5043
        %5183 = vmatpush.bf16.msra.mxu0 %v5039
        %5184 = vmatmul.bf16.gmra.mxu0 %v4779
        %v5185 = vpop.f32.mrf.mxu0
        %v5186 = vadd.f32 %v5168, %v5185
        %v5187 = vpop.f32.mrf.mxu0
        %5188 = vdwg.mxu0
        %5189 = vmatpush.bf16.msra.mxu0 %v5099
        %5190 = vmatpush.bf16.msra.mxu0 %v5095
        %5191 = vmatpush.bf16.msra.mxu0 %v5091
        %5192 = vmatpush.bf16.msra.mxu0 %v5087
        %5193 = vmatpush.bf16.msra.mxu0 %v5083
        %5194 = vmatpush.bf16.msra.mxu0 %v5079
        %5195 = vmatpush.bf16.msra.mxu0 %v5075
        %5196 = vmatpush.bf16.msra.mxu0 %v5071
        %5197 = vmatmul.bf16.gmra.mxu0 %v4780
        %v5198 = vpop.f32.mrf.mxu0
        %v5199 = vadd.f32 %v5186, %v5198
        %v5200 = vpop.f32.mrf.mxu0
        %5201 = vdwg.mxu0
        %5202 = vmatpush.bf16.msra.mxu0 %v5068
        %5203 = vmatpush.bf16.msra.mxu0 %v5064
        %5204 = vmatpush.bf16.msra.mxu0 %v5060
        %5205 = vmatpush.bf16.msra.mxu0 %v5056
        %5206 = vmatpush.bf16.msra.mxu0 %v5052
        %5207 = vmatpush.bf16.msra.mxu0 %v5048
        %5208 = vmatpush.bf16.msra.mxu0 %v5044
        %5209 = vmatpush.bf16.msra.mxu0 %v5040
        %5210 = vmatmul.bf16.gmra.mxu0 %v4779
        %v5211 = vpop.f32.mrf.mxu0
        %v5212 = vadd.f32 %v5169, %v5211
        %v5213 = vpop.f32.mrf.mxu0
        %5214 = vdwg.mxu0
        %5215 = vmatpush.bf16.msra.mxu0 %v5100
        %5216 = vmatpush.bf16.msra.mxu0 %v5096
        %5217 = vmatpush.bf16.msra.mxu0 %v5092
        %5218 = vmatpush.bf16.msra.mxu0 %v5088
        %5219 = vmatpush.bf16.msra.mxu0 %v5084
        %5220 = vmatpush.bf16.msra.mxu0 %v5080
        %5221 = vmatpush.bf16.msra.mxu0 %v5076
        %5222 = vmatpush.bf16.msra.mxu0 %v5072
        %5223 = vmatmul.bf16.gmra.mxu0 %v4780
        %v5224 = vpop.f32.mrf.mxu0
        %v5225 = vadd.f32 %v5212, %v5224
        %v5226 = vpop.f32.mrf.mxu0
        %5227 = vdwg.mxu0
        %5228 = vmatpush.bf16.msra.mxu0 %v5069
        %5229 = vmatpush.bf16.msra.mxu0 %v5065
        %5230 = vmatpush.bf16.msra.mxu0 %v5061
        %5231 = vmatpush.bf16.msra.mxu0 %v5057
        %5232 = vmatpush.bf16.msra.mxu0 %v5053
        %5233 = vmatpush.bf16.msra.mxu0 %v5049
        %5234 = vmatpush.bf16.msra.mxu0 %v5045
        %5235 = vmatpush.bf16.msra.mxu0 %v5041
        %5236 = vmatmul.bf16.gmra.mxu0 %v4779
        %v5237 = vpop.f32.mrf.mxu0
        %v5238 = vadd.f32 %v5170, %v5237
        %v5239 = vpop.f32.mrf.mxu0
        %5240 = vdwg.mxu0
        %5241 = vmatpush.bf16.msra.mxu0 %v5101
        %5242 = vmatpush.bf16.msra.mxu0 %v5097
        %5243 = vmatpush.bf16.msra.mxu0 %v5093
        %5244 = vmatpush.bf16.msra.mxu0 %v5089
        %5245 = vmatpush.bf16.msra.mxu0 %v5085
        %5246 = vmatpush.bf16.msra.mxu0 %v5081
        %5247 = vmatpush.bf16.msra.mxu0 %v5077
        %5248 = vmatpush.bf16.msra.mxu0 %v5073
        %5249 = vmatmul.bf16.gmra.mxu0 %v4780
        %v5250 = vpop.f32.mrf.mxu0
        %v5251 = vadd.f32 %v5238, %v5250
        %v5252 = vpop.f32.mrf.mxu0
        %5253 = vdwg.mxu0
        %5254 = vmatpush.bf16.msra.mxu0 %v5070
        %5255 = vmatpush.bf16.msra.mxu0 %v5066
        %5256 = vmatpush.bf16.msra.mxu0 %v5062
        %5257 = vmatpush.bf16.msra.mxu0 %v5058
        %5258 = vmatpush.bf16.msra.mxu0 %v5054
        %5259 = vmatpush.bf16.msra.mxu0 %v5050
        %5260 = vmatpush.bf16.msra.mxu0 %v5046
        %5261 = vmatpush.bf16.msra.mxu0 %v5042
        %5262 = vmatmul.bf16.gmra.mxu0 %v4779
        %v5263 = vpop.f32.mrf.mxu0
        %v5264 = vadd.f32 %v5171, %v5263
        %v5265 = vpop.f32.mrf.mxu0
        %5266 = vdwg.mxu0
        %5267 = vmatpush.bf16.msra.mxu0 %v5102
        %5268 = vmatpush.bf16.msra.mxu0 %v5098
        %5269 = vmatpush.bf16.msra.mxu0 %v5094
        %5270 = vmatpush.bf16.msra.mxu0 %v5090
        %5271 = vmatpush.bf16.msra.mxu0 %v5086
        %5272 = vmatpush.bf16.msra.mxu0 %v5082
        %5273 = vmatpush.bf16.msra.mxu0 %v5078
        %5274 = vmatpush.bf16.msra.mxu0 %v5074
        %5275 = vmatmul.bf16.gmra.mxu0 %v4780
        %v5276 = vpop.f32.mrf.mxu0
        %v5277 = vadd.f32 %v5264, %v5276
        %v5278 = vpop.f32.mrf.mxu0
        %5279 = vdwg.mxu0
        %v5284 = vrot.slane %v5225, 7
        %v5285 = vrot.slane %v5251, 6
        %v5286 = vrot.slane %v5277, 5
        %vm5287 = vcmask 1040384
        %v5288 = vsel %vm5287, %v5199, %v5284
        %vm5289 = vcmask 1042434
        %v5290 = vsel %vm5289, %v5285, %v5286
        %v5291 = vsel %vm1225, %v5288, %v5290
        %v5293 = vlaneseq
        %vm5294 = vcmp.ge.s32.totalorder %v5293, 0
        %vm5295 = vcmp.lt.s32.totalorder %v5293, 416
        %vm5296 = vmand %vm5294, %vm5295
        %5297 = vst.msk [vmem:[%s513] sm:$0xf] %vm5296, %v5291
        %p5298 = scmp.lt.s32.totalorder %s27, 1
        %s5299 = scalar_select %p5298, %s27, 1
        %s5300 = smul.addr %s5299, 4
        %s5301 = scalar_lea.vmem %s11, %s5300
        // Predicated region
        $region97: #{ripnet_forward.1} parent=63 // pred_check
          %p5302 = pneg %p281
        $region98: #{ripnet_forward.1} parent=63 // pred_check_branch
          %5304 = sbr.rel (%p5302) target = $region100
        $region99: #{ripnet_forward.1} parent=63 // pred_region
          _
        $region100: #{ripnet_forward.1} parent=63 // pred_fallthru
          _
      $region64: #{ripnet_forward.1} parent=5 // pred_fallthru
        _
      %p5305 = scmp.le.s32.totalorder 2, %s22
      // Predicated region
      $region101: #{ripnet_forward.1} parent=5 // pred_check
        %p5306 = pneg %p5305
      $region102: #{ripnet_forward.1} parent=5 // pred_check_branch
        %5308 = sbr.rel (%p5306) target = $region104
      $region103: #{ripnet_forward.1} parent=5 // pred_region
        %s5309 = ssub.s32 %s22, 2
        // Predicated region
        $region105: #{ripnet_forward.1} parent=103 // pred_check
          %p5310 = pneg %p287
        $region106: #{ripnet_forward.1} parent=103 // pred_check_branch
          %5312 = sbr.rel (%p5310) target = $region108
        $region107: #{ripnet_forward.1} parent=103 // pred_region
          %p5313 = scmp.lt.s32.totalorder %s28, 1
          %s5314 = scalar_select %p5313, %s28, 1
          %s5315 = smul.addr %s5314, 4
          %s5316 = scalar_lea.vmem %s11, %s5315
        $region108: #{ripnet_forward.1} parent=103 // pred_fallthru
          _
      $region104: #{ripnet_forward.1} parent=5 // pred_fallthru
        _
    $region6: #{ripnet_forward.1} parent=1 // loop_footer
      %s26 = sadd.s32 1, %s22
    $region7: #{ripnet_forward.1} parent=1 // loop_footer_branch
      %21 = sbr.rel target = $region3
    $region8: #{ripnet_forward.1} parent=1 // loop_exit
      _
    %5317 = vsyncpa [#allocation3], 1
    %s5318 = scalar_lea.sflag [#allocation3], 1
    %5319 = vsyncpa %s5318, 1
    %5320 = vsyncpa [#allocation5], 1
    %5321 = vsyncpa [#allocation8], 1
    %5322 = vsyncpa [#allocation11], 1
    %5323 = vsyncpa [#allocation14], 1

</llo_original>
